<compile_context>
chip_gen: v7x
topology: tpu7x:2x2x1
jax: 0.10.0
libtpu: 0.0.40
codegen_flags: <defaults>
</compile_context>

<pallas_src>
import functools
import math

import numpy as np
import jax
import jax.numpy as jnp
from jax import lax
from jax.experimental import pallas as pl
from jax.experimental.pallas import tpu as pltpu


def _round_up(x, m):
    return (x + m - 1) // m * m


# ----------------------------------------------------------------------------
# Fused Pallas kernel: all TransformerConv layers + ReLU for ONE graph block.
# Grid axis 0 = graph index ("parallel"); all layer weights stay resident.
# ----------------------------------------------------------------------------
def _shape_graph_embedder_kernel(x0_ref, adj_ref, ef_ref, *refs,
                                 num_layers, gnn_dim):
    o_ref = refs[-1]
    wrefs = refs[:-1]                 # 3 refs per layer: wqkvs, bqkvs, wedge_t

    x0 = x0_ref[0]                    # (N, Din)
    adj = adj_ref[0]                  # (N, N)     adj[dst, src] = 1.0
    edense = ef_ref[0]                # (N, N, De) dense raw edge attributes

    g = gnn_dim
    scale = jnp.float32(1.0 / math.sqrt(g))

    # Hoisted out of the layer loop (the unrolled loop would otherwise re-emit
    # this N^2 compare/select once per layer).
    mask_bias = jnp.where(adj > 0.0, jnp.float32(0.0), jnp.float32(-1e9))

    h = x0
    for li in range(num_layers):
        wqkvs = wrefs[3 * li + 0][...]    # (Din_l, 4G)  fused q|k|v|skip
        bqkvs = wrefs[3 * li + 1][...]    # (1, 4G)
        wedge_t = wrefs[3 * li + 2][...]  # (G, De)      lin_edge weight, transposed

        # Single fused projection: q, k, v and the root/skip path in one
        # (Din, 128) MXU push.
        qkvs = jnp.dot(h, wqkvs, preferred_element_type=jnp.float32) + bqkvs
        q = qkvs[:, :g]
        k = qkvs[:, g:2 * g]
        v = qkvs[:, 2 * g:3 * g]
        skip = qkvs[:, 3 * g:4 * g]

        # Edge score term without materializing (N, N, G):
        #   s_edges[i, j] = q[i] . (We @ e[i, j]) = sum_d edense[i,j,d] * (q @ We^T)[i,d]
        qe = jnp.dot(q, wedge_t, preferred_element_type=jnp.float32)        # (N, De)
        s_nodes = lax.dot_general(
            q, k, (((1,), (1,)), ((), ())), preferred_element_type=jnp.float32)
        s_edges = jnp.sum(edense * qe[:, None, :], axis=-1)                 # (N, N)
        s = (s_nodes + s_edges) * scale + mask_bias

        # Softmax over incoming edges of each destination node; nodes with no
        # incoming edges aggregate to 0 (PyG sum-aggregation semantics).
        s = s - jnp.max(s, axis=-1, keepdims=True)
        p = jnp.exp(s) * adj
        denom = jnp.sum(p, axis=-1, keepdims=True)
        inv = jnp.where(denom > 0.0, pl.reciprocal(denom, approx=True), 0.0)
        alpha = p * inv

        # out[i] = sum_j alpha[i,j] * (v[j] + We @ e[i,j]) + skip[i]
        # Edge part: aggregate raw edge attrs first (contract in De), then one
        # (N, De)@(De, G) matmul — no (N, N, G) intermediate.
        agg = jnp.dot(alpha, v, preferred_element_type=jnp.float32)
        agg_e = jnp.sum(alpha[:, :, None] * edense, axis=1)                 # (N, De)
        agg = agg + lax.dot_general(
            agg_e, wedge_t, (((1,), (1,)), ((), ())),
            preferred_element_type=jnp.float32)
        h = jnp.maximum(agg + skip, 0.0)                                    # ReLU

    o_ref[0] = h


# ----------------------------------------------------------------------------
# Plain-JAX glue: gathers, per-graph dense adjacency build
# ----------------------------------------------------------------------------
def _dense_graph_inputs(params, batch):
    shape_id_embedding = params["shape_id_emb"][batch["shape_node_idx"]]
    shape_mult_embedding = params["shape_mult_emb"][batch["shape_node_mult"]]
    x0 = jnp.concatenate([shape_id_embedding, shape_mult_embedding], axis=-1)

    src = batch["shape_edge_index"][0]            # edge_index[0] = source
    dst = batch["shape_edge_index"][1]            # edge_index[1] = target
    join_id_emb = params["atom_id_emb"][batch["join_identities"] - 1]

    nn = np.asarray(batch["num_nodes_hgraph"])
    num_graphs = len(nn)
    max_n = int(nn.max())
    maxn_pad = _round_up(max_n, 8)

    offsets = np.concatenate([[0], np.cumsum(nn)[:-1]]).astype(np.int32)
    node_graph = np.repeat(np.arange(num_graphs), nn).astype(np.int32)
    local_idx = np.concatenate([np.arange(k) for k in nn]).astype(np.int32)

    node_graph_j = jnp.asarray(node_graph)
    local_idx_j = jnp.asarray(local_idx)
    offsets_j = jnp.asarray(offsets)

    din = x0.shape[-1]
    de = join_id_emb.shape[-1]

    # Per-graph padded node features.
    x0_b = jnp.zeros((num_graphs, maxn_pad, din), jnp.float32)
    x0_b = x0_b.at[node_graph_j, local_idx_j].set(x0)

    # Per-graph dense adjacency + dense raw edge attributes.
    # (Edges are intra-graph for shape graphs, so dst's graph == src's graph.)
    edge_graph = node_graph_j[dst]
    lsrc = src - offsets_j[edge_graph]
    ldst = dst - offsets_j[edge_graph]
    adj_b = jnp.zeros((num_graphs, maxn_pad, maxn_pad), jnp.float32)
    adj_b = adj_b.at[edge_graph, ldst, lsrc].set(1.0)
    edense_b = jnp.zeros((num_graphs, maxn_pad, maxn_pad, de), jnp.float32)
    edense_b = edense_b.at[edge_graph, ldst, lsrc].set(join_id_emb)

    return x0, x0_b, adj_b, edense_b, node_graph_j, local_idx_j


def _const_spec(arr):
    nd = arr.ndim
    return pl.BlockSpec(arr.shape, lambda b, _nd=nd: (0,) * _nd)


def shape_graph_embedder_forward(params, cfg, batch, z_graph):
    x0, x0_b, adj_b, edense_b, node_graph, local_idx = _dense_graph_inputs(
        params, batch)
    num_graphs, maxn_pad, din = x0_b.shape
    g = cfg["shape_gnn_dim"]
    de = edense_b.shape[-1]

    # Per-layer fused weights: [wq|wk|wv|wskip] -> (Din, 4G) = (Din, 128);
    # lin_edge weight passed pre-transposed as (G, De) (used for both the
    # score-side q@We^T and the agg-side contraction).
    flat_w = []
    for lw in params["layers"]:
        wqkvs = jnp.concatenate([lw["wq"], lw["wk"], lw["wv"], lw["wskip"]], axis=1)
        bqkvs = jnp.concatenate([lw["bq"], lw["bk"], lw["bv"], lw["bskip"]],
                                axis=0).reshape(1, 4 * g)
        flat_w += [wqkvs, bqkvs, lw["we"].T]

    kernel = functools.partial(
        _shape_graph_embedder_kernel,
        num_layers=len(params["layers"]), gnn_dim=g)

    in_specs = [
        pl.BlockSpec((1, maxn_pad, din), lambda b: (b, 0, 0)),
        pl.BlockSpec((1, maxn_pad, maxn_pad), lambda b: (b, 0, 0)),
        pl.BlockSpec((1, maxn_pad, maxn_pad, de), lambda b: (b, 0, 0, 0)),
    ] + [_const_spec(w) for w in flat_w]

    h_b = pl.pallas_call(
        kernel,
        out_shape=jax.ShapeDtypeStruct((num_graphs, maxn_pad, g), jnp.float32),
        grid=(num_graphs,),
        in_specs=in_specs,
        out_specs=pl.BlockSpec((1, maxn_pad, g), lambda b: (b, 0, 0)),
        compiler_params=pltpu.CompilerParams(
            dimension_semantics=("parallel",),
            vmem_limit_bytes=32 * 1024 * 1024),
    )(x0_b, adj_b, edense_b, *flat_w)

    # Gather per-graph padded outputs back to the flat node ordering, then do
    # the final [x_input || gnn_out || z_graph_rep] concat on the host/XLA side.
    h = h_b[node_graph, local_idx]                       # (N_total, G)
    z_rep = z_graph[node_graph]                          # repeat_interleave
    return jnp.concatenate([x0, h, z_rep], axis=-1)


# ----------------------------------------------------------------------------
# Pure-JAX reference (block-diagonal dense graph-attention), for validation
# ----------------------------------------------------------------------------
def shape_graph_embedder_reference(params, cfg, batch, z_graph):
    shape_id_embedding = params["shape_id_emb"][batch["shape_node_idx"]]
    shape_mult_embedding = params["shape_mult_emb"][batch["shape_node_mult"]]
    x0 = jnp.concatenate([shape_id_embedding, shape_mult_embedding], axis=-1)

    src = batch["shape_edge_index"][0]
    dst = batch["shape_edge_index"][1]
    join_id_emb = params["atom_id_emb"][batch["join_identities"] - 1]

    n = x0.shape[0]
    de = join_id_emb.shape[-1]
    adj = jnp.zeros((n, n), jnp.float32).at[dst, src].set(1.0)
    edense = jnp.zeros((n, n, de), jnp.float32).at[dst, src].set(join_id_emb)

    node_graph = np.repeat(np.arange(len(batch["num_nodes_hgraph"])),
                           np.asarray(batch["num_nodes_hgraph"]))
    z_rep = z_graph[node_graph]

    g = cfg["shape_gnn_dim"]
    scale = 1.0 / math.sqrt(g)
    hp = jax.lax.Precision.HIGHEST
    h = x0
    for lw in params["layers"]:
        q = jnp.dot(h, lw["wq"], precision=hp) + lw["bq"]
        k = jnp.dot(h, lw["wk"], precision=hp) + lw["bk"]
        v = jnp.dot(h, lw["wv"], precision=hp) + lw["bv"]
        eproj = jnp.einsum("ijd,dg->ijg", edense, lw["we"], precision=hp)
        s = (jnp.dot(q, k.T, precision=hp)
             + jnp.einsum("ig,ijg->ij", q, eproj, precision=hp)) * scale
        s = jnp.where(adj > 0, s, -1e9)
        s = s - s.max(axis=-1, keepdims=True)
        p = jnp.exp(s) * adj
        denom = p.sum(axis=-1, keepdims=True)
        alpha = jnp.where(denom > 0, p / jnp.maximum(denom, 1e-30), 0.0)
        agg = (jnp.dot(alpha, v, precision=hp)
               + jnp.einsum("ij,ijg->ig", alpha, eproj, precision=hp))
        h = jnp.maximum(agg + jnp.dot(h, lw["wskip"], precision=hp) + lw["bskip"], 0.0)
    return jnp.concatenate([x0, h, z_rep], axis=-1)


# ----------------------------------------------------------------------------
# Deterministic parameter init
# ----------------------------------------------------------------------------
def init_params(key, cfg, num_layers):
    keys = iter(jax.random.split(key, 64))

    def nrm(shape, scale=0.2):
        return jax.random.normal(next(keys), shape, dtype=jnp.float32) * scale

    input_dim = cfg["shape_id_dim"] + cfg["shape_multiplicity_dim"]
    g = cfg["shape_gnn_dim"]
    de = cfg["atom_id_dim"]

    layers = []
    for i in range(num_layers):
        din = input_dim if i == 0 else g
        layers.append(dict(
            wq=nrm((din, g)), bq=nrm((g,)),
            wk=nrm((din, g)), bk=nrm((g,)),
            wv=nrm((din, g)), bv=nrm((g,)),
            we=nrm((de, g)),                      # lin_edge (bias=False in PyG)
            wskip=nrm((din, g)), bskip=nrm((g,)),
        ))
    return dict(
        shape_id_emb=nrm((cfg["num_shape_ids"], cfg["shape_id_dim"]), 0.5),
        shape_mult_emb=nrm((cfg["num_mults"], cfg["shape_multiplicity_dim"]), 0.5),
        atom_id_emb=nrm((cfg["num_atom_ids"], cfg["atom_id_dim"]), 0.5),
        layers=layers,
    )


# ----------------------------------------------------------------------------
if __name__ == "__main__":
    cfg = dict(shape_id_dim=24, shape_multiplicity_dim=8, shape_gnn_dim=32,
               atom_id_dim=16, latent_dim=16,
               num_shape_ids=12, num_mults=4, num_atom_ids=10)
    num_layers = 2

    key = jax.random.PRNGKey(0)
    kp, k1, k2, k3, k4 = jax.random.split(key, 5)
    params = init_params(kp, cfg, num_layers)

    num_nodes_hgraph = [7, 9]
    num_graphs = len(num_nodes_hgraph)
    n_total = sum(num_nodes_hgraph)               # 16 nodes across the batch

    # Bidirectional chain edges inside each shape graph (deterministic).
    src_list, dst_list, off = [], [], 0
    for nn_ in num_nodes_hgraph:
        for i in range(nn_ - 1):
            src_list += [off + i, off + i + 1]
            dst_list += [off + i + 1, off + i]
        off += nn_
    edge_index = jnp.asarray([src_list, dst_list], dtype=jnp.int32)
    n_edges = edge_index.shape[1]

    batch = dict(
        shape_node_idx=jax.random.randint(k1, (n_total,), 0, cfg["num_shape_ids"], jnp.int32),
        shape_node_mult=jax.random.randint(k2, (n_total,), 0, cfg["num_mults"], jnp.int32),
        shape_edge_index=edge_index,
        join_identities=jax.random.randint(k3, (n_edges,), 1, cfg["num_atom_ids"] + 1, jnp.int32),
        num_nodes_hgraph=num_nodes_hgraph,
    )
    z_graph = jax.random.normal(k4, (num_graphs, cfg["latent_dim"]), dtype=jnp.float32)

    out = shape_graph_embedder_forward(params, cfg, batch, z_graph)
    jax.block_until_ready(out)

    out_dim = (cfg["shape_id_dim"] + cfg["shape_multiplicity_dim"]
               + cfg["shape_gnn_dim"] + cfg["latent_dim"])
    assert out.shape == (n_total, out_dim), out.shape

    ref = shape_graph_embedder_reference(params, cfg, batch, z_graph)
    err = float(jnp.max(jnp.abs(out - ref)))
    assert jnp.allclose(out, ref, rtol=2e-2, atol=2e-2), f"max abs err {err}"

    print("KERNEL_OK")
</pallas_src>

<mosaic_0001>
module attributes {stable_mosaic.version = 11 : i64} {
  func.func @_shape_graph_embedder_kernel(%arg0: i32, %arg1: memref<1x16x32xf32, #tpu.memory_space<vmem>>, %arg2: memref<1x16x16xf32, #tpu.memory_space<vmem>>, %arg3: memref<1x16x16x16xf32, #tpu.memory_space<vmem>>, %arg4: memref<32x128xf32, #tpu.memory_space<vmem>>, %arg5: memref<1x128xf32, #tpu.memory_space<vmem>>, %arg6: memref<32x16xf32, #tpu.memory_space<vmem>>, %arg7: memref<32x128xf32, #tpu.memory_space<vmem>>, %arg8: memref<1x128xf32, #tpu.memory_space<vmem>>, %arg9: memref<32x16xf32, #tpu.memory_space<vmem>>, %arg10: memref<1x16x32xf32, #tpu.memory_space<vmem>>) attributes {dimension_semantics = [#tpu.dimension_semantics<parallel>], iteration_bounds = array<i64: 2>, scalar_prefetch = 0 : i64, scratch_operands = 0 : i64, tpu.core_type = #tpu.core_type<tc>, window_params = [{transform_indices = @transform_0, window_bounds = array<i64: 1, 16, 32>}, {transform_indices = @transform_1, window_bounds = array<i64: 1, 16, 16>}, {transform_indices = @transform_2, window_bounds = array<i64: 1, 16, 16, 16>}, {pipeline_mode = #tpu.pipeline_mode<synchronous>, transform_indices = @transform_3, window_bounds = array<i64: 32, 128>}, {pipeline_mode = #tpu.pipeline_mode<synchronous>, transform_indices = @transform_4, window_bounds = array<i64: 1, 128>}, {pipeline_mode = #tpu.pipeline_mode<synchronous>, transform_indices = @transform_5, window_bounds = array<i64: 32, 16>}, {pipeline_mode = #tpu.pipeline_mode<synchronous>, transform_indices = @transform_6, window_bounds = array<i64: 32, 128>}, {pipeline_mode = #tpu.pipeline_mode<synchronous>, transform_indices = @transform_7, window_bounds = array<i64: 1, 128>}, {pipeline_mode = #tpu.pipeline_mode<synchronous>, transform_indices = @transform_8, window_bounds = array<i64: 32, 16>}, {transform_indices = @transform_9, window_bounds = array<i64: 1, 16, 32>}]} {
    %c0 = arith.constant 0 : index
    %c0_0 = arith.constant 0 : index
    %c0_1 = arith.constant 0 : index
    %0 = vector.load %arg1[%c0, %c0_0, %c0_1] : memref<1x16x32xf32, #tpu.memory_space<vmem>>, vector<1x16x32xf32>
    %1 = vector.shape_cast %0 : vector<1x16x32xf32> to vector<16x32xf32>
    %c0_2 = arith.constant 0 : index
    %c0_3 = arith.constant 0 : index
    %c0_4 = arith.constant 0 : index
    %2 = vector.load %arg2[%c0_2, %c0_3, %c0_4] : memref<1x16x16xf32, #tpu.memory_space<vmem>>, vector<1x16x16xf32>
    %3 = vector.shape_cast %2 : vector<1x16x16xf32> to vector<16x16xf32>
    %c0_5 = arith.constant 0 : index
    %c0_6 = arith.constant 0 : index
    %c0_7 = arith.constant 0 : index
    %c0_8 = arith.constant 0 : index
    %4 = vector.load %arg3[%c0_5, %c0_6, %c0_7, %c0_8] : memref<1x16x16x16xf32, #tpu.memory_space<vmem>>, vector<1x16x16x16xf32>
    %5 = vector.shape_cast %4 : vector<1x16x16x16xf32> to vector<16x16x16xf32>
    %cst = arith.constant 0.000000e+00 : f32
    %6 = vector.broadcast %cst : f32 to vector<16x16xf32>
    %7 = arith.cmpf ogt, %3, %6 : vector<16x16xf32>
    %cst_9 = arith.constant 0.000000e+00 : f32
    %cst_10 = arith.constant -1.000000e+09 : f32
    %8 = vector.broadcast %cst_9 : f32 to vector<16x16xf32>
    %9 = vector.broadcast %cst_10 : f32 to vector<16x16xf32>
    %10 = arith.select %7, %8, %9 : vector<16x16xi1>, vector<16x16xf32>
    %c0_11 = arith.constant 0 : index
    %c0_12 = arith.constant 0 : index
    %11 = vector.load %arg4[%c0_11, %c0_12] : memref<32x128xf32, #tpu.memory_space<vmem>>, vector<32x128xf32>
    %c0_13 = arith.constant 0 : index
    %c0_14 = arith.constant 0 : index
    %12 = vector.load %arg5[%c0_13, %c0_14] : memref<1x128xf32, #tpu.memory_space<vmem>>, vector<1x128xf32>
    %c0_15 = arith.constant 0 : index
    %c0_16 = arith.constant 0 : index
    %13 = vector.load %arg6[%c0_15, %c0_16] : memref<32x16xf32, #tpu.memory_space<vmem>>, vector<32x16xf32>
    %cst_17 = arith.constant dense<0.000000e+00> : vector<16x128xf32>
    %14 = tpu.matmul %1, %11, %cst_17 {dimension_numbers = #tpu.dot_dimension_numbers<[1], [0], [0], [1], [0, 0, 1, 1], [], []>} : vector<16x32xf32>, vector<32x128xf32>, vector<16x128xf32> -> vector<16x128xf32>
    %15 = vector.broadcast %12 : vector<1x128xf32> to vector<16x128xf32>
    %16 = arith.addf %14, %15 : vector<16x128xf32>
    %17 = vector.extract_strided_slice %16 {offsets = [0, 0], sizes = [16, 32], strides = [1, 1]} : vector<16x128xf32> to vector<16x32xf32>
    %18 = vector.extract_strided_slice %16 {offsets = [0, 32], sizes = [16, 32], strides = [1, 1]} : vector<16x128xf32> to vector<16x32xf32>
    %19 = vector.extract_strided_slice %16 {offsets = [0, 64], sizes = [16, 32], strides = [1, 1]} : vector<16x128xf32> to vector<16x32xf32>
    %20 = vector.extract_strided_slice %16 {offsets = [0, 96], sizes = [16, 32], strides = [1, 1]} : vector<16x128xf32> to vector<16x32xf32>
    %cst_18 = arith.constant dense<0.000000e+00> : vector<16x16xf32>
    %21 = tpu.matmul %17, %13, %cst_18 {dimension_numbers = #tpu.dot_dimension_numbers<[1], [0], [0], [1], [0, 0, 1, 1], [], []>} : vector<16x32xf32>, vector<32x16xf32>, vector<16x16xf32> -> vector<16x16xf32>
    %cst_19 = arith.constant dense<0.000000e+00> : vector<16x16xf32>
    %22 = tpu.matmul %17, %18, %cst_19 {dimension_numbers = #tpu.dot_dimension_numbers<[1], [1], [0], [0], [0, 0, 1, 0], [], []>} : vector<16x32xf32>, vector<16x32xf32>, vector<16x16xf32> -> vector<16x16xf32>
    %23 = vector.shape_cast %21 : vector<16x16xf32> to vector<16x1x16xf32>
    %24 = vector.broadcast %23 : vector<16x1x16xf32> to vector<16x16x16xf32>
    %25 = arith.mulf %5, %24 : vector<16x16x16xf32>
    %cst_20 = arith.constant dense<0.000000e+00> : vector<16x16xf32>
    %26 = vector.multi_reduction <add>, %25, %cst_20 [2] : vector<16x16x16xf32> to vector<16x16xf32>
    %27 = arith.addf %22, %26 : vector<16x16xf32>
    %cst_21 = arith.constant 0.176776692 : f32
    %28 = vector.broadcast %cst_21 : f32 to vector<16x16xf32>
    %29 = arith.mulf %27, %28 : vector<16x16xf32>
    %30 = arith.addf %29, %10 : vector<16x16xf32>
    %cst_22 = arith.constant dense<0xFF800000> : vector<16xf32>
    %31 = vector.multi_reduction <maximumf>, %30, %cst_22 [1] : vector<16x16xf32> to vector<16xf32>
    %32 = vector.shape_cast %31 : vector<16xf32> to vector<16x1xf32>
    %33 = vector.broadcast %32 : vector<16x1xf32> to vector<16x16xf32>
    %34 = arith.subf %30, %33 : vector<16x16xf32>
    %35 = math.exp %34 : vector<16x16xf32>
    %36 = arith.mulf %35, %3 : vector<16x16xf32>
    %cst_23 = arith.constant dense<0.000000e+00> : vector<16xf32>
    %37 = vector.multi_reduction <add>, %36, %cst_23 [1] : vector<16x16xf32> to vector<16xf32>
    %38 = vector.shape_cast %37 : vector<16xf32> to vector<16x1xf32>
    %cst_24 = arith.constant 0.000000e+00 : f32
    %39 = vector.broadcast %cst_24 : f32 to vector<16x1xf32>
    %40 = arith.cmpf ogt, %38, %39 : vector<16x1xf32>
    %41 = tpu.reciprocal %38 {approx = true} : vector<16x1xf32> -> vector<16x1xf32>
    %cst_25 = arith.constant 0.000000e+00 : f32
    %42 = vector.broadcast %cst_25 : f32 to vector<16x1xf32>
    %43 = arith.select %40, %41, %42 : vector<16x1xi1>, vector<16x1xf32>
    %44 = vector.broadcast %43 : vector<16x1xf32> to vector<16x16xf32>
    %45 = arith.mulf %36, %44 : vector<16x16xf32>
    %cst_26 = arith.constant dense<0.000000e+00> : vector<16x32xf32>
    %46 = tpu.matmul %45, %19, %cst_26 {dimension_numbers = #tpu.dot_dimension_numbers<[1], [0], [0], [1], [0, 0, 1, 1], [], []>} : vector<16x16xf32>, vector<16x32xf32>, vector<16x32xf32> -> vector<16x32xf32>
    %47 = vector.shape_cast %45 : vector<16x16xf32> to vector<16x16x1xf32>
    %48 = vector.broadcast %47 : vector<16x16x1xf32> to vector<16x16x16xf32>
    %49 = arith.mulf %48, %5 : vector<16x16x16xf32>
    %cst_27 = arith.constant dense<0.000000e+00> : vector<16x16xf32>
    %50 = vector.multi_reduction <add>, %49, %cst_27 [1] : vector<16x16x16xf32> to vector<16x16xf32>
    %cst_28 = arith.constant dense<0.000000e+00> : vector<16x32xf32>
    %51 = tpu.matmul %50, %13, %cst_28 {dimension_numbers = #tpu.dot_dimension_numbers<[1], [1], [0], [0], [0, 0, 1, 0], [], []>} : vector<16x16xf32>, vector<32x16xf32>, vector<16x32xf32> -> vector<16x32xf32>
    %52 = arith.addf %46, %51 : vector<16x32xf32>
    %53 = arith.addf %52, %20 : vector<16x32xf32>
    %cst_29 = arith.constant 0.000000e+00 : f32
    %54 = vector.broadcast %cst_29 : f32 to vector<16x32xf32>
    %55 = arith.maximumf %53, %54 : vector<16x32xf32>
    %c0_30 = arith.constant 0 : index
    %c0_31 = arith.constant 0 : index
    %56 = vector.load %arg7[%c0_30, %c0_31] : memref<32x128xf32, #tpu.memory_space<vmem>>, vector<32x128xf32>
    %c0_32 = arith.constant 0 : index
    %c0_33 = arith.constant 0 : index
    %57 = vector.load %arg8[%c0_32, %c0_33] : memref<1x128xf32, #tpu.memory_space<vmem>>, vector<1x128xf32>
    %c0_34 = arith.constant 0 : index
    %c0_35 = arith.constant 0 : index
    %58 = vector.load %arg9[%c0_34, %c0_35] : memref<32x16xf32, #tpu.memory_space<vmem>>, vector<32x16xf32>
    %cst_36 = arith.constant dense<0.000000e+00> : vector<16x128xf32>
    %59 = tpu.matmul %55, %56, %cst_36 {dimension_numbers = #tpu.dot_dimension_numbers<[1], [0], [0], [1], [0, 0, 1, 1], [], []>} : vector<16x32xf32>, vector<32x128xf32>, vector<16x128xf32> -> vector<16x128xf32>
    %60 = vector.broadcast %57 : vector<1x128xf32> to vector<16x128xf32>
    %61 = arith.addf %59, %60 : vector<16x128xf32>
    %62 = vector.extract_strided_slice %61 {offsets = [0, 0], sizes = [16, 32], strides = [1, 1]} : vector<16x128xf32> to vector<16x32xf32>
    %63 = vector.extract_strided_slice %61 {offsets = [0, 32], sizes = [16, 32], strides = [1, 1]} : vector<16x128xf32> to vector<16x32xf32>
    %64 = vector.extract_strided_slice %61 {offsets = [0, 64], sizes = [16, 32], strides = [1, 1]} : vector<16x128xf32> to vector<16x32xf32>
    %65 = vector.extract_strided_slice %61 {offsets = [0, 96], sizes = [16, 32], strides = [1, 1]} : vector<16x128xf32> to vector<16x32xf32>
    %cst_37 = arith.constant dense<0.000000e+00> : vector<16x16xf32>
    %66 = tpu.matmul %62, %58, %cst_37 {dimension_numbers = #tpu.dot_dimension_numbers<[1], [0], [0], [1], [0, 0, 1, 1], [], []>} : vector<16x32xf32>, vector<32x16xf32>, vector<16x16xf32> -> vector<16x16xf32>
    %cst_38 = arith.constant dense<0.000000e+00> : vector<16x16xf32>
    %67 = tpu.matmul %62, %63, %cst_38 {dimension_numbers = #tpu.dot_dimension_numbers<[1], [1], [0], [0], [0, 0, 1, 0], [], []>} : vector<16x32xf32>, vector<16x32xf32>, vector<16x16xf32> -> vector<16x16xf32>
    %68 = vector.shape_cast %66 : vector<16x16xf32> to vector<16x1x16xf32>
    %69 = vector.broadcast %68 : vector<16x1x16xf32> to vector<16x16x16xf32>
    %70 = arith.mulf %5, %69 : vector<16x16x16xf32>
    %cst_39 = arith.constant dense<0.000000e+00> : vector<16x16xf32>
    %71 = vector.multi_reduction <add>, %70, %cst_39 [2] : vector<16x16x16xf32> to vector<16x16xf32>
    %72 = arith.addf %67, %71 : vector<16x16xf32>
    %cst_40 = arith.constant 0.176776692 : f32
    %73 = vector.broadcast %cst_40 : f32 to vector<16x16xf32>
    %74 = arith.mulf %72, %73 : vector<16x16xf32>
    %75 = arith.addf %74, %10 : vector<16x16xf32>
    %cst_41 = arith.constant dense<0xFF800000> : vector<16xf32>
    %76 = vector.multi_reduction <maximumf>, %75, %cst_41 [1] : vector<16x16xf32> to vector<16xf32>
    %77 = vector.shape_cast %76 : vector<16xf32> to vector<16x1xf32>
    %78 = vector.broadcast %77 : vector<16x1xf32> to vector<16x16xf32>
    %79 = arith.subf %75, %78 : vector<16x16xf32>
    %80 = math.exp %79 : vector<16x16xf32>
    %81 = arith.mulf %80, %3 : vector<16x16xf32>
    %cst_42 = arith.constant dense<0.000000e+00> : vector<16xf32>
    %82 = vector.multi_reduction <add>, %81, %cst_42 [1] : vector<16x16xf32> to vector<16xf32>
    %83 = vector.shape_cast %82 : vector<16xf32> to vector<16x1xf32>
    %cst_43 = arith.constant 0.000000e+00 : f32
    %84 = vector.broadcast %cst_43 : f32 to vector<16x1xf32>
    %85 = arith.cmpf ogt, %83, %84 : vector<16x1xf32>
    %86 = tpu.reciprocal %83 {approx = true} : vector<16x1xf32> -> vector<16x1xf32>
    %cst_44 = arith.constant 0.000000e+00 : f32
    %87 = vector.broadcast %cst_44 : f32 to vector<16x1xf32>
    %88 = arith.select %85, %86, %87 : vector<16x1xi1>, vector<16x1xf32>
    %89 = vector.broadcast %88 : vector<16x1xf32> to vector<16x16xf32>
    %90 = arith.mulf %81, %89 : vector<16x16xf32>
    %cst_45 = arith.constant dense<0.000000e+00> : vector<16x32xf32>
    %91 = tpu.matmul %90, %64, %cst_45 {dimension_numbers = #tpu.dot_dimension_numbers<[1], [0], [0], [1], [0, 0, 1, 1], [], []>} : vector<16x16xf32>, vector<16x32xf32>, vector<16x32xf32> -> vector<16x32xf32>
    %92 = vector.shape_cast %90 : vector<16x16xf32> to vector<16x16x1xf32>
    %93 = vector.broadcast %92 : vector<16x16x1xf32> to vector<16x16x16xf32>
    %94 = arith.mulf %93, %5 : vector<16x16x16xf32>
    %cst_46 = arith.constant dense<0.000000e+00> : vector<16x16xf32>
    %95 = vector.multi_reduction <add>, %94, %cst_46 [1] : vector<16x16x16xf32> to vector<16x16xf32>
    %cst_47 = arith.constant dense<0.000000e+00> : vector<16x32xf32>
    %96 = tpu.matmul %95, %58, %cst_47 {dimension_numbers = #tpu.dot_dimension_numbers<[1], [1], [0], [0], [0, 0, 1, 0], [], []>} : vector<16x16xf32>, vector<32x16xf32>, vector<16x32xf32> -> vector<16x32xf32>
    %97 = arith.addf %91, %96 : vector<16x32xf32>
    %98 = arith.addf %97, %65 : vector<16x32xf32>
    %cst_48 = arith.constant 0.000000e+00 : f32
    %99 = vector.broadcast %cst_48 : f32 to vector<16x32xf32>
    %100 = arith.maximumf %98, %99 : vector<16x32xf32>
    %c0_49 = arith.constant 0 : index
    %c0_50 = arith.constant 0 : index
    %c0_51 = arith.constant 0 : index
    %101 = vector.load %arg10[%c0_49, %c0_50, %c0_51] : memref<1x16x32xf32, #tpu.memory_space<vmem>>, vector<1x16x32xf32>
    %102 = vector.shape_cast %101 : vector<1x16x32xf32> to vector<16x32xf32>
    %103 = vector.shape_cast %100 : vector<16x32xf32> to vector<1x16x32xf32>
    tpu.vector_store %arg10[%c0_49, %c0_50, %c0_51], %103 {strides = array<i32>} : memref<1x16x32xf32, #tpu.memory_space<vmem>>, vector<1x16x32xf32>,
    return
  }
  func.func @transform_0(%arg0: i32) -> (i32, i32, i32) {
    %c0_i32 = arith.constant 0 : i32
    %c0_i32_0 = arith.constant 0 : i32
    %c0_i32_1 = arith.constant 0 : i32
    return %arg0, %c0_i32, %c0_i32_0 : i32, i32, i32
  }
  func.func @transform_1(%arg0: i32) -> (i32, i32, i32) {
    %c0_i32 = arith.constant 0 : i32
    %c0_i32_0 = arith.constant 0 : i32
    %c0_i32_1 = arith.constant 0 : i32
    return %arg0, %c0_i32, %c0_i32_0 : i32, i32, i32
  }
  func.func @transform_2(%arg0: i32) -> (i32, i32, i32, i32) {
    %c0_i32 = arith.constant 0 : i32
    %c0_i32_0 = arith.constant 0 : i32
    %c0_i32_1 = arith.constant 0 : i32
    %c0_i32_2 = arith.constant 0 : i32
    return %arg0, %c0_i32, %c0_i32_0, %c0_i32_1 : i32, i32, i32, i32
  }
  func.func @transform_3(%arg0: i32) -> (i32, i32) {
    %c0_i32 = arith.constant 0 : i32
    %c0_i32_0 = arith.constant 0 : i32
    %c0_i32_1 = arith.constant 0 : i32
    return %c0_i32, %c0_i32_0 : i32, i32
  }
  func.func @transform_4(%arg0: i32) -> (i32, i32) {
    %c0_i32 = arith.constant 0 : i32
    %c0_i32_0 = arith.constant 0 : i32
    %c0_i32_1 = arith.constant 0 : i32
    return %c0_i32, %c0_i32_0 : i32, i32
  }
  func.func @transform_5(%arg0: i32) -> (i32, i32) {
    %c0_i32 = arith.constant 0 : i32
    %c0_i32_0 = arith.constant 0 : i32
    %c0_i32_1 = arith.constant 0 : i32
    return %c0_i32, %c0_i32_0 : i32, i32
  }
  func.func @transform_6(%arg0: i32) -> (i32, i32) {
    %c0_i32 = arith.constant 0 : i32
    %c0_i32_0 = arith.constant 0 : i32
    %c0_i32_1 = arith.constant 0 : i32
    return %c0_i32, %c0_i32_0 : i32, i32
  }
  func.func @transform_7(%arg0: i32) -> (i32, i32) {
    %c0_i32 = arith.constant 0 : i32
    %c0_i32_0 = arith.constant 0 : i32
    %c0_i32_1 = arith.constant 0 : i32
    return %c0_i32, %c0_i32_0 : i32, i32
  }
  func.func @transform_8(%arg0: i32) -> (i32, i32) {
    %c0_i32 = arith.constant 0 : i32
    %c0_i32_0 = arith.constant 0 : i32
    %c0_i32_1 = arith.constant 0 : i32
    return %c0_i32, %c0_i32_0 : i32, i32
  }
  func.func @transform_9(%arg0: i32) -> (i32, i32, i32) {
    %c0_i32 = arith.constant 0 : i32
    %c0_i32_0 = arith.constant 0 : i32
    %c0_i32_1 = arith.constant 0 : i32
    return %arg0, %c0_i32, %c0_i32_0 : i32, i32, i32
  }
}

</mosaic_0001>

<llo_original>
// kernel: tpu_custom_call.1
$region0: #{tpu_custom_call.1}
  #allocation0 [shape = 'u32[]', space=smem, size = 0x4, offset = 0x4, fixed_abs, tag = 'smem constant byte address 0x4 - core index']
  #allocation1 [shape = 'u32[144,128]{1,0:T(1,128)}', space=vmem, size = 0x12000, scoped, tag = 'internal scratch']
  %s0 = inlined_call_operand.vmem [shape: f32[2,16,32], index: 0, kind: input, shape index: {}]
  %s1 = inlined_call_operand.vmem [shape: f32[2,16,16], index: 1, kind: input, shape index: {}]
  %s2 = inlined_call_operand.hbm [shape: f32[2,16,16,16], index: 2, kind: input, shape index: {}]
  %s3 = inlined_call_operand.vmem [shape: f32[32,128], index: 3, kind: input, shape index: {}]
  %s4 = inlined_call_operand.vmem [shape: f32[1,128], index: 4, kind: input, shape index: {}]
  %s5 = inlined_call_operand.vmem [shape: f32[32,16], index: 5, kind: input, shape index: {}]
  %s6 = inlined_call_operand.hbm [shape: f32[32,128], index: 6, kind: input, shape index: {}]
  %s7 = inlined_call_operand.vmem [shape: f32[1,128], index: 7, kind: input, shape index: {}]
  %s8 = inlined_call_operand.vmem [shape: f32[32,16], index: 8, kind: input, shape index: {}]
  %s9 = inlined_call_operand.hbm [shape: f32[2,16,32], index: 9, kind: output, shape index: {}]
  %s10 = sld [smem:[#allocation0]]
  $region77: #{tpu_custom_call.1} parent=0
    _
  %s12 = ssub.s32 1, %s10
  %s13 = scalar_select 0, %s12, %s10
  $region1: #{tpu_custom_call.1} parent=0
    #allocation2 [shape = 'u8[262144]{0}', space=vmem, size = 0x40000, scoped, tag = 'input window, operand 2']
    #allocation3 [shape = 's32[2]{0}', space=sflag, size = 0x8, scoped, tag = 'scoped memory for tpu_custom_call.1']
    #allocation4 [shape = 's32[2]{0}', space=sflag, size = 0x8, scoped, tag = 'scoped memory for tpu_custom_call.1']
    #allocation5 [shape = 'u8[16384]{0}', space=vmem, size = 0x4000, scoped, tag = 'input window, operand 6, single buffered']
    #allocation6 [shape = 's32[1]{0}', space=sflag, size = 0x4, scoped, tag = 'scoped memory for tpu_custom_call.1']
    #allocation7 [shape = 'u8[16384]{0}', space=vmem, size = 0x4000, scoped, tag = 'output window, operand 0']
    %14 = vsyncpa [#allocation3], 0
    %s15 = scalar_lea.sflag [#allocation3], 1
    %16 = vsyncpa %s15, 0
    %17 = vsyncpa [#allocation6], 0
    %18 = vsyncpa [#allocation4], 0
    %s19 = scalar_lea.sflag [#allocation4], 1
    %20 = vsyncpa %s19, 0
    loop: start=0, step=1, limit=4
    $region2: #{tpu_custom_call.1} parent=1 // loop_pre_header
      _
    $region3: #{tpu_custom_call.1} parent=1 // loop_header
      %s22 = sphi 0, %s26
      %p23 = scmp.ge.s32.totalorder %s22, 4
      %s32 = sphi 0, %s34
      %s35 = sphi 0, %s32
      %s36 = sphi 0, %s35
      %s52 = sphi 0, %s36
      %s58 = sphi 0, %s60
      %s61 = sphi 0, %s58
      %s62 = sphi 0, %s61
      %s78 = sphi 0, %s62
      %s84 = sphi 0, %s86
      %s87 = sphi 0, %s84
      %s88 = sphi 0, %s87
      %s104 = sphi 0, %s88
      %s108 = sphi 0, %s108
      %s110 = sphi 0, %s108
      %s111 = sphi 0, %s110
      %s125 = sphi 0, %s111
      %s129 = sphi 0, %s129
      %s131 = sphi 0, %s129
      %s132 = sphi 0, %s131
      %s146 = sphi 0, %s132
      %s150 = sphi 0, %s150
      %s152 = sphi 0, %s150
      %s153 = sphi 0, %s152
      %s167 = sphi 0, %s153
      %s171 = sphi 0, %s171
      %s173 = sphi 0, %s171
      %s174 = sphi 0, %s173
      %s188 = sphi 0, %s174
      %s192 = sphi 0, %s192
      %s194 = sphi 0, %s192
      %s195 = sphi 0, %s194
      %s209 = sphi 0, %s195
      %s213 = sphi 0, %s213
      %s215 = sphi 0, %s213
      %s216 = sphi 0, %s215
      %s230 = sphi 0, %s216
      %s236 = sphi 0, %s238
      %s239 = sphi 0, %s236
      %s240 = sphi 0, %s239
      %s256 = sphi 0, %s240
    $region4: #{tpu_custom_call.1} parent=1 // loop_header_branch
      %25 = sbr.rel (%p23) target = $region8
    $region5: #{tpu_custom_call.1} parent=1 // loop_body
      %s27 = ssub.s32 %s22, 1
      %s28 = ssub.s32 %s22, 2
      %s29 = sadd.s32 %s22, 1
      %s30 = ssub.s32 %s22, %s29
      %p31 = scmp.eq.s32.totalorder %s30, 0
      %s33 = sadd.s32 %s32, 1
      %s34 = scalar_select %p31, %s32, %s33
      %p37 = pneg %p31
      %p38 = scmp.eq.s32.totalorder %s22, 1
      %p39 = por %p37, %p38
      %p40 = scmp.ne.s32.totalorder %s32, %s35
      %p41 = scmp.eq.s32.totalorder %s22, 0
      %p42 = por %p40, %p41
      %p43 = scmp.ne.s32.totalorder %s32, %s35
      %p44 = scmp.eq.s32.totalorder %s27, 1
      %p45 = por %p43, %p44
      %p46 = scmp.ne.s32.totalorder %s35, %s36
      %p47 = scmp.eq.s32.totalorder %s27, 0
      %p48 = por %p46, %p47
      %p49 = scmp.ne.s32.totalorder %s35, %s36
      %p50 = scmp.eq.s32.totalorder %s28, 1
      %p51 = por %p49, %p50
      %p53 = scmp.ne.s32.totalorder %s36, %s52
      %p54 = scmp.eq.s32.totalorder %s28, 0
      %p55 = por %p53, %p54
      %s56 = ssub.s32 %s22, %s29
      %p57 = scmp.eq.s32.totalorder %s56, 0
      %s59 = sadd.s32 %s58, 1
      %s60 = scalar_select %p57, %s58, %s59
      %p63 = pneg %p57
      %p64 = scmp.eq.s32.totalorder %s22, 1
      %p65 = por %p63, %p64
      %p66 = scmp.ne.s32.totalorder %s58, %s61
      %p67 = scmp.eq.s32.totalorder %s22, 0
      %p68 = por %p66, %p67
      %p69 = scmp.ne.s32.totalorder %s58, %s61
      %p70 = scmp.eq.s32.totalorder %s27, 1
      %p71 = por %p69, %p70
      %p72 = scmp.ne.s32.totalorder %s61, %s62
      %p73 = scmp.eq.s32.totalorder %s27, 0
      %p74 = por %p72, %p73
      %p75 = scmp.ne.s32.totalorder %s61, %s62
      %p76 = scmp.eq.s32.totalorder %s28, 1
      %p77 = por %p75, %p76
      %p79 = scmp.ne.s32.totalorder %s62, %s78
      %p80 = scmp.eq.s32.totalorder %s28, 0
      %p81 = por %p79, %p80
      %s82 = ssub.s32 %s22, %s29
      %p83 = scmp.eq.s32.totalorder %s82, 0
      %s85 = sadd.s32 %s84, 1
      %s86 = scalar_select %p83, %s84, %s85
      %p89 = pneg %p83
      %p90 = scmp.eq.s32.totalorder %s22, 1
      %p91 = por %p89, %p90
      %p92 = scmp.ne.s32.totalorder %s84, %s87
      %p93 = scmp.eq.s32.totalorder %s22, 0
      %p94 = por %p92, %p93
      %p95 = scmp.ne.s32.totalorder %s84, %s87
      %p96 = scmp.eq.s32.totalorder %s27, 1
      %p97 = por %p95, %p96
      %p98 = scmp.ne.s32.totalorder %s87, %s88
      %p99 = scmp.eq.s32.totalorder %s27, 0
      %p100 = por %p98, %p99
      %p101 = scmp.ne.s32.totalorder %s87, %s88
      %p102 = scmp.eq.s32.totalorder %s28, 1
      %p103 = por %p101, %p102
      %p105 = scmp.ne.s32.totalorder %s88, %s104
      %p106 = scmp.eq.s32.totalorder %s28, 0
      %p107 = por %p105, %p106
      %s109 = sadd.s32 %s108, 1
      %p112 = scmp.eq.s32.totalorder %s22, 1
      %p113 = scmp.ne.s32.totalorder %s108, %s110
      %p114 = scmp.eq.s32.totalorder %s22, 0
      %p115 = por %p113, %p114
      %p116 = scmp.ne.s32.totalorder %s108, %s110
      %p117 = scmp.eq.s32.totalorder %s27, 1
      %p118 = por %p116, %p117
      %p119 = scmp.ne.s32.totalorder %s110, %s111
      %p120 = scmp.eq.s32.totalorder %s27, 0
      %p121 = por %p119, %p120
      %p122 = scmp.ne.s32.totalorder %s110, %s111
      %p123 = scmp.eq.s32.totalorder %s28, 1
      %p124 = por %p122, %p123
      %p126 = scmp.ne.s32.totalorder %s111, %s125
      %p127 = scmp.eq.s32.totalorder %s28, 0
      %p128 = por %p126, %p127
      %s130 = sadd.s32 %s129, 1
      %p133 = scmp.eq.s32.totalorder %s22, 1
      %p134 = scmp.ne.s32.totalorder %s129, %s131
      %p135 = scmp.eq.s32.totalorder %s22, 0
      %p136 = por %p134, %p135
      %p137 = scmp.ne.s32.totalorder %s129, %s131
      %p138 = scmp.eq.s32.totalorder %s27, 1
      %p139 = por %p137, %p138
      %p140 = scmp.ne.s32.totalorder %s131, %s132
      %p141 = scmp.eq.s32.totalorder %s27, 0
      %p142 = por %p140, %p141
      %p143 = scmp.ne.s32.totalorder %s131, %s132
      %p144 = scmp.eq.s32.totalorder %s28, 1
      %p145 = por %p143, %p144
      %p147 = scmp.ne.s32.totalorder %s132, %s146
      %p148 = scmp.eq.s32.totalorder %s28, 0
      %p149 = por %p147, %p148
      %s151 = sadd.s32 %s150, 1
      %p154 = scmp.eq.s32.totalorder %s22, 1
      %p155 = scmp.ne.s32.totalorder %s150, %s152
      %p156 = scmp.eq.s32.totalorder %s22, 0
      %p157 = por %p155, %p156
      %p158 = scmp.ne.s32.totalorder %s150, %s152
      %p159 = scmp.eq.s32.totalorder %s27, 1
      %p160 = por %p158, %p159
      %p161 = scmp.ne.s32.totalorder %s152, %s153
      %p162 = scmp.eq.s32.totalorder %s27, 0
      %p163 = por %p161, %p162
      %p164 = scmp.ne.s32.totalorder %s152, %s153
      %p165 = scmp.eq.s32.totalorder %s28, 1
      %p166 = por %p164, %p165
      %p168 = scmp.ne.s32.totalorder %s153, %s167
      %p169 = scmp.eq.s32.totalorder %s28, 0
      %p170 = por %p168, %p169
      %s172 = sadd.s32 %s171, 1
      %p175 = scmp.eq.s32.totalorder %s22, 1
      %p176 = scmp.ne.s32.totalorder %s171, %s173
      %p177 = scmp.eq.s32.totalorder %s22, 0
      %p178 = por %p176, %p177
      %p179 = scmp.ne.s32.totalorder %s171, %s173
      %p180 = scmp.eq.s32.totalorder %s27, 1
      %p181 = por %p179, %p180
      %p182 = scmp.ne.s32.totalorder %s173, %s174
      %p183 = scmp.eq.s32.totalorder %s27, 0
      %p184 = por %p182, %p183
      %p185 = scmp.ne.s32.totalorder %s173, %s174
      %p186 = scmp.eq.s32.totalorder %s28, 1
      %p187 = por %p185, %p186
      %p189 = scmp.ne.s32.totalorder %s174, %s188
      %p190 = scmp.eq.s32.totalorder %s28, 0
      %p191 = por %p189, %p190
      %s193 = sadd.s32 %s192, 1
      %p196 = scmp.eq.s32.totalorder %s22, 1
      %p197 = scmp.ne.s32.totalorder %s192, %s194
      %p198 = scmp.eq.s32.totalorder %s22, 0
      %p199 = por %p197, %p198
      %p200 = scmp.ne.s32.totalorder %s192, %s194
      %p201 = scmp.eq.s32.totalorder %s27, 1
      %p202 = por %p200, %p201
      %p203 = scmp.ne.s32.totalorder %s194, %s195
      %p204 = scmp.eq.s32.totalorder %s27, 0
      %p205 = por %p203, %p204
      %p206 = scmp.ne.s32.totalorder %s194, %s195
      %p207 = scmp.eq.s32.totalorder %s28, 1
      %p208 = por %p206, %p207
      %p210 = scmp.ne.s32.totalorder %s195, %s209
      %p211 = scmp.eq.s32.totalorder %s28, 0
      %p212 = por %p210, %p211
      %s214 = sadd.s32 %s213, 1
      %p217 = scmp.eq.s32.totalorder %s22, 1
      %p218 = scmp.ne.s32.totalorder %s213, %s215
      %p219 = scmp.eq.s32.totalorder %s22, 0
      %p220 = por %p218, %p219
      %p221 = scmp.ne.s32.totalorder %s213, %s215
      %p222 = scmp.eq.s32.totalorder %s27, 1
      %p223 = por %p221, %p222
      %p224 = scmp.ne.s32.totalorder %s215, %s216
      %p225 = scmp.eq.s32.totalorder %s27, 0
      %p226 = por %p224, %p225
      %p227 = scmp.ne.s32.totalorder %s215, %s216
      %p228 = scmp.eq.s32.totalorder %s28, 1
      %p229 = por %p227, %p228
      %p231 = scmp.ne.s32.totalorder %s216, %s230
      %p232 = scmp.eq.s32.totalorder %s28, 0
      %p233 = por %p231, %p232
      %s234 = ssub.s32 %s22, %s29
      %p235 = scmp.eq.s32.totalorder %s234, 0
      %s237 = sadd.s32 %s236, 1
      %s238 = scalar_select %p235, %s236, %s237
      %p241 = pneg %p235
      %p242 = scmp.eq.s32.totalorder %s22, 1
      %p243 = por %p241, %p242
      %p244 = scmp.ne.s32.totalorder %s236, %s239
      %p245 = scmp.eq.s32.totalorder %s22, 0
      %p246 = por %p244, %p245
      %p247 = scmp.ne.s32.totalorder %s236, %s239
      %p248 = scmp.eq.s32.totalorder %s27, 1
      %p249 = por %p247, %p248
      %p250 = scmp.ne.s32.totalorder %s239, %s240
      %p251 = scmp.eq.s32.totalorder %s27, 0
      %p252 = por %p250, %p251
      %p253 = scmp.ne.s32.totalorder %s239, %s240
      %p254 = scmp.eq.s32.totalorder %s28, 1
      %p255 = por %p253, %p254
      %p257 = scmp.ne.s32.totalorder %s240, %s256
      %p258 = scmp.eq.s32.totalorder %s28, 0
      %p259 = por %p257, %p258
      %p260 = scmp.le.s32.totalorder 1, %s22
      %p261 = scmp.lt.s32.totalorder %s22, 3
      %p262 = pnand %p260, %p261
      %p263 = pneg %p262
      // Predicated region
      $region9: #{tpu_custom_call.1} parent=5 // pred_check
        _
      $region10: #{tpu_custom_call.1} parent=5 // pred_check_branch
        %265 = sbr.rel (%p262) target = $region12
      $region11: #{tpu_custom_call.1} parent=5 // pred_region
        %s266 = ssub.s32 %s22, 1
        // Predicated region
        $region13: #{tpu_custom_call.1} parent=11 // pred_check
          %p267 = pneg %p121
        $region14: #{tpu_custom_call.1} parent=11 // pred_check_branch
          %269 = sbr.rel (%p267) target = $region16
        $region15: #{tpu_custom_call.1} parent=11 // pred_region
          _
        $region16: #{tpu_custom_call.1} parent=11 // pred_fallthru
          _
        // Predicated region
        $region17: #{tpu_custom_call.1} parent=11 // pred_check
          %p270 = pneg %p142
        $region18: #{tpu_custom_call.1} parent=11 // pred_check_branch
          %272 = sbr.rel (%p270) target = $region20
        $region19: #{tpu_custom_call.1} parent=11 // pred_region
          _
        $region20: #{tpu_custom_call.1} parent=11 // pred_fallthru
          _
        // Predicated region
        $region21: #{tpu_custom_call.1} parent=11 // pred_check
          %p273 = pneg %p163
        $region22: #{tpu_custom_call.1} parent=11 // pred_check_branch
          %275 = sbr.rel (%p273) target = $region24
        $region23: #{tpu_custom_call.1} parent=11 // pred_region
          _
        $region24: #{tpu_custom_call.1} parent=11 // pred_fallthru
          _
        // Predicated region
        $region25: #{tpu_custom_call.1} parent=11 // pred_check
          %p276 = pneg %p184
        $region26: #{tpu_custom_call.1} parent=11 // pred_check_branch
          %278 = sbr.rel (%p276) target = $region28
        $region27: #{tpu_custom_call.1} parent=11 // pred_region
          %s280 = ssub.s32 512, 512
          %281 = vsyncadd [#allocation6], %s280
          %s282 = sshll.u32 [#allocation5], 4
          %s283 = int_to_ptr.vmem [resolvable:$true] %s282
          %288 = dma.hbm_to_vmem [thread:$0]  %s6, 512, %s283, [#allocation6], 128, 128, 8
        $region28: #{tpu_custom_call.1} parent=11 // pred_fallthru
          _
        // Predicated region
        $region29: #{tpu_custom_call.1} parent=11 // pred_check
          %p289 = pneg %p205
        $region30: #{tpu_custom_call.1} parent=11 // pred_check_branch
          %291 = sbr.rel (%p289) target = $region32
        $region31: #{tpu_custom_call.1} parent=11 // pred_region
          _
        $region32: #{tpu_custom_call.1} parent=11 // pred_fallthru
          _
        // Predicated region
        $region33: #{tpu_custom_call.1} parent=11 // pred_check
          %p292 = pneg %p226
        $region34: #{tpu_custom_call.1} parent=11 // pred_check_branch
          %294 = sbr.rel (%p292) target = $region36
        $region35: #{tpu_custom_call.1} parent=11 // pred_region
          _
        $region36: #{tpu_custom_call.1} parent=11 // pred_fallthru
          _
      $region12: #{tpu_custom_call.1} parent=5 // pred_fallthru
        _
      %p295 = scmp.lt.s32.totalorder %s22, 2
      // Predicated region
      $region37: #{tpu_custom_call.1} parent=5 // pred_check
        %p296 = pneg %p295
      $region38: #{tpu_custom_call.1} parent=5 // pred_check_branch
        %298 = sbr.rel (%p296) target = $region40
      $region39: #{tpu_custom_call.1} parent=5 // pred_region
        // Predicated region
        $region41: #{tpu_custom_call.1} parent=39 // pred_check
          %p299 = pneg %p42
        $region42: #{tpu_custom_call.1} parent=39 // pred_check_branch
          %301 = sbr.rel (%p299) target = $region44
        $region43: #{tpu_custom_call.1} parent=39 // pred_region
          %p302 = scmp.lt.s32.totalorder %s22, 1
          %s303 = scalar_select %p302, %s22, 1
          %s304 = smul.addr %s303, 2
          %s305 = smul.addr %s304, 8
          %s306 = scalar_lea.vmem %s0, %s305
        $region44: #{tpu_custom_call.1} parent=39 // pred_fallthru
          _
        // Predicated region
        $region45: #{tpu_custom_call.1} parent=39 // pred_check
          %p307 = pneg %p68
        $region46: #{tpu_custom_call.1} parent=39 // pred_check_branch
          %309 = sbr.rel (%p307) target = $region48
        $region47: #{tpu_custom_call.1} parent=39 // pred_region
          %p310 = scmp.lt.s32.totalorder %s22, 1
          %s311 = scalar_select %p310, %s22, 1
          %s312 = smul.addr %s311, 2
          %s313 = smul.addr %s312, 8
          %s314 = scalar_lea.vmem %s1, %s313
        $region48: #{tpu_custom_call.1} parent=39 // pred_fallthru
          _
        // Predicated region
        $region49: #{tpu_custom_call.1} parent=39 // pred_check
          %p315 = pneg %p94
        $region50: #{tpu_custom_call.1} parent=39 // pred_check_branch
          %317 = sbr.rel (%p315) target = $region52
        $region51: #{tpu_custom_call.1} parent=39 // pred_region
          %s318 = sand.u32 %s84, 1
          %s319 = scalar_lea.sflag [#allocation3], %s318
          %s320 = sand.u32 %s84, 1
          %s321 = smul.addr %s320, 256
          %s322 = scalar_lea.vmem [#allocation2], %s321
          %s324 = ssub.s32 4096, 4096
          %325 = vsyncadd %s319, %s324
          %s326 = smul.addr %s22, 32
          %s327 = smul.addr %s326, 128
          %s328 = scalar_lea.hbm %s2, %s327
          %s329 = sshll.u32 %s322, 4
          %s330 = int_to_ptr.vmem [resolvable:$true] %s329
          %335 = dma.hbm_to_vmem [thread:$0]  %s328, 4096, %s330, %s319, 128, 128, 8
        $region52: #{tpu_custom_call.1} parent=39 // pred_fallthru
          _
      $region40: #{tpu_custom_call.1} parent=5 // pred_fallthru
        _
      %p336 = scmp.le.s32.totalorder 1, %s22
      %p337 = scmp.lt.s32.totalorder %s22, 3
      %p338 = pnand %p336, %p337
      %p339 = pneg %p338
      // Predicated region
      $region53: #{tpu_custom_call.1} parent=5 // pred_check
        _
      $region54: #{tpu_custom_call.1} parent=5 // pred_check_branch
        %341 = sbr.rel (%p338) target = $region56
      $region55: #{tpu_custom_call.1} parent=5 // pred_region
        %s342 = ssub.s32 %s22, 1
        %s343 = sand.u32 %s87, 1
        %s344 = scalar_lea.sflag [#allocation3], %s343
        %s345 = sand.u32 %s87, 1
        %s346 = smul.addr %s345, 256
        %s347 = scalar_lea.vmem [#allocation2], %s346
        // Predicated region
        $region57: #{tpu_custom_call.1} parent=55 // pred_check
          %p348 = pneg %p100
        $region58: #{tpu_custom_call.1} parent=55 // pred_check_branch
          %350 = sbr.rel (%p348) target = $region60
        $region59: #{tpu_custom_call.1} parent=55 // pred_region
          %351 = dma.done %s344, 4096
        $region60: #{tpu_custom_call.1} parent=55 // pred_fallthru
          _
        // Predicated region
        $region61: #{tpu_custom_call.1} parent=55 // pred_check
          %p352 = pneg %p184
        $region62: #{tpu_custom_call.1} parent=55 // pred_check_branch
          %354 = sbr.rel (%p352) target = $region64
        $region63: #{tpu_custom_call.1} parent=55 // pred_region
          %355 = dma.done [#allocation6], 512
        $region64: #{tpu_custom_call.1} parent=55 // pred_fallthru
          _
        %p356 = scmp.lt.s32.totalorder %s27, 1
        %s357 = scalar_select %p356, %s27, 1
        %s358 = smul.addr %s357, 2
        %s359 = smul.addr %s358, 8
        %s360 = scalar_lea.vmem %s0, %s359
        %p361 = pneg %p48
        %p362 = pneg %p45
        %p363 = scmp.lt.s32.totalorder %s27, 1
        %s364 = scalar_select %p363, %s27, 1
        %s365 = smul.addr %s364, 2
        %s366 = smul.addr %s365, 8
        %s367 = scalar_lea.vmem %s1, %s366
        %p368 = pneg %p74
        %p369 = pneg %p71
        %s370 = sand.u32 %s87, 1
        %s371 = scalar_lea.sflag [#allocation3], %s370
        %s372 = sand.u32 %s87, 1
        %s373 = smul.addr %s372, 256
        %s374 = scalar_lea.vmem [#allocation2], %s373
        %p375 = pneg %p100
        %p376 = pneg %p97
        %p377 = pneg %p121
        %p378 = pneg %p118
        %p379 = pneg %p142
        %p380 = pneg %p139
        %p381 = pneg %p163
        %p382 = pneg %p160
        %p383 = pneg %p184
        %p384 = pneg %p181
        %p385 = pneg %p205
        %p386 = pneg %p202
        %p387 = pneg %p226
        %p388 = pneg %p223
        %p389 = pneg %p252
        %p390 = pneg %p249
        %s391 = sand.u32 %s239, 1
        %s392 = scalar_lea.sflag [#allocation4], %s391
        %s393 = sand.u32 %s239, 1
        %s394 = smul.addr %s393, 16
        %s395 = scalar_lea.vmem [#allocation7], %s394
        %p396 = scmp.lt.s32.totalorder %s27, 1
        %s397 = scalar_select %p396, %s27, 1
        %s398 = smul.addr %s397, 2
        %s399 = smul.addr %s398, 8
        %s400 = scalar_lea.vmem %s0, %s399
        %p401 = scmp.lt.s32.totalorder %s27, 1
        %s402 = scalar_select %p401, %s27, 1
        %s403 = smul.addr %s402, 2
        %s404 = smul.addr %s403, 8
        %s405 = scalar_lea.vmem %s1, %s404
        %v406 = vld [vmem:[%s400] sm:$0xff]
        %v407 = vld [vmem:[%s400 + $0x8] sm:$0xff]
        %v408 = vld [vmem:[%s405] sm:$0xff]
        %v409 = vld [vmem:[%s405 + $0x8] sm:$0xff]
        %v410 = vld [vmem:[%s347] sm:$0xff]
        %v411 = vld [vmem:[%s347 + $0x8] sm:$0xff]
        %v412 = vld [vmem:[%s347 + $0x10] sm:$0xff]
        %v413 = vld [vmem:[%s347 + $0x18] sm:$0xff]
        %v414 = vld [vmem:[%s347 + $0x20] sm:$0xff]
        %v415 = vld [vmem:[%s347 + $0x28] sm:$0xff]
        %v416 = vld [vmem:[%s347 + $0x30] sm:$0xff]
        %v417 = vld [vmem:[%s347 + $0x38] sm:$0xff]
        %v418 = vld [vmem:[%s347 + $0x40] sm:$0xff]
        %v419 = vld [vmem:[%s347 + $0x48] sm:$0xff]
        %v420 = vld [vmem:[%s347 + $0x50] sm:$0xff]
        %v421 = vld [vmem:[%s347 + $0x58] sm:$0xff]
        %v422 = vld [vmem:[%s347 + $0x60] sm:$0xff]
        %v423 = vld [vmem:[%s347 + $0x68] sm:$0xff]
        %v424 = vld [vmem:[%s347 + $0x70] sm:$0xff]
        %v425 = vld [vmem:[%s347 + $0x78] sm:$0xff]
        %v426 = vld [vmem:[%s347 + $0x80] sm:$0xff]
        %v427 = vld [vmem:[%s347 + $0x88] sm:$0xff]
        %v428 = vld [vmem:[%s347 + $0x90] sm:$0xff]
        %v429 = vld [vmem:[%s347 + $0x98] sm:$0xff]
        %v430 = vld [vmem:[%s347 + $0xa0] sm:$0xff]
        %v431 = vld [vmem:[%s347 + $0xa8] sm:$0xff]
        %v432 = vld [vmem:[%s347 + $0xb0] sm:$0xff]
        %v433 = vld [vmem:[%s347 + $0xb8] sm:$0xff]
        %v434 = vld [vmem:[%s347 + $0xc0] sm:$0xff]
        %v435 = vld [vmem:[%s347 + $0xc8] sm:$0xff]
        %v436 = vld [vmem:[%s347 + $0xd0] sm:$0xff]
        %v437 = vld [vmem:[%s347 + $0xd8] sm:$0xff]
        %v438 = vld [vmem:[%s347 + $0xe0] sm:$0xff]
        %v439 = vld [vmem:[%s347 + $0xe8] sm:$0xff]
        %v440 = vld [vmem:[%s347 + $0xf0] sm:$0xff]
        %v441 = vld [vmem:[%s347 + $0xf8] sm:$0xff]
        %vm442 = vcmp.gt.f32.partialorder %v408, 0.0
        %vm443 = vcmp.gt.f32.partialorder %v409, 0.0
        %v444 = vsel %vm442, 0.0, -1e+09
        %v445 = vsel %vm443, 0.0, -1e+09
        %v446 = vld [vmem:[%s3] sm:$0xff]
        %v447 = vld [vmem:[%s3 + $0x8] sm:$0xff]
        %v448 = vld [vmem:[%s3 + $0x10] sm:$0xff]
        %v449 = vld [vmem:[%s3 + $0x18] sm:$0xff]
        %v450 = vld [vmem:[%s4] sm:$0x1]
        %v451 = vld [vmem:[%s5] sm:$0xff]
        %v452 = vld [vmem:[%s5 + $0x8] sm:$0xff]
        %v453 = vld [vmem:[%s5 + $0x10] sm:$0xff]
        %v454 = vld [vmem:[%s5 + $0x18] sm:$0xff]
        %v456 = vlaneseq
        %v457 = vshrl.u32 %v456, 7
        %v458 = vsub.s32 0, %v457
        %v459 = vrot.slane %v450, %v458
        %vm461 = vcmask 261120
        %v463 = vsel %vm461, %v406, 0
        %v466 = vsel %vm461, %v407, 0
        %468 = vmatprep.subr.mxu0 0.0
        %469 = vmatpush1.msra.mxu0 %v446
        %470 = vmatprep.subr.mxu0 0.0
        %471 = vmatpush1.msra.mxu0 %v447
        %472 = vmatprep.subr.mxu0 0.0
        %473 = vmatpush1.msra.mxu0 %v448
        %474 = vmatprep.subr.mxu0 0.0
        %475 = vmatpush1.msra.mxu0 %v449
        %476 = vmatprep.subr.mxu0 0.0
        %477 = vmatpush1.msra.mxu0 0.0
        %478 = vmatprep.subr.mxu0 0.0
        %479 = vmatpush1.msra.mxu0 0.0
        %480 = vmatprep.subr.mxu0 0.0
        %481 = vmatpush1.msra.mxu0 0.0
        %482 = vmatprep.subr.mxu0 0.0
        %483 = vmatpush1.msra.mxu0 0.0
        %484 = vmatprep.subr.mxu0 0.0
        %485 = vmatpush1.msra.mxu0 0.0
        %486 = vmatprep.subr.mxu0 0.0
        %487 = vmatpush1.msra.mxu0 0.0
        %488 = vmatprep.subr.mxu0 0.0
        %489 = vmatpush1.msra.mxu0 0.0
        %490 = vmatprep.subr.mxu0 0.0
        %491 = vmatpush1.msra.mxu0 0.0
        %492 = vmatprep.subr.mxu0 0.0
        %493 = vmatpush1.msra.mxu0 0.0
        %494 = vmatprep.subr.mxu0 0.0
        %495 = vmatpush1.msra.mxu0 0.0
        %496 = vmatprep.subr.mxu0 0.0
        %497 = vmatpush1.msra.mxu0 0.0
        %498 = vmatprep.subr.mxu0 0.0
        %499 = vmatpush1.msra.mxu0 0.0
        %500 = vmatprep.subr.mxu0 0.0
        %501 = vmatpush1.msra.mxu0 0.0
        %502 = vmatprep.subr.mxu0 0.0
        %503 = vmatpush1.msra.mxu0 0.0
        %504 = vmatprep.subr.mxu0 0.0
        %505 = vmatpush1.msra.mxu0 0.0
        %506 = vmatprep.subr.mxu0 0.0
        %507 = vmatpush1.msra.mxu0 0.0
        %508 = vmatprep.subr.mxu0 0.0
        %509 = vmatpush1.msra.mxu0 0.0
        %510 = vmatprep.subr.mxu0 0.0
        %511 = vmatpush1.msra.mxu0 0.0
        %512 = vmatprep.subr.mxu0 0.0
        %513 = vmatpush1.msra.mxu0 0.0
        %514 = vmatprep.subr.mxu0 0.0
        %515 = vmatpush1.msra.mxu0 0.0
        %516 = vmatprep.subr.mxu0 0.0
        %517 = vmatpush1.msra.mxu0 0.0
        %518 = vmatprep.subr.mxu0 0.0
        %519 = vmatpush1.msra.mxu0 0.0
        %520 = vmatprep.subr.mxu0 0.0
        %521 = vmatpush1.msra.mxu0 0.0
        %522 = vmatprep.subr.mxu0 0.0
        %523 = vmatpush1.msra.mxu0 0.0
        %524 = vmatprep.subr.mxu0 0.0
        %525 = vmatpush1.msra.mxu0 0.0
        %526 = vmatprep.subr.mxu0 0.0
        %527 = vmatpush1.msra.mxu0 0.0
        %528 = vmatprep.subr.mxu0 0.0
        %529 = vmatpush1.msra.mxu0 0.0
        %530 = vmatprep.subr.mxu0 0.0
        %531 = vmatpush1.msra.mxu0 0.0
        %532 = vmatprep.mubr.f32.mxu0 0.0
        %533 = vmatmul.mubr.f32.gmra.mrb[0].mxu0 %v463
        %v534 = vpop.f32.mrb[0].mxu0
        %v535 = vadd.f32 %v459, %v534
        %v536 = vpop.f32.mrb[0].mxu0
        %537 = vmatprep.mubr.f32.mxu0 0.0
        %538 = vmatmul.mubr.f32.gmra.mrb[0].mxu0 %v466
        %v539 = vpop.f32.mrb[0].mxu0
        %v540 = vadd.f32 %v459, %v539
        %v541 = vpop.f32.mrb[0].mxu0
        %542 = vdwg.mxu0
        %v544 = vsel %vm461, %v535, 0
        %v547 = vsel %vm461, %v540, 0
        %549 = vmatprep.subr.mxu0 0.0
        %550 = vmatpush1.msra.mxu0 %v451
        %551 = vmatprep.subr.mxu0 0.0
        %552 = vmatpush1.msra.mxu0 %v452
        %553 = vmatprep.subr.mxu0 0.0
        %554 = vmatpush1.msra.mxu0 %v453
        %555 = vmatprep.subr.mxu0 0.0
        %556 = vmatpush1.msra.mxu0 %v454
        %557 = vmatprep.subr.mxu0 0.0
        %558 = vmatpush1.msra.mxu0 0.0
        %559 = vmatprep.subr.mxu0 0.0
        %560 = vmatpush1.msra.mxu0 0.0
        %561 = vmatprep.subr.mxu0 0.0
        %562 = vmatpush1.msra.mxu0 0.0
        %563 = vmatprep.subr.mxu0 0.0
        %564 = vmatpush1.msra.mxu0 0.0
        %565 = vmatprep.subr.mxu0 0.0
        %566 = vmatpush1.msra.mxu0 0.0
        %567 = vmatprep.subr.mxu0 0.0
        %568 = vmatpush1.msra.mxu0 0.0
        %569 = vmatprep.subr.mxu0 0.0
        %570 = vmatpush1.msra.mxu0 0.0
        %571 = vmatprep.subr.mxu0 0.0
        %572 = vmatpush1.msra.mxu0 0.0
        %573 = vmatprep.subr.mxu0 0.0
        %574 = vmatpush1.msra.mxu0 0.0
        %575 = vmatprep.subr.mxu0 0.0
        %576 = vmatpush1.msra.mxu0 0.0
        %577 = vmatprep.subr.mxu0 0.0
        %578 = vmatpush1.msra.mxu0 0.0
        %579 = vmatprep.subr.mxu0 0.0
        %580 = vmatpush1.msra.mxu0 0.0
        %581 = vmatprep.subr.mxu0 0.0
        %582 = vmatpush1.msra.mxu0 0.0
        %583 = vmatprep.subr.mxu0 0.0
        %584 = vmatpush1.msra.mxu0 0.0
        %585 = vmatprep.subr.mxu0 0.0
        %586 = vmatpush1.msra.mxu0 0.0
        %587 = vmatprep.subr.mxu0 0.0
        %588 = vmatpush1.msra.mxu0 0.0
        %589 = vmatprep.subr.mxu0 0.0
        %590 = vmatpush1.msra.mxu0 0.0
        %591 = vmatprep.subr.mxu0 0.0
        %592 = vmatpush1.msra.mxu0 0.0
        %593 = vmatprep.subr.mxu0 0.0
        %594 = vmatpush1.msra.mxu0 0.0
        %595 = vmatprep.subr.mxu0 0.0
        %596 = vmatpush1.msra.mxu0 0.0
        %597 = vmatprep.subr.mxu0 0.0
        %598 = vmatpush1.msra.mxu0 0.0
        %599 = vmatprep.subr.mxu0 0.0
        %600 = vmatpush1.msra.mxu0 0.0
        %601 = vmatprep.subr.mxu0 0.0
        %602 = vmatpush1.msra.mxu0 0.0
        %603 = vmatprep.subr.mxu0 0.0
        %604 = vmatpush1.msra.mxu0 0.0
        %605 = vmatprep.subr.mxu0 0.0
        %606 = vmatpush1.msra.mxu0 0.0
        %607 = vmatprep.subr.mxu0 0.0
        %608 = vmatpush1.msra.mxu0 0.0
        %609 = vmatprep.subr.mxu0 0.0
        %610 = vmatpush1.msra.mxu0 0.0
        %611 = vmatprep.subr.mxu0 0.0
        %612 = vmatpush1.msra.mxu0 0.0
        %613 = vmatprep.mubr.f32.mxu0 0.0
        %614 = vmatmul.mubr.f32.gmra.mrb[0].mxu0 %v544
        %v615 = vpop.f32.mrb[0].mxu0
        %v616 = vadd.f32 0.0, %v615
        %v617 = vpop.f32.mrb[0].mxu0
        %618 = vmatprep.mubr.f32.mxu0 0.0
        %619 = vmatmul.mubr.f32.gmra.mrb[0].mxu0 %v547
        %v620 = vpop.f32.mrb[0].mxu0
        %v621 = vadd.f32 0.0, %v620
        %v622 = vpop.f32.mrb[0].mxu0
        %623 = vdwg.mxu0
        %v626 = vcombine.high %v616, %v616
        %v628 = vunpack.c.l.s4 1966171168
        %v629 = vunpack.c.0.s8 %v628
        %v630 = vlaneseq
        %v631 = vshrl.u32 %v630, 7
        %v632 = vsub.s32 %v629, %v631
        %v633 = vrot.slane %v616, %v632
        %v635 = vunpack.c.l.s4 1966171168
        %v636 = vunpack.c.0.s8 %v635
        %v637 = vlaneseq
        %v638 = vshrl.u32 %v637, 7
        %v639 = vsub.s32 %v636, %v638
        %v640 = vrot.slane %v626, %v639
        %v641 = vcombine.high %v633, %v633
        %v642 = vcombine.high %v640, %v640
        %v644 = vunpack.c.l.s4 1966171168
        %v645 = vunpack.c.0.s8 %v644
        %v646 = vlaneseq
        %v647 = vshrl.u32 %v646, 7
        %v648 = vsub.s32 %v645, %v647
        %v649 = vrot.slane %v633, %v648
        %v651 = vunpack.c.l.s4 1966171168
        %v652 = vunpack.c.0.s8 %v651
        %v653 = vlaneseq
        %v654 = vshrl.u32 %v653, 7
        %v655 = vsub.s32 %v652, %v654
        %v656 = vrot.slane %v640, %v655
        %v658 = vunpack.c.l.s4 1966171168
        %v659 = vunpack.c.0.s8 %v658
        %v660 = vlaneseq
        %v661 = vshrl.u32 %v660, 7
        %v662 = vsub.s32 %v659, %v661
        %v663 = vrot.slane %v641, %v662
        %v665 = vunpack.c.l.s4 1966171168
        %v666 = vunpack.c.0.s8 %v665
        %v667 = vlaneseq
        %v668 = vshrl.u32 %v667, 7
        %v669 = vsub.s32 %v666, %v668
        %v670 = vrot.slane %v642, %v669
        %v671 = vcombine.high %v649, %v649
        %v672 = vcombine.high %v656, %v656
        %v673 = vcombine.high %v663, %v663
        %v674 = vcombine.high %v670, %v670
        %v675 = vcombine.high %v621, %v621
        %v677 = vunpack.c.l.s4 1966171168
        %v678 = vunpack.c.0.s8 %v677
        %v679 = vlaneseq
        %v680 = vshrl.u32 %v679, 7
        %v681 = vsub.s32 %v678, %v680
        %v682 = vrot.slane %v621, %v681
        %v684 = vunpack.c.l.s4 1966171168
        %v685 = vunpack.c.0.s8 %v684
        %v686 = vlaneseq
        %v687 = vshrl.u32 %v686, 7
        %v688 = vsub.s32 %v685, %v687
        %v689 = vrot.slane %v675, %v688
        %v690 = vcombine.high %v682, %v682
        %v691 = vcombine.high %v689, %v689
        %v693 = vunpack.c.l.s4 1966171168
        %v694 = vunpack.c.0.s8 %v693
        %v695 = vlaneseq
        %v696 = vshrl.u32 %v695, 7
        %v697 = vsub.s32 %v694, %v696
        %v698 = vrot.slane %v682, %v697
        %v700 = vunpack.c.l.s4 1966171168
        %v701 = vunpack.c.0.s8 %v700
        %v702 = vlaneseq
        %v703 = vshrl.u32 %v702, 7
        %v704 = vsub.s32 %v701, %v703
        %v705 = vrot.slane %v689, %v704
        %v707 = vunpack.c.l.s4 1966171168
        %v708 = vunpack.c.0.s8 %v707
        %v709 = vlaneseq
        %v710 = vshrl.u32 %v709, 7
        %v711 = vsub.s32 %v708, %v710
        %v712 = vrot.slane %v690, %v711
        %v714 = vunpack.c.l.s4 1966171168
        %v715 = vunpack.c.0.s8 %v714
        %v716 = vlaneseq
        %v717 = vshrl.u32 %v716, 7
        %v718 = vsub.s32 %v715, %v717
        %v719 = vrot.slane %v691, %v718
        %v720 = vcombine.high %v698, %v698
        %v721 = vcombine.high %v705, %v705
        %v722 = vcombine.high %v712, %v712
        %v723 = vcombine.high %v719, %v719
        %v724 = vlaneseq
        %v725 = vshrl.u32 %v724, 7
        %v726 = vsub.s32 0, %v725
        %v727 = vrot.slane %v649, %v726
        %v728 = vlaneseq
        %v729 = vshrl.u32 %v728, 7
        %v730 = vsub.s32 0, %v729
        %v731 = vrot.slane %v663, %v730
        %v732 = vlaneseq
        %v733 = vshrl.u32 %v732, 7
        %v734 = vsub.s32 0, %v733
        %v735 = vrot.slane %v671, %v734
        %v736 = vlaneseq
        %v737 = vshrl.u32 %v736, 7
        %v738 = vsub.s32 0, %v737
        %v739 = vrot.slane %v673, %v738
        %v740 = vlaneseq
        %v741 = vshrl.u32 %v740, 7
        %v742 = vsub.s32 0, %v741
        %v743 = vrot.slane %v656, %v742
        %v744 = vlaneseq
        %v745 = vshrl.u32 %v744, 7
        %v746 = vsub.s32 0, %v745
        %v747 = vrot.slane %v670, %v746
        %v748 = vlaneseq
        %v749 = vshrl.u32 %v748, 7
        %v750 = vsub.s32 0, %v749
        %v751 = vrot.slane %v672, %v750
        %v752 = vlaneseq
        %v753 = vshrl.u32 %v752, 7
        %v754 = vsub.s32 0, %v753
        %v755 = vrot.slane %v674, %v754
        %v756 = vlaneseq
        %v757 = vshrl.u32 %v756, 7
        %v758 = vsub.s32 0, %v757
        %v759 = vrot.slane %v698, %v758
        %v760 = vlaneseq
        %v761 = vshrl.u32 %v760, 7
        %v762 = vsub.s32 0, %v761
        %v763 = vrot.slane %v712, %v762
        %v764 = vlaneseq
        %v765 = vshrl.u32 %v764, 7
        %v766 = vsub.s32 0, %v765
        %v767 = vrot.slane %v720, %v766
        %v768 = vlaneseq
        %v769 = vshrl.u32 %v768, 7
        %v770 = vsub.s32 0, %v769
        %v771 = vrot.slane %v722, %v770
        %v772 = vlaneseq
        %v773 = vshrl.u32 %v772, 7
        %v774 = vsub.s32 0, %v773
        %v775 = vrot.slane %v705, %v774
        %v776 = vlaneseq
        %v777 = vshrl.u32 %v776, 7
        %v778 = vsub.s32 0, %v777
        %v779 = vrot.slane %v719, %v778
        %v780 = vlaneseq
        %v781 = vshrl.u32 %v780, 7
        %v782 = vsub.s32 0, %v781
        %v783 = vrot.slane %v721, %v782
        %v784 = vlaneseq
        %v785 = vshrl.u32 %v784, 7
        %v786 = vsub.s32 0, %v785
        %v787 = vrot.slane %v723, %v786
        %v804 = vmul.f32 %v410, %v727
        %v805 = vmul.f32 %v411, %v727
        %v806 = vmul.f32 %v412, %v731
        %v807 = vmul.f32 %v413, %v731
        %v808 = vmul.f32 %v414, %v735
        %v809 = vmul.f32 %v415, %v735
        %v810 = vmul.f32 %v416, %v739
        %v811 = vmul.f32 %v417, %v739
        %v812 = vmul.f32 %v418, %v743
        %v813 = vmul.f32 %v419, %v743
        %v814 = vmul.f32 %v420, %v747
        %v815 = vmul.f32 %v421, %v747
        %v816 = vmul.f32 %v422, %v751
        %v817 = vmul.f32 %v423, %v751
        %v818 = vmul.f32 %v424, %v755
        %v819 = vmul.f32 %v425, %v755
        %v820 = vmul.f32 %v426, %v759
        %v821 = vmul.f32 %v427, %v759
        %v822 = vmul.f32 %v428, %v763
        %v823 = vmul.f32 %v429, %v763
        %v824 = vmul.f32 %v430, %v767
        %v825 = vmul.f32 %v431, %v767
        %v826 = vmul.f32 %v432, %v771
        %v827 = vmul.f32 %v433, %v771
        %v828 = vmul.f32 %v434, %v775
        %v829 = vmul.f32 %v435, %v775
        %v830 = vmul.f32 %v436, %v779
        %v831 = vmul.f32 %v437, %v779
        %v832 = vmul.f32 %v438, %v783
        %v833 = vmul.f32 %v439, %v783
        %v834 = vmul.f32 %v440, %v787
        %v835 = vmul.f32 %v441, %v787
        %vm836 = vcmask 130048
        %v837 = vsel %vm836, %v804, 0.0
        %838 = vadd.xlane.f32.xlu0 %v837
        %v839 = vpop.xlane.xlu0 %838
        %v840 = vsel %vm836, %v805, 0.0
        %841 = vadd.xlane.f32.xlu0 %v840
        %v842 = vpop.xlane.xlu0 %841
        %v843 = vsel %vm836, %v806, 0.0
        %844 = vadd.xlane.f32.xlu0 %v843
        %v845 = vpop.xlane.xlu0 %844
        %v846 = vsel %vm836, %v807, 0.0
        %847 = vadd.xlane.f32.xlu0 %v846
        %v848 = vpop.xlane.xlu0 %847
        %v849 = vsel %vm836, %v808, 0.0
        %850 = vadd.xlane.f32.xlu0 %v849
        %v851 = vpop.xlane.xlu0 %850
        %v852 = vsel %vm836, %v809, 0.0
        %853 = vadd.xlane.f32.xlu0 %v852
        %v854 = vpop.xlane.xlu0 %853
        %v855 = vsel %vm836, %v810, 0.0
        %856 = vadd.xlane.f32.xlu0 %v855
        %v857 = vpop.xlane.xlu0 %856
        %v858 = vsel %vm836, %v811, 0.0
        %859 = vadd.xlane.f32.xlu0 %v858
        %v860 = vpop.xlane.xlu0 %859
        %v861 = vsel %vm836, %v812, 0.0
        %862 = vadd.xlane.f32.xlu0 %v861
        %v863 = vpop.xlane.xlu0 %862
        %v864 = vsel %vm836, %v813, 0.0
        %865 = vadd.xlane.f32.xlu0 %v864
        %v866 = vpop.xlane.xlu0 %865
        %v867 = vsel %vm836, %v814, 0.0
        %868 = vadd.xlane.f32.xlu0 %v867
        %v869 = vpop.xlane.xlu0 %868
        %v870 = vsel %vm836, %v815, 0.0
        %871 = vadd.xlane.f32.xlu0 %v870
        %v872 = vpop.xlane.xlu0 %871
        %v873 = vsel %vm836, %v816, 0.0
        %874 = vadd.xlane.f32.xlu0 %v873
        %v875 = vpop.xlane.xlu0 %874
        %v876 = vsel %vm836, %v817, 0.0
        %877 = vadd.xlane.f32.xlu0 %v876
        %v878 = vpop.xlane.xlu0 %877
        %v879 = vsel %vm836, %v818, 0.0
        %880 = vadd.xlane.f32.xlu0 %v879
        %v881 = vpop.xlane.xlu0 %880
        %v882 = vsel %vm836, %v819, 0.0
        %883 = vadd.xlane.f32.xlu0 %v882
        %v884 = vpop.xlane.xlu0 %883
        %v885 = vsel %vm836, %v820, 0.0
        %886 = vadd.xlane.f32.xlu0 %v885
        %v887 = vpop.xlane.xlu0 %886
        %v888 = vsel %vm836, %v821, 0.0
        %889 = vadd.xlane.f32.xlu0 %v888
        %v890 = vpop.xlane.xlu0 %889
        %v891 = vsel %vm836, %v822, 0.0
        %892 = vadd.xlane.f32.xlu0 %v891
        %v893 = vpop.xlane.xlu0 %892
        %v894 = vsel %vm836, %v823, 0.0
        %895 = vadd.xlane.f32.xlu0 %v894
        %v896 = vpop.xlane.xlu0 %895
        %v897 = vsel %vm836, %v824, 0.0
        %898 = vadd.xlane.f32.xlu0 %v897
        %v899 = vpop.xlane.xlu0 %898
        %v900 = vsel %vm836, %v825, 0.0
        %901 = vadd.xlane.f32.xlu0 %v900
        %v902 = vpop.xlane.xlu0 %901
        %v903 = vsel %vm836, %v826, 0.0
        %904 = vadd.xlane.f32.xlu0 %v903
        %v905 = vpop.xlane.xlu0 %904
        %v906 = vsel %vm836, %v827, 0.0
        %907 = vadd.xlane.f32.xlu0 %v906
        %v908 = vpop.xlane.xlu0 %907
        %v909 = vsel %vm836, %v828, 0.0
        %910 = vadd.xlane.f32.xlu0 %v909
        %v911 = vpop.xlane.xlu0 %910
        %v912 = vsel %vm836, %v829, 0.0
        %913 = vadd.xlane.f32.xlu0 %v912
        %v914 = vpop.xlane.xlu0 %913
        %v915 = vsel %vm836, %v830, 0.0
        %916 = vadd.xlane.f32.xlu0 %v915
        %v917 = vpop.xlane.xlu0 %916
        %v918 = vsel %vm836, %v831, 0.0
        %919 = vadd.xlane.f32.xlu0 %v918
        %v920 = vpop.xlane.xlu0 %919
        %v921 = vsel %vm836, %v832, 0.0
        %922 = vadd.xlane.f32.xlu0 %v921
        %v923 = vpop.xlane.xlu0 %922
        %v924 = vsel %vm836, %v833, 0.0
        %925 = vadd.xlane.f32.xlu0 %v924
        %v926 = vpop.xlane.xlu0 %925
        %v927 = vsel %vm836, %v834, 0.0
        %928 = vadd.xlane.f32.xlu0 %v927
        %v929 = vpop.xlane.xlu0 %928
        %v930 = vsel %vm836, %v835, 0.0
        %931 = vadd.xlane.f32.xlu0 %v930
        %v932 = vpop.xlane.xlu0 %931
        %933 = vrot.lane.b32.xlu0 %v535, 96
        %v934 = vpop.permute.xlu0 %933
        %935 = vrot.lane.b32.xlu0 %v540, 96
        %v936 = vpop.permute.xlu0 %935
        %v969 = vlaneseq
        %v970 = vand.u32 %v969, 127
        %v971 = vlaneseq
        %v972 = vshrl.u32 %v971, 7
        %v973 = vsub.s32 %v970, %v972
        %v974 = vrot.slane %v839, %v973
        %v975 = vadd.s32 %v970, 4294967288
        %v976 = vlaneseq
        %v977 = vshrl.u32 %v976, 7
        %v978 = vsub.s32 %v975, %v977
        %v979 = vrot.slane %v842, %v978
        %vm980 = vcmask 130112
        %v981 = vsel %vm980, %v979, %v974
        %v982 = vlaneseq
        %v983 = vshrl.u32 %v982, 7
        %v984 = vsub.s32 %v970, %v983
        %v985 = vrot.slane %v845, %v984
        %v986 = vlaneseq
        %v987 = vshrl.u32 %v986, 7
        %v988 = vsub.s32 %v975, %v987
        %v989 = vrot.slane %v848, %v988
        %v990 = vsel %vm980, %v989, %v985
        %v991 = vlaneseq
        %v992 = vshrl.u32 %v991, 7
        %v993 = vsub.s32 %v970, %v992
        %v994 = vrot.slane %v851, %v993
        %v995 = vlaneseq
        %v996 = vshrl.u32 %v995, 7
        %v997 = vsub.s32 %v975, %v996
        %v998 = vrot.slane %v854, %v997
        %v999 = vsel %vm980, %v998, %v994
        %v1000 = vlaneseq
        %v1001 = vshrl.u32 %v1000, 7
        %v1002 = vsub.s32 %v970, %v1001
        %v1003 = vrot.slane %v857, %v1002
        %v1004 = vlaneseq
        %v1005 = vshrl.u32 %v1004, 7
        %v1006 = vsub.s32 %v975, %v1005
        %v1007 = vrot.slane %v860, %v1006
        %v1008 = vsel %vm980, %v1007, %v1003
        %v1009 = vlaneseq
        %v1010 = vshrl.u32 %v1009, 7
        %v1011 = vsub.s32 %v970, %v1010
        %v1012 = vrot.slane %v863, %v1011
        %v1013 = vlaneseq
        %v1014 = vshrl.u32 %v1013, 7
        %v1015 = vsub.s32 %v975, %v1014
        %v1016 = vrot.slane %v866, %v1015
        %v1017 = vsel %vm980, %v1016, %v1012
        %v1018 = vlaneseq
        %v1019 = vshrl.u32 %v1018, 7
        %v1020 = vsub.s32 %v970, %v1019
        %v1021 = vrot.slane %v869, %v1020
        %v1022 = vlaneseq
        %v1023 = vshrl.u32 %v1022, 7
        %v1024 = vsub.s32 %v975, %v1023
        %v1025 = vrot.slane %v872, %v1024
        %v1026 = vsel %vm980, %v1025, %v1021
        %v1027 = vlaneseq
        %v1028 = vshrl.u32 %v1027, 7
        %v1029 = vsub.s32 %v970, %v1028
        %v1030 = vrot.slane %v875, %v1029
        %v1031 = vlaneseq
        %v1032 = vshrl.u32 %v1031, 7
        %v1033 = vsub.s32 %v975, %v1032
        %v1034 = vrot.slane %v878, %v1033
        %v1035 = vsel %vm980, %v1034, %v1030
        %v1036 = vlaneseq
        %v1037 = vshrl.u32 %v1036, 7
        %v1038 = vsub.s32 %v970, %v1037
        %v1039 = vrot.slane %v881, %v1038
        %v1040 = vlaneseq
        %v1041 = vshrl.u32 %v1040, 7
        %v1042 = vsub.s32 %v975, %v1041
        %v1043 = vrot.slane %v884, %v1042
        %v1044 = vsel %vm980, %v1043, %v1039
        %v1045 = vlaneseq
        %v1046 = vshrl.u32 %v1045, 7
        %v1047 = vsub.s32 %v970, %v1046
        %v1048 = vrot.slane %v887, %v1047
        %v1049 = vlaneseq
        %v1050 = vshrl.u32 %v1049, 7
        %v1051 = vsub.s32 %v975, %v1050
        %v1052 = vrot.slane %v890, %v1051
        %v1053 = vsel %vm980, %v1052, %v1048
        %v1054 = vlaneseq
        %v1055 = vshrl.u32 %v1054, 7
        %v1056 = vsub.s32 %v970, %v1055
        %v1057 = vrot.slane %v893, %v1056
        %v1058 = vlaneseq
        %v1059 = vshrl.u32 %v1058, 7
        %v1060 = vsub.s32 %v975, %v1059
        %v1061 = vrot.slane %v896, %v1060
        %v1062 = vsel %vm980, %v1061, %v1057
        %v1063 = vlaneseq
        %v1064 = vshrl.u32 %v1063, 7
        %v1065 = vsub.s32 %v970, %v1064
        %v1066 = vrot.slane %v899, %v1065
        %v1067 = vlaneseq
        %v1068 = vshrl.u32 %v1067, 7
        %v1069 = vsub.s32 %v975, %v1068
        %v1070 = vrot.slane %v902, %v1069
        %v1071 = vsel %vm980, %v1070, %v1066
        %v1072 = vlaneseq
        %v1073 = vshrl.u32 %v1072, 7
        %v1074 = vsub.s32 %v970, %v1073
        %v1075 = vrot.slane %v905, %v1074
        %v1076 = vlaneseq
        %v1077 = vshrl.u32 %v1076, 7
        %v1078 = vsub.s32 %v975, %v1077
        %v1079 = vrot.slane %v908, %v1078
        %v1080 = vsel %vm980, %v1079, %v1075
        %v1081 = vlaneseq
        %v1082 = vshrl.u32 %v1081, 7
        %v1083 = vsub.s32 %v970, %v1082
        %v1084 = vrot.slane %v911, %v1083
        %v1085 = vlaneseq
        %v1086 = vshrl.u32 %v1085, 7
        %v1087 = vsub.s32 %v975, %v1086
        %v1088 = vrot.slane %v914, %v1087
        %v1089 = vsel %vm980, %v1088, %v1084
        %v1090 = vlaneseq
        %v1091 = vshrl.u32 %v1090, 7
        %v1092 = vsub.s32 %v970, %v1091
        %v1093 = vrot.slane %v917, %v1092
        %v1094 = vlaneseq
        %v1095 = vshrl.u32 %v1094, 7
        %v1096 = vsub.s32 %v975, %v1095
        %v1097 = vrot.slane %v920, %v1096
        %v1098 = vsel %vm980, %v1097, %v1093
        %v1099 = vlaneseq
        %v1100 = vshrl.u32 %v1099, 7
        %v1101 = vsub.s32 %v970, %v1100
        %v1102 = vrot.slane %v923, %v1101
        %v1103 = vlaneseq
        %v1104 = vshrl.u32 %v1103, 7
        %v1105 = vsub.s32 %v975, %v1104
        %v1106 = vrot.slane %v926, %v1105
        %v1107 = vsel %vm980, %v1106, %v1102
        %v1108 = vlaneseq
        %v1109 = vshrl.u32 %v1108, 7
        %v1110 = vsub.s32 %v970, %v1109
        %v1111 = vrot.slane %v929, %v1110
        %v1112 = vlaneseq
        %v1113 = vshrl.u32 %v1112, 7
        %v1114 = vsub.s32 %v975, %v1113
        %v1115 = vrot.slane %v932, %v1114
        %v1116 = vsel %vm980, %v1115, %v1111
        %vm1117 = vcmask 1041409
        %v1118 = vsel %vm1117, %v990, %v981
        %vm1119 = vcmask 1042434
        %v1120 = vsel %vm1119, %v999, %v1118
        %vm1121 = vcmask 1043459
        %v1122 = vsel %vm1121, %v1008, %v1120
        %vm1123 = vcmask 1044484
        %v1124 = vsel %vm1123, %v1017, %v1122
        %vm1125 = vcmask 1045509
        %v1126 = vsel %vm1125, %v1026, %v1124
        %vm1127 = vcmask 1046534
        %v1128 = vsel %vm1127, %v1035, %v1126
        %vm1129 = vcmask 1047559
        %v1130 = vsel %vm1129, %v1044, %v1128
        %v1131 = vsel %vm1117, %v1062, %v1053
        %v1132 = vsel %vm1119, %v1071, %v1131
        %v1133 = vsel %vm1121, %v1080, %v1132
        %v1134 = vsel %vm1123, %v1089, %v1133
        %v1135 = vsel %vm1125, %v1098, %v1134
        %v1136 = vsel %vm1127, %v1107, %v1135
        %v1137 = vsel %vm1129, %v1116, %v1136
        %v1140 = vsel %vm461, %v934, 0
        %v1142 = vsel %vm461, %v936, 0
        %1144 = vmatprep.subr.mxu0 0.0
        %1145 = vmatpush1.xpose.msra.mxu0 %v1140
        %1146 = vmatprep.subr.mxu0 0.0
        %1147 = vmatpush1.xpose.msra.mxu0 %v1142
        %1148 = vmatprep.subr.mxu0 0.0
        %1149 = vmatpush1.xpose.msra.mxu0 0.0
        %1150 = vmatprep.subr.mxu0 0.0
        %1151 = vmatpush1.xpose.msra.mxu0 0.0
        %1152 = vmatprep.subr.mxu0 0.0
        %1153 = vmatpush1.xpose.msra.mxu0 0.0
        %1154 = vmatprep.subr.mxu0 0.0
        %1155 = vmatpush1.xpose.msra.mxu0 0.0
        %1156 = vmatprep.subr.mxu0 0.0
        %1157 = vmatpush1.xpose.msra.mxu0 0.0
        %1158 = vmatprep.subr.mxu0 0.0
        %1159 = vmatpush1.xpose.msra.mxu0 0.0
        %1160 = vmatprep.subr.mxu0 0.0
        %1161 = vmatpush1.xpose.msra.mxu0 0.0
        %1162 = vmatprep.subr.mxu0 0.0
        %1163 = vmatpush1.xpose.msra.mxu0 0.0
        %1164 = vmatprep.subr.mxu0 0.0
        %1165 = vmatpush1.xpose.msra.mxu0 0.0
        %1166 = vmatprep.subr.mxu0 0.0
        %1167 = vmatpush1.xpose.msra.mxu0 0.0
        %1168 = vmatprep.subr.mxu0 0.0
        %1169 = vmatpush1.xpose.msra.mxu0 0.0
        %1170 = vmatprep.subr.mxu0 0.0
        %1171 = vmatpush1.xpose.msra.mxu0 0.0
        %1172 = vmatprep.subr.mxu0 0.0
        %1173 = vmatpush1.xpose.msra.mxu0 0.0
        %1174 = vmatprep.subr.mxu0 0.0
        %1175 = vmatpush1.xpose.msra.mxu0 0.0
        %1176 = vmatprep.subr.mxu0 0.0
        %1177 = vmatpush1.xpose.msra.mxu0 0.0
        %1178 = vmatprep.subr.mxu0 0.0
        %1179 = vmatpush1.xpose.msra.mxu0 0.0
        %1180 = vmatprep.subr.mxu0 0.0
        %1181 = vmatpush1.xpose.msra.mxu0 0.0
        %1182 = vmatprep.subr.mxu0 0.0
        %1183 = vmatpush1.xpose.msra.mxu0 0.0
        %1184 = vmatprep.subr.mxu0 0.0
        %1185 = vmatpush1.xpose.msra.mxu0 0.0
        %1186 = vmatprep.subr.mxu0 0.0
        %1187 = vmatpush1.xpose.msra.mxu0 0.0
        %1188 = vmatprep.subr.mxu0 0.0
        %1189 = vmatpush1.xpose.msra.mxu0 0.0
        %1190 = vmatprep.subr.mxu0 0.0
        %1191 = vmatpush1.xpose.msra.mxu0 0.0
        %1192 = vmatprep.subr.mxu0 0.0
        %1193 = vmatpush1.xpose.msra.mxu0 0.0
        %1194 = vmatprep.subr.mxu0 0.0
        %1195 = vmatpush1.xpose.msra.mxu0 0.0
        %1196 = vmatprep.subr.mxu0 0.0
        %1197 = vmatpush1.xpose.msra.mxu0 0.0
        %1198 = vmatprep.subr.mxu0 0.0
        %1199 = vmatpush1.xpose.msra.mxu0 0.0
        %1200 = vmatprep.subr.mxu0 0.0
        %1201 = vmatpush1.xpose.msra.mxu0 0.0
        %1202 = vmatprep.subr.mxu0 0.0
        %1203 = vmatpush1.xpose.msra.mxu0 0.0
        %1204 = vmatprep.subr.mxu0 0.0
        %1205 = vmatpush1.xpose.msra.mxu0 0.0
        %1206 = vmatprep.subr.mxu0 0.0
        %1207 = vmatpush1.xpose.msra.mxu0 0.0
        %1208 = vmatprep.mubr.f32.mxu0 0.0
        %1209 = vmatmul.mubr.f32.gmra.mrb[0].mxu0 %v544
        %v1210 = vpop.f32.mrb[0].mxu0
        %v1211 = vadd.f32 %v1130, %v1210
        %v1212 = vpop.f32.mrb[0].mxu0
        %1213 = vmatprep.mubr.f32.mxu0 0.0
        %1214 = vmatmul.mubr.f32.gmra.mrb[0].mxu0 %v547
        %v1215 = vpop.f32.mrb[0].mxu0
        %v1216 = vadd.f32 %v1137, %v1215
        %v1217 = vpop.f32.mrb[0].mxu0
        %1218 = vdwg.mxu0
        %v1219 = vmul.f32 %v1211, 0.17677669
        %v1220 = vmul.f32 %v1216, 0.17677669
        %v1221 = vadd.f32 %v1219, %v444
        %v1222 = vadd.f32 %v1220, %v445
        %v1223 = vsel %vm836, %v1221, -inf
        %1224 = vmax.xlane.f32.xlu0 %v1223
        %v1225 = vpop.xlane.xlu0 %1224
        %v1226 = vsel %vm836, %v1222, -inf
        %1227 = vmax.xlane.f32.xlu0 %v1226
        %v1228 = vpop.xlane.xlu0 %1227
        %v1229 = vsub.f32 %v1221, %v1225
        %v1230 = vsub.f32 %v1222, %v1228
        %v1231 = vmul.f32 %v1229, 1.442695
        %v1232 = vpow.pop %v1231
        %v1233 = vmul.f32 %v1230, 1.442695
        %v1234 = vpow.pop %v1233
        %v1235 = vmul.f32 %v1232, %v408
        %v1236 = vmul.f32 %v1234, %v409
        %v1237 = vsel %vm836, %v1235, 0.0
        %1238 = vadd.xlane.f32.xlu0 %v1237
        %v1239 = vpop.xlane.xlu0 %1238
        %v1240 = vsel %vm836, %v1236, 0.0
        %1241 = vadd.xlane.f32.xlu0 %v1240
        %v1242 = vpop.xlane.xlu0 %1241
        %vm1243 = vcmp.gt.f32.partialorder %v1239, 0.0
        %vm1244 = vcmp.gt.f32.partialorder %v1242, 0.0
        %v1245 = vrcp.pop %v1239
        %v1246 = vrcp.pop %v1242
        %v1247 = vsel %vm1243, %v1245, 0.0
        %v1248 = vsel %vm1244, %v1246, 0.0
        %v1249 = vmul.f32 %v1235, %v1247
        %v1250 = vmul.f32 %v1236, %v1248
        %v1251 = vlaneseq
        %v1252 = vshrl.u32 %v1251, 7
        %v1253 = vsub.s32 0, %v1252
        %v1254 = vrot.slane %v1249, %v1253
        %1256 = vbcast.lane.b32.xlu0 %v1254, 256
        %v1257 = vpop.permute.xlu0 %1256
        %s1259 = sor.u32 256, 8
        %1260 = vbcast.lane.b32.xlu0 %v1254, %s1259
        %v1261 = vpop.permute.xlu0 %1260
        %v1262 = vlaneseq
        %v1263 = vshrl.u32 %v1262, 7
        %v1264 = vsub.s32 1, %v1263
        %v1265 = vrot.slane %v1249, %v1264
        %1267 = vbcast.lane.b32.xlu0 %v1265, 256
        %v1268 = vpop.permute.xlu0 %1267
        %s1270 = sor.u32 256, 8
        %1271 = vbcast.lane.b32.xlu0 %v1265, %s1270
        %v1272 = vpop.permute.xlu0 %1271
        %v1273 = vlaneseq
        %v1274 = vshrl.u32 %v1273, 7
        %v1275 = vsub.s32 2, %v1274
        %v1276 = vrot.slane %v1249, %v1275
        %1278 = vbcast.lane.b32.xlu0 %v1276, 256
        %v1279 = vpop.permute.xlu0 %1278
        %s1281 = sor.u32 256, 8
        %1282 = vbcast.lane.b32.xlu0 %v1276, %s1281
        %v1283 = vpop.permute.xlu0 %1282
        %v1284 = vlaneseq
        %v1285 = vshrl.u32 %v1284, 7
        %v1286 = vsub.s32 3, %v1285
        %v1287 = vrot.slane %v1249, %v1286
        %1289 = vbcast.lane.b32.xlu0 %v1287, 256
        %v1290 = vpop.permute.xlu0 %1289
        %s1292 = sor.u32 256, 8
        %1293 = vbcast.lane.b32.xlu0 %v1287, %s1292
        %v1294 = vpop.permute.xlu0 %1293
        %v1295 = vlaneseq
        %v1296 = vshrl.u32 %v1295, 7
        %v1297 = vsub.s32 4, %v1296
        %v1298 = vrot.slane %v1249, %v1297
        %1300 = vbcast.lane.b32.xlu0 %v1298, 256
        %v1301 = vpop.permute.xlu0 %1300
        %s1303 = sor.u32 256, 8
        %1304 = vbcast.lane.b32.xlu0 %v1298, %s1303
        %v1305 = vpop.permute.xlu0 %1304
        %v1306 = vlaneseq
        %v1307 = vshrl.u32 %v1306, 7
        %v1308 = vsub.s32 5, %v1307
        %v1309 = vrot.slane %v1249, %v1308
        %1311 = vbcast.lane.b32.xlu0 %v1309, 256
        %v1312 = vpop.permute.xlu0 %1311
        %s1314 = sor.u32 256, 8
        %1315 = vbcast.lane.b32.xlu0 %v1309, %s1314
        %v1316 = vpop.permute.xlu0 %1315
        %v1317 = vlaneseq
        %v1318 = vshrl.u32 %v1317, 7
        %v1319 = vsub.s32 6, %v1318
        %v1320 = vrot.slane %v1249, %v1319
        %1322 = vbcast.lane.b32.xlu0 %v1320, 256
        %v1323 = vpop.permute.xlu0 %1322
        %s1325 = sor.u32 256, 8
        %1326 = vbcast.lane.b32.xlu0 %v1320, %s1325
        %v1327 = vpop.permute.xlu0 %1326
        %v1328 = vlaneseq
        %v1329 = vshrl.u32 %v1328, 7
        %v1330 = vsub.s32 7, %v1329
        %v1331 = vrot.slane %v1249, %v1330
        %1333 = vbcast.lane.b32.xlu0 %v1331, 256
        %v1334 = vpop.permute.xlu0 %1333
        %s1336 = sor.u32 256, 8
        %1337 = vbcast.lane.b32.xlu0 %v1331, %s1336
        %v1338 = vpop.permute.xlu0 %1337
        %v1339 = vlaneseq
        %v1340 = vshrl.u32 %v1339, 7
        %v1341 = vsub.s32 0, %v1340
        %v1342 = vrot.slane %v1250, %v1341
        %1344 = vbcast.lane.b32.xlu0 %v1342, 256
        %v1345 = vpop.permute.xlu0 %1344
        %s1347 = sor.u32 256, 8
        %1348 = vbcast.lane.b32.xlu0 %v1342, %s1347
        %v1349 = vpop.permute.xlu0 %1348
        %v1350 = vlaneseq
        %v1351 = vshrl.u32 %v1350, 7
        %v1352 = vsub.s32 1, %v1351
        %v1353 = vrot.slane %v1250, %v1352
        %1355 = vbcast.lane.b32.xlu0 %v1353, 256
        %v1356 = vpop.permute.xlu0 %1355
        %s1358 = sor.u32 256, 8
        %1359 = vbcast.lane.b32.xlu0 %v1353, %s1358
        %v1360 = vpop.permute.xlu0 %1359
        %v1361 = vlaneseq
        %v1362 = vshrl.u32 %v1361, 7
        %v1363 = vsub.s32 2, %v1362
        %v1364 = vrot.slane %v1250, %v1363
        %1366 = vbcast.lane.b32.xlu0 %v1364, 256
        %v1367 = vpop.permute.xlu0 %1366
        %s1369 = sor.u32 256, 8
        %1370 = vbcast.lane.b32.xlu0 %v1364, %s1369
        %v1371 = vpop.permute.xlu0 %1370
        %v1372 = vlaneseq
        %v1373 = vshrl.u32 %v1372, 7
        %v1374 = vsub.s32 3, %v1373
        %v1375 = vrot.slane %v1250, %v1374
        %1377 = vbcast.lane.b32.xlu0 %v1375, 256
        %v1378 = vpop.permute.xlu0 %1377
        %s1380 = sor.u32 256, 8
        %1381 = vbcast.lane.b32.xlu0 %v1375, %s1380
        %v1382 = vpop.permute.xlu0 %1381
        %v1383 = vlaneseq
        %v1384 = vshrl.u32 %v1383, 7
        %v1385 = vsub.s32 4, %v1384
        %v1386 = vrot.slane %v1250, %v1385
        %1388 = vbcast.lane.b32.xlu0 %v1386, 256
        %v1389 = vpop.permute.xlu0 %1388
        %s1391 = sor.u32 256, 8
        %1392 = vbcast.lane.b32.xlu0 %v1386, %s1391
        %v1393 = vpop.permute.xlu0 %1392
        %v1394 = vlaneseq
        %v1395 = vshrl.u32 %v1394, 7
        %v1396 = vsub.s32 5, %v1395
        %v1397 = vrot.slane %v1250, %v1396
        %1399 = vbcast.lane.b32.xlu0 %v1397, 256
        %v1400 = vpop.permute.xlu0 %1399
        %s1402 = sor.u32 256, 8
        %1403 = vbcast.lane.b32.xlu0 %v1397, %s1402
        %v1404 = vpop.permute.xlu0 %1403
        %v1405 = vlaneseq
        %v1406 = vshrl.u32 %v1405, 7
        %v1407 = vsub.s32 6, %v1406
        %v1408 = vrot.slane %v1250, %v1407
        %1410 = vbcast.lane.b32.xlu0 %v1408, 256
        %v1411 = vpop.permute.xlu0 %1410
        %s1413 = sor.u32 256, 8
        %1414 = vbcast.lane.b32.xlu0 %v1408, %s1413
        %v1415 = vpop.permute.xlu0 %1414
        %v1416 = vlaneseq
        %v1417 = vshrl.u32 %v1416, 7
        %v1418 = vsub.s32 7, %v1417
        %v1419 = vrot.slane %v1250, %v1418
        %1421 = vbcast.lane.b32.xlu0 %v1419, 256
        %v1422 = vpop.permute.xlu0 %1421
        %s1424 = sor.u32 256, 8
        %1425 = vbcast.lane.b32.xlu0 %v1419, %s1424
        %v1426 = vpop.permute.xlu0 %1425
        %v1427 = vmul.f32 %v1257, %v410
        %v1428 = vmul.f32 %v1261, %v411
        %v1429 = vmul.f32 %v1268, %v412
        %v1430 = vmul.f32 %v1272, %v413
        %v1431 = vmul.f32 %v1279, %v414
        %v1432 = vmul.f32 %v1283, %v415
        %v1433 = vmul.f32 %v1290, %v416
        %v1434 = vmul.f32 %v1294, %v417
        %v1435 = vmul.f32 %v1301, %v418
        %v1436 = vmul.f32 %v1305, %v419
        %v1437 = vmul.f32 %v1312, %v420
        %v1438 = vmul.f32 %v1316, %v421
        %v1439 = vmul.f32 %v1323, %v422
        %v1440 = vmul.f32 %v1327, %v423
        %v1441 = vmul.f32 %v1334, %v424
        %v1442 = vmul.f32 %v1338, %v425
        %v1443 = vmul.f32 %v1345, %v426
        %v1444 = vmul.f32 %v1349, %v427
        %v1445 = vmul.f32 %v1356, %v428
        %v1446 = vmul.f32 %v1360, %v429
        %v1447 = vmul.f32 %v1367, %v430
        %v1448 = vmul.f32 %v1371, %v431
        %v1449 = vmul.f32 %v1378, %v432
        %v1450 = vmul.f32 %v1382, %v433
        %v1451 = vmul.f32 %v1389, %v434
        %v1452 = vmul.f32 %v1393, %v435
        %v1453 = vmul.f32 %v1400, %v436
        %v1454 = vmul.f32 %v1404, %v437
        %v1455 = vmul.f32 %v1411, %v438
        %v1456 = vmul.f32 %v1415, %v439
        %v1457 = vmul.f32 %v1422, %v440
        %v1458 = vmul.f32 %v1426, %v441
        %v1459 = vsel %vm836, %v1427, 0.0
        %v1460 = vsel %vm836, %v1428, 0.0
        %v1461 = vadd.f32 %v1459, %v1460
        %v1462 = vrot.slane %v1461, 4
        %v1463 = vadd.f32 %v1461, %v1462
        %v1464 = vrot.slane %v1463, 2
        %v1465 = vadd.f32 %v1463, %v1464
        %v1466 = vrot.slane %v1465, 1
        %v1467 = vadd.f32 %v1465, %v1466
        %v1468 = vsel %vm836, %v1429, 0.0
        %v1469 = vsel %vm836, %v1430, 0.0
        %v1470 = vadd.f32 %v1468, %v1469
        %v1471 = vrot.slane %v1470, 4
        %v1472 = vadd.f32 %v1470, %v1471
        %v1473 = vrot.slane %v1472, 2
        %v1474 = vadd.f32 %v1472, %v1473
        %v1475 = vrot.slane %v1474, 1
        %v1476 = vadd.f32 %v1474, %v1475
        %v1477 = vsel %vm836, %v1431, 0.0
        %v1478 = vsel %vm836, %v1432, 0.0
        %v1479 = vadd.f32 %v1477, %v1478
        %v1480 = vrot.slane %v1479, 4
        %v1481 = vadd.f32 %v1479, %v1480
        %v1482 = vrot.slane %v1481, 2
        %v1483 = vadd.f32 %v1481, %v1482
        %v1484 = vrot.slane %v1483, 1
        %v1485 = vadd.f32 %v1483, %v1484
        %v1486 = vsel %vm836, %v1433, 0.0
        %v1487 = vsel %vm836, %v1434, 0.0
        %v1488 = vadd.f32 %v1486, %v1487
        %v1489 = vrot.slane %v1488, 4
        %v1490 = vadd.f32 %v1488, %v1489
        %v1491 = vrot.slane %v1490, 2
        %v1492 = vadd.f32 %v1490, %v1491
        %v1493 = vrot.slane %v1492, 1
        %v1494 = vadd.f32 %v1492, %v1493
        %v1495 = vsel %vm836, %v1435, 0.0
        %v1496 = vsel %vm836, %v1436, 0.0
        %v1497 = vadd.f32 %v1495, %v1496
        %v1498 = vrot.slane %v1497, 4
        %v1499 = vadd.f32 %v1497, %v1498
        %v1500 = vrot.slane %v1499, 2
        %v1501 = vadd.f32 %v1499, %v1500
        %v1502 = vrot.slane %v1501, 1
        %v1503 = vadd.f32 %v1501, %v1502
        %v1504 = vsel %vm836, %v1437, 0.0
        %v1505 = vsel %vm836, %v1438, 0.0
        %v1506 = vadd.f32 %v1504, %v1505
        %v1507 = vrot.slane %v1506, 4
        %v1508 = vadd.f32 %v1506, %v1507
        %v1509 = vrot.slane %v1508, 2
        %v1510 = vadd.f32 %v1508, %v1509
        %v1511 = vrot.slane %v1510, 1
        %v1512 = vadd.f32 %v1510, %v1511
        %v1513 = vsel %vm836, %v1439, 0.0
        %v1514 = vsel %vm836, %v1440, 0.0
        %v1515 = vadd.f32 %v1513, %v1514
        %v1516 = vrot.slane %v1515, 4
        %v1517 = vadd.f32 %v1515, %v1516
        %v1518 = vrot.slane %v1517, 2
        %v1519 = vadd.f32 %v1517, %v1518
        %v1520 = vrot.slane %v1519, 1
        %v1521 = vadd.f32 %v1519, %v1520
        %v1522 = vsel %vm836, %v1441, 0.0
        %v1523 = vsel %vm836, %v1442, 0.0
        %v1524 = vadd.f32 %v1522, %v1523
        %v1525 = vrot.slane %v1524, 4
        %v1526 = vadd.f32 %v1524, %v1525
        %v1527 = vrot.slane %v1526, 2
        %v1528 = vadd.f32 %v1526, %v1527
        %v1529 = vrot.slane %v1528, 1
        %v1530 = vadd.f32 %v1528, %v1529
        %v1531 = vsel %vm836, %v1443, 0.0
        %v1532 = vsel %vm836, %v1444, 0.0
        %v1533 = vadd.f32 %v1531, %v1532
        %v1534 = vrot.slane %v1533, 4
        %v1535 = vadd.f32 %v1533, %v1534
        %v1536 = vrot.slane %v1535, 2
        %v1537 = vadd.f32 %v1535, %v1536
        %v1538 = vrot.slane %v1537, 1
        %v1539 = vadd.f32 %v1537, %v1538
        %v1540 = vsel %vm836, %v1445, 0.0
        %v1541 = vsel %vm836, %v1446, 0.0
        %v1542 = vadd.f32 %v1540, %v1541
        %v1543 = vrot.slane %v1542, 4
        %v1544 = vadd.f32 %v1542, %v1543
        %v1545 = vrot.slane %v1544, 2
        %v1546 = vadd.f32 %v1544, %v1545
        %v1547 = vrot.slane %v1546, 1
        %v1548 = vadd.f32 %v1546, %v1547
        %v1549 = vsel %vm836, %v1447, 0.0
        %v1550 = vsel %vm836, %v1448, 0.0
        %v1551 = vadd.f32 %v1549, %v1550
        %v1552 = vrot.slane %v1551, 4
        %v1553 = vadd.f32 %v1551, %v1552
        %v1554 = vrot.slane %v1553, 2
        %v1555 = vadd.f32 %v1553, %v1554
        %v1556 = vrot.slane %v1555, 1
        %v1557 = vadd.f32 %v1555, %v1556
        %v1558 = vsel %vm836, %v1449, 0.0
        %v1559 = vsel %vm836, %v1450, 0.0
        %v1560 = vadd.f32 %v1558, %v1559
        %v1561 = vrot.slane %v1560, 4
        %v1562 = vadd.f32 %v1560, %v1561
        %v1563 = vrot.slane %v1562, 2
        %v1564 = vadd.f32 %v1562, %v1563
        %v1565 = vrot.slane %v1564, 1
        %v1566 = vadd.f32 %v1564, %v1565
        %v1567 = vsel %vm836, %v1451, 0.0
        %v1568 = vsel %vm836, %v1452, 0.0
        %v1569 = vadd.f32 %v1567, %v1568
        %v1570 = vrot.slane %v1569, 4
        %v1571 = vadd.f32 %v1569, %v1570
        %v1572 = vrot.slane %v1571, 2
        %v1573 = vadd.f32 %v1571, %v1572
        %v1574 = vrot.slane %v1573, 1
        %v1575 = vadd.f32 %v1573, %v1574
        %v1576 = vsel %vm836, %v1453, 0.0
        %v1577 = vsel %vm836, %v1454, 0.0
        %v1578 = vadd.f32 %v1576, %v1577
        %v1579 = vrot.slane %v1578, 4
        %v1580 = vadd.f32 %v1578, %v1579
        %v1581 = vrot.slane %v1580, 2
        %v1582 = vadd.f32 %v1580, %v1581
        %v1583 = vrot.slane %v1582, 1
        %v1584 = vadd.f32 %v1582, %v1583
        %v1585 = vsel %vm836, %v1455, 0.0
        %v1586 = vsel %vm836, %v1456, 0.0
        %v1587 = vadd.f32 %v1585, %v1586
        %v1588 = vrot.slane %v1587, 4
        %v1589 = vadd.f32 %v1587, %v1588
        %v1590 = vrot.slane %v1589, 2
        %v1591 = vadd.f32 %v1589, %v1590
        %v1592 = vrot.slane %v1591, 1
        %v1593 = vadd.f32 %v1591, %v1592
        %v1594 = vsel %vm836, %v1457, 0.0
        %v1595 = vsel %vm836, %v1458, 0.0
        %v1596 = vadd.f32 %v1594, %v1595
        %v1597 = vrot.slane %v1596, 4
        %v1598 = vadd.f32 %v1596, %v1597
        %v1599 = vrot.slane %v1598, 2
        %v1600 = vadd.f32 %v1598, %v1599
        %v1601 = vrot.slane %v1600, 1
        %v1602 = vadd.f32 %v1600, %v1601
        %v1619 = vsel %vm1117, %v1476, %v1467
        %v1620 = vsel %vm1119, %v1485, %v1619
        %v1621 = vsel %vm1121, %v1494, %v1620
        %v1622 = vsel %vm1123, %v1503, %v1621
        %v1623 = vsel %vm1125, %v1512, %v1622
        %v1624 = vsel %vm1127, %v1521, %v1623
        %v1625 = vsel %vm1129, %v1530, %v1624
        %v1626 = vsel %vm1117, %v1548, %v1539
        %v1627 = vsel %vm1119, %v1557, %v1626
        %v1628 = vsel %vm1121, %v1566, %v1627
        %v1629 = vsel %vm1123, %v1575, %v1628
        %v1630 = vsel %vm1125, %v1584, %v1629
        %v1631 = vsel %vm1127, %v1593, %v1630
        %v1632 = vsel %vm1129, %v1602, %v1631
        %v1633 = vsel %vm836, %v1625, 0
        %v1635 = vsel %vm836, %v1632, 0
        %v1638 = vsel %vm836, %v451, 0
        %v1641 = vsel %vm836, %v452, 0
        %v1644 = vsel %vm836, %v453, 0
        %v1647 = vsel %vm836, %v454, 0
        %1649 = vmatprep.subr.mxu0 0.0
        %1650 = vmatpush1.xpose.msra.mxu0 %v1638
        %1651 = vmatprep.subr.mxu0 0.0
        %1652 = vmatpush1.xpose.msra.mxu0 %v1641
        %1653 = vmatprep.subr.mxu0 0.0
        %1654 = vmatpush1.xpose.msra.mxu0 %v1644
        %1655 = vmatprep.subr.mxu0 0.0
        %1656 = vmatpush1.xpose.msra.mxu0 %v1647
        %1657 = vmatprep.subr.mxu0 0.0
        %1658 = vmatpush1.xpose.msra.mxu0 0.0
        %1659 = vmatprep.subr.mxu0 0.0
        %1660 = vmatpush1.xpose.msra.mxu0 0.0
        %1661 = vmatprep.subr.mxu0 0.0
        %1662 = vmatpush1.xpose.msra.mxu0 0.0
        %1663 = vmatprep.subr.mxu0 0.0
        %1664 = vmatpush1.xpose.msra.mxu0 0.0
        %1665 = vmatprep.subr.mxu0 0.0
        %1666 = vmatpush1.xpose.msra.mxu0 0.0
        %1667 = vmatprep.subr.mxu0 0.0
        %1668 = vmatpush1.xpose.msra.mxu0 0.0
        %1669 = vmatprep.subr.mxu0 0.0
        %1670 = vmatpush1.xpose.msra.mxu0 0.0
        %1671 = vmatprep.subr.mxu0 0.0
        %1672 = vmatpush1.xpose.msra.mxu0 0.0
        %1673 = vmatprep.subr.mxu0 0.0
        %1674 = vmatpush1.xpose.msra.mxu0 0.0
        %1675 = vmatprep.subr.mxu0 0.0
        %1676 = vmatpush1.xpose.msra.mxu0 0.0
        %1677 = vmatprep.subr.mxu0 0.0
        %1678 = vmatpush1.xpose.msra.mxu0 0.0
        %1679 = vmatprep.subr.mxu0 0.0
        %1680 = vmatpush1.xpose.msra.mxu0 0.0
        %1681 = vmatprep.subr.mxu0 0.0
        %1682 = vmatpush1.xpose.msra.mxu0 0.0
        %1683 = vmatprep.subr.mxu0 0.0
        %1684 = vmatpush1.xpose.msra.mxu0 0.0
        %1685 = vmatprep.subr.mxu0 0.0
        %1686 = vmatpush1.xpose.msra.mxu0 0.0
        %1687 = vmatprep.subr.mxu0 0.0
        %1688 = vmatpush1.xpose.msra.mxu0 0.0
        %1689 = vmatprep.subr.mxu0 0.0
        %1690 = vmatpush1.xpose.msra.mxu0 0.0
        %1691 = vmatprep.subr.mxu0 0.0
        %1692 = vmatpush1.xpose.msra.mxu0 0.0
        %1693 = vmatprep.subr.mxu0 0.0
        %1694 = vmatpush1.xpose.msra.mxu0 0.0
        %1695 = vmatprep.subr.mxu0 0.0
        %1696 = vmatpush1.xpose.msra.mxu0 0.0
        %1697 = vmatprep.subr.mxu0 0.0
        %1698 = vmatpush1.xpose.msra.mxu0 0.0
        %1699 = vmatprep.subr.mxu0 0.0
        %1700 = vmatpush1.xpose.msra.mxu0 0.0
        %1701 = vmatprep.subr.mxu0 0.0
        %1702 = vmatpush1.xpose.msra.mxu0 0.0
        %1703 = vmatprep.subr.mxu0 0.0
        %1704 = vmatpush1.xpose.msra.mxu0 0.0
        %1705 = vmatprep.subr.mxu0 0.0
        %1706 = vmatpush1.xpose.msra.mxu0 0.0
        %1707 = vmatprep.subr.mxu0 0.0
        %1708 = vmatpush1.xpose.msra.mxu0 0.0
        %1709 = vmatprep.subr.mxu0 0.0
        %1710 = vmatpush1.xpose.msra.mxu0 0.0
        %1711 = vmatprep.subr.mxu0 0.0
        %1712 = vmatpush1.xpose.msra.mxu0 0.0
        %1713 = vmatprep.mubr.f32.mxu0 0.0
        %1714 = vmatmul.mubr.f32.gmra.mrb[0].mxu0 %v1633
        %v1715 = vpop.f32.mrb[0].mxu0
        %v1716 = vadd.f32 0.0, %v1715
        %v1717 = vpop.f32.mrb[0].mxu0
        %1718 = vmatprep.mubr.f32.mxu0 0.0
        %1719 = vmatmul.mubr.f32.gmra.mrb[0].mxu0 %v1635
        %v1720 = vpop.f32.mrb[0].mxu0
        %v1721 = vadd.f32 0.0, %v1720
        %v1722 = vpop.f32.mrb[0].mxu0
        %1723 = vdwg.mxu0
        %1724 = vrot.lane.b32.xlu0 %v535, 64
        %v1725 = vpop.permute.xlu0 %1724
        %1726 = vrot.lane.b32.xlu0 %v540, 64
        %v1727 = vpop.permute.xlu0 %1726
        %v1731 = vsel %vm836, %v1249, 0
        %v1734 = vsel %vm836, %v1250, 0
        %1736 = vmatprep.subr.mxu0 0.0
        %1737 = vmatpush1.msra.mxu0 %v1725
        %1738 = vmatprep.subr.mxu0 0.0
        %1739 = vmatpush1.msra.mxu0 %v1727
        %1740 = vmatprep.subr.mxu0 0.0
        %1741 = vmatpush1.msra.mxu0 0.0
        %1742 = vmatprep.subr.mxu0 0.0
        %1743 = vmatpush1.msra.mxu0 0.0
        %1744 = vmatprep.subr.mxu0 0.0
        %1745 = vmatpush1.msra.mxu0 0.0
        %1746 = vmatprep.subr.mxu0 0.0
        %1747 = vmatpush1.msra.mxu0 0.0
        %1748 = vmatprep.subr.mxu0 0.0
        %1749 = vmatpush1.msra.mxu0 0.0
        %1750 = vmatprep.subr.mxu0 0.0
        %1751 = vmatpush1.msra.mxu0 0.0
        %1752 = vmatprep.subr.mxu0 0.0
        %1753 = vmatpush1.msra.mxu0 0.0
        %1754 = vmatprep.subr.mxu0 0.0
        %1755 = vmatpush1.msra.mxu0 0.0
        %1756 = vmatprep.subr.mxu0 0.0
        %1757 = vmatpush1.msra.mxu0 0.0
        %1758 = vmatprep.subr.mxu0 0.0
        %1759 = vmatpush1.msra.mxu0 0.0
        %1760 = vmatprep.subr.mxu0 0.0
        %1761 = vmatpush1.msra.mxu0 0.0
        %1762 = vmatprep.subr.mxu0 0.0
        %1763 = vmatpush1.msra.mxu0 0.0
        %1764 = vmatprep.subr.mxu0 0.0
        %1765 = vmatpush1.msra.mxu0 0.0
        %1766 = vmatprep.subr.mxu0 0.0
        %1767 = vmatpush1.msra.mxu0 0.0
        %1768 = vmatprep.subr.mxu0 0.0
        %1769 = vmatpush1.msra.mxu0 0.0
        %1770 = vmatprep.subr.mxu0 0.0
        %1771 = vmatpush1.msra.mxu0 0.0
        %1772 = vmatprep.subr.mxu0 0.0
        %1773 = vmatpush1.msra.mxu0 0.0
        %1774 = vmatprep.subr.mxu0 0.0
        %1775 = vmatpush1.msra.mxu0 0.0
        %1776 = vmatprep.subr.mxu0 0.0
        %1777 = vmatpush1.msra.mxu0 0.0
        %1778 = vmatprep.subr.mxu0 0.0
        %1779 = vmatpush1.msra.mxu0 0.0
        %1780 = vmatprep.subr.mxu0 0.0
        %1781 = vmatpush1.msra.mxu0 0.0
        %1782 = vmatprep.subr.mxu0 0.0
        %1783 = vmatpush1.msra.mxu0 0.0
        %1784 = vmatprep.subr.mxu0 0.0
        %1785 = vmatpush1.msra.mxu0 0.0
        %1786 = vmatprep.subr.mxu0 0.0
        %1787 = vmatpush1.msra.mxu0 0.0
        %1788 = vmatprep.subr.mxu0 0.0
        %1789 = vmatpush1.msra.mxu0 0.0
        %1790 = vmatprep.subr.mxu0 0.0
        %1791 = vmatpush1.msra.mxu0 0.0
        %1792 = vmatprep.subr.mxu0 0.0
        %1793 = vmatpush1.msra.mxu0 0.0
        %1794 = vmatprep.subr.mxu0 0.0
        %1795 = vmatpush1.msra.mxu0 0.0
        %1796 = vmatprep.subr.mxu0 0.0
        %1797 = vmatpush1.msra.mxu0 0.0
        %1798 = vmatprep.subr.mxu0 0.0
        %1799 = vmatpush1.msra.mxu0 0.0
        %1800 = vmatprep.mubr.f32.mxu0 0.0
        %1801 = vmatmul.mubr.f32.gmra.mrb[0].mxu0 %v1731
        %v1802 = vpop.f32.mrb[0].mxu0
        %v1803 = vadd.f32 %v1716, %v1802
        %v1804 = vpop.f32.mrb[0].mxu0
        %1805 = vmatprep.mubr.f32.mxu0 0.0
        %1806 = vmatmul.mubr.f32.gmra.mrb[0].mxu0 %v1734
        %v1807 = vpop.f32.mrb[0].mxu0
        %v1808 = vadd.f32 %v1721, %v1807
        %v1809 = vpop.f32.mrb[0].mxu0
        %1810 = vdwg.mxu0
        %1811 = vrot.lane.b32.xlu0 %v535, 32
        %v1812 = vpop.permute.xlu0 %1811
        %1813 = vrot.lane.b32.xlu0 %v540, 32
        %v1814 = vpop.permute.xlu0 %1813
        %v1817 = vadd.f32 %v1803, %v1812
        %v1818 = vadd.f32 %v1808, %v1814
        %v1819 = vmax.f32 %v1817, 0.0
        %v1820 = vmax.f32 %v1818, 0.0
        %v1821 = vld [vmem:[#allocation5] sm:$0xff]
        %v1822 = vld [vmem:[#allocation5 + $0x8] sm:$0xff]
        %v1823 = vld [vmem:[#allocation5 + $0x10] sm:$0xff]
        %v1824 = vld [vmem:[#allocation5 + $0x18] sm:$0xff]
        %v1825 = vld [vmem:[%s7] sm:$0x1]
        %v1826 = vld [vmem:[%s8] sm:$0xff]
        %v1827 = vld [vmem:[%s8 + $0x8] sm:$0xff]
        %v1828 = vld [vmem:[%s8 + $0x10] sm:$0xff]
        %v1829 = vld [vmem:[%s8 + $0x18] sm:$0xff]
        %v1831 = vlaneseq
        %v1832 = vshrl.u32 %v1831, 7
        %v1833 = vsub.s32 0, %v1832
        %v1834 = vrot.slane %v1825, %v1833
        %v1837 = vsel %vm461, %v1819, 0
        %v1840 = vsel %vm461, %v1820, 0
        %1842 = vmatprep.subr.mxu0 0.0
        %1843 = vmatpush1.msra.mxu0 %v1821
        %1844 = vmatprep.subr.mxu0 0.0
        %1845 = vmatpush1.msra.mxu0 %v1822
        %1846 = vmatprep.subr.mxu0 0.0
        %1847 = vmatpush1.msra.mxu0 %v1823
        %1848 = vmatprep.subr.mxu0 0.0
        %1849 = vmatpush1.msra.mxu0 %v1824
        %1850 = vmatprep.subr.mxu0 0.0
        %1851 = vmatpush1.msra.mxu0 0.0
        %1852 = vmatprep.subr.mxu0 0.0
        %1853 = vmatpush1.msra.mxu0 0.0
        %1854 = vmatprep.subr.mxu0 0.0
        %1855 = vmatpush1.msra.mxu0 0.0
        %1856 = vmatprep.subr.mxu0 0.0
        %1857 = vmatpush1.msra.mxu0 0.0
        %1858 = vmatprep.subr.mxu0 0.0
        %1859 = vmatpush1.msra.mxu0 0.0
        %1860 = vmatprep.subr.mxu0 0.0
        %1861 = vmatpush1.msra.mxu0 0.0
        %1862 = vmatprep.subr.mxu0 0.0
        %1863 = vmatpush1.msra.mxu0 0.0
        %1864 = vmatprep.subr.mxu0 0.0
        %1865 = vmatpush1.msra.mxu0 0.0
        %1866 = vmatprep.subr.mxu0 0.0
        %1867 = vmatpush1.msra.mxu0 0.0
        %1868 = vmatprep.subr.mxu0 0.0
        %1869 = vmatpush1.msra.mxu0 0.0
        %1870 = vmatprep.subr.mxu0 0.0
        %1871 = vmatpush1.msra.mxu0 0.0
        %1872 = vmatprep.subr.mxu0 0.0
        %1873 = vmatpush1.msra.mxu0 0.0
        %1874 = vmatprep.subr.mxu0 0.0
        %1875 = vmatpush1.msra.mxu0 0.0
        %1876 = vmatprep.subr.mxu0 0.0
        %1877 = vmatpush1.msra.mxu0 0.0
        %1878 = vmatprep.subr.mxu0 0.0
        %1879 = vmatpush1.msra.mxu0 0.0
        %1880 = vmatprep.subr.mxu0 0.0
        %1881 = vmatpush1.msra.mxu0 0.0
        %1882 = vmatprep.subr.mxu0 0.0
        %1883 = vmatpush1.msra.mxu0 0.0
        %1884 = vmatprep.subr.mxu0 0.0
        %1885 = vmatpush1.msra.mxu0 0.0
        %1886 = vmatprep.subr.mxu0 0.0
        %1887 = vmatpush1.msra.mxu0 0.0
        %1888 = vmatprep.subr.mxu0 0.0
        %1889 = vmatpush1.msra.mxu0 0.0
        %1890 = vmatprep.subr.mxu0 0.0
        %1891 = vmatpush1.msra.mxu0 0.0
        %1892 = vmatprep.subr.mxu0 0.0
        %1893 = vmatpush1.msra.mxu0 0.0
        %1894 = vmatprep.subr.mxu0 0.0
        %1895 = vmatpush1.msra.mxu0 0.0
        %1896 = vmatprep.subr.mxu0 0.0
        %1897 = vmatpush1.msra.mxu0 0.0
        %1898 = vmatprep.subr.mxu0 0.0
        %1899 = vmatpush1.msra.mxu0 0.0
        %1900 = vmatprep.subr.mxu0 0.0
        %1901 = vmatpush1.msra.mxu0 0.0
        %1902 = vmatprep.subr.mxu0 0.0
        %1903 = vmatpush1.msra.mxu0 0.0
        %1904 = vmatprep.subr.mxu0 0.0
        %1905 = vmatpush1.msra.mxu0 0.0
        %1906 = vmatprep.mubr.f32.mxu0 0.0
        %1907 = vmatmul.mubr.f32.gmra.mrb[0].mxu0 %v1837
        %v1908 = vpop.f32.mrb[0].mxu0
        %v1909 = vadd.f32 %v1834, %v1908
        %v1910 = vpop.f32.mrb[0].mxu0
        %1911 = vmatprep.mubr.f32.mxu0 0.0
        %1912 = vmatmul.mubr.f32.gmra.mrb[0].mxu0 %v1840
        %v1913 = vpop.f32.mrb[0].mxu0
        %v1914 = vadd.f32 %v1834, %v1913
        %v1915 = vpop.f32.mrb[0].mxu0
        %1916 = vdwg.mxu0
        %v1918 = vsel %vm461, %v1909, 0
        %v1921 = vsel %vm461, %v1914, 0
        %1923 = vmatprep.subr.mxu0 0.0
        %1924 = vmatpush1.msra.mxu0 %v1826
        %1925 = vmatprep.subr.mxu0 0.0
        %1926 = vmatpush1.msra.mxu0 %v1827
        %1927 = vmatprep.subr.mxu0 0.0
        %1928 = vmatpush1.msra.mxu0 %v1828
        %1929 = vmatprep.subr.mxu0 0.0
        %1930 = vmatpush1.msra.mxu0 %v1829
        %1931 = vmatprep.subr.mxu0 0.0
        %1932 = vmatpush1.msra.mxu0 0.0
        %1933 = vmatprep.subr.mxu0 0.0
        %1934 = vmatpush1.msra.mxu0 0.0
        %1935 = vmatprep.subr.mxu0 0.0
        %1936 = vmatpush1.msra.mxu0 0.0
        %1937 = vmatprep.subr.mxu0 0.0
        %1938 = vmatpush1.msra.mxu0 0.0
        %1939 = vmatprep.subr.mxu0 0.0
        %1940 = vmatpush1.msra.mxu0 0.0
        %1941 = vmatprep.subr.mxu0 0.0
        %1942 = vmatpush1.msra.mxu0 0.0
        %1943 = vmatprep.subr.mxu0 0.0
        %1944 = vmatpush1.msra.mxu0 0.0
        %1945 = vmatprep.subr.mxu0 0.0
        %1946 = vmatpush1.msra.mxu0 0.0
        %1947 = vmatprep.subr.mxu0 0.0
        %1948 = vmatpush1.msra.mxu0 0.0
        %1949 = vmatprep.subr.mxu0 0.0
        %1950 = vmatpush1.msra.mxu0 0.0
        %1951 = vmatprep.subr.mxu0 0.0
        %1952 = vmatpush1.msra.mxu0 0.0
        %1953 = vmatprep.subr.mxu0 0.0
        %1954 = vmatpush1.msra.mxu0 0.0
        %1955 = vmatprep.subr.mxu0 0.0
        %1956 = vmatpush1.msra.mxu0 0.0
        %1957 = vmatprep.subr.mxu0 0.0
        %1958 = vmatpush1.msra.mxu0 0.0
        %1959 = vmatprep.subr.mxu0 0.0
        %1960 = vmatpush1.msra.mxu0 0.0
        %1961 = vmatprep.subr.mxu0 0.0
        %1962 = vmatpush1.msra.mxu0 0.0
        %1963 = vmatprep.subr.mxu0 0.0
        %1964 = vmatpush1.msra.mxu0 0.0
        %1965 = vmatprep.subr.mxu0 0.0
        %1966 = vmatpush1.msra.mxu0 0.0
        %1967 = vmatprep.subr.mxu0 0.0
        %1968 = vmatpush1.msra.mxu0 0.0
        %1969 = vmatprep.subr.mxu0 0.0
        %1970 = vmatpush1.msra.mxu0 0.0
        %1971 = vmatprep.subr.mxu0 0.0
        %1972 = vmatpush1.msra.mxu0 0.0
        %1973 = vmatprep.subr.mxu0 0.0
        %1974 = vmatpush1.msra.mxu0 0.0
        %1975 = vmatprep.subr.mxu0 0.0
        %1976 = vmatpush1.msra.mxu0 0.0
        %1977 = vmatprep.subr.mxu0 0.0
        %1978 = vmatpush1.msra.mxu0 0.0
        %1979 = vmatprep.subr.mxu0 0.0
        %1980 = vmatpush1.msra.mxu0 0.0
        %1981 = vmatprep.subr.mxu0 0.0
        %1982 = vmatpush1.msra.mxu0 0.0
        %1983 = vmatprep.subr.mxu0 0.0
        %1984 = vmatpush1.msra.mxu0 0.0
        %1985 = vmatprep.subr.mxu0 0.0
        %1986 = vmatpush1.msra.mxu0 0.0
        %1987 = vmatprep.mubr.f32.mxu0 0.0
        %1988 = vmatmul.mubr.f32.gmra.mrb[0].mxu0 %v1918
        %v1989 = vpop.f32.mrb[0].mxu0
        %v1990 = vadd.f32 0.0, %v1989
        %v1991 = vpop.f32.mrb[0].mxu0
        %1992 = vmatprep.mubr.f32.mxu0 0.0
        %1993 = vmatmul.mubr.f32.gmra.mrb[0].mxu0 %v1921
        %v1994 = vpop.f32.mrb[0].mxu0
        %v1995 = vadd.f32 0.0, %v1994
        %v1996 = vpop.f32.mrb[0].mxu0
        %1997 = vdwg.mxu0
        %v2000 = vcombine.high %v1990, %v1990
        %v2002 = vunpack.c.l.s4 1966171168
        %v2003 = vunpack.c.0.s8 %v2002
        %v2004 = vlaneseq
        %v2005 = vshrl.u32 %v2004, 7
        %v2006 = vsub.s32 %v2003, %v2005
        %v2007 = vrot.slane %v1990, %v2006
        %v2009 = vunpack.c.l.s4 1966171168
        %v2010 = vunpack.c.0.s8 %v2009
        %v2011 = vlaneseq
        %v2012 = vshrl.u32 %v2011, 7
        %v2013 = vsub.s32 %v2010, %v2012
        %v2014 = vrot.slane %v2000, %v2013
        %v2015 = vcombine.high %v2007, %v2007
        %v2016 = vcombine.high %v2014, %v2014
        %v2018 = vunpack.c.l.s4 1966171168
        %v2019 = vunpack.c.0.s8 %v2018
        %v2020 = vlaneseq
        %v2021 = vshrl.u32 %v2020, 7
        %v2022 = vsub.s32 %v2019, %v2021
        %v2023 = vrot.slane %v2007, %v2022
        %v2025 = vunpack.c.l.s4 1966171168
        %v2026 = vunpack.c.0.s8 %v2025
        %v2027 = vlaneseq
        %v2028 = vshrl.u32 %v2027, 7
        %v2029 = vsub.s32 %v2026, %v2028
        %v2030 = vrot.slane %v2014, %v2029
        %v2032 = vunpack.c.l.s4 1966171168
        %v2033 = vunpack.c.0.s8 %v2032
        %v2034 = vlaneseq
        %v2035 = vshrl.u32 %v2034, 7
        %v2036 = vsub.s32 %v2033, %v2035
        %v2037 = vrot.slane %v2015, %v2036
        %v2039 = vunpack.c.l.s4 1966171168
        %v2040 = vunpack.c.0.s8 %v2039
        %v2041 = vlaneseq
        %v2042 = vshrl.u32 %v2041, 7
        %v2043 = vsub.s32 %v2040, %v2042
        %v2044 = vrot.slane %v2016, %v2043
        %v2045 = vcombine.high %v2023, %v2023
        %v2046 = vcombine.high %v2030, %v2030
        %v2047 = vcombine.high %v2037, %v2037
        %v2048 = vcombine.high %v2044, %v2044
        %v2049 = vcombine.high %v1995, %v1995
        %v2051 = vunpack.c.l.s4 1966171168
        %v2052 = vunpack.c.0.s8 %v2051
        %v2053 = vlaneseq
        %v2054 = vshrl.u32 %v2053, 7
        %v2055 = vsub.s32 %v2052, %v2054
        %v2056 = vrot.slane %v1995, %v2055
        %v2058 = vunpack.c.l.s4 1966171168
        %v2059 = vunpack.c.0.s8 %v2058
        %v2060 = vlaneseq
        %v2061 = vshrl.u32 %v2060, 7
        %v2062 = vsub.s32 %v2059, %v2061
        %v2063 = vrot.slane %v2049, %v2062
        %v2064 = vcombine.high %v2056, %v2056
        %v2065 = vcombine.high %v2063, %v2063
        %v2067 = vunpack.c.l.s4 1966171168
        %v2068 = vunpack.c.0.s8 %v2067
        %v2069 = vlaneseq
        %v2070 = vshrl.u32 %v2069, 7
        %v2071 = vsub.s32 %v2068, %v2070
        %v2072 = vrot.slane %v2056, %v2071
        %v2074 = vunpack.c.l.s4 1966171168
        %v2075 = vunpack.c.0.s8 %v2074
        %v2076 = vlaneseq
        %v2077 = vshrl.u32 %v2076, 7
        %v2078 = vsub.s32 %v2075, %v2077
        %v2079 = vrot.slane %v2063, %v2078
        %v2081 = vunpack.c.l.s4 1966171168
        %v2082 = vunpack.c.0.s8 %v2081
        %v2083 = vlaneseq
        %v2084 = vshrl.u32 %v2083, 7
        %v2085 = vsub.s32 %v2082, %v2084
        %v2086 = vrot.slane %v2064, %v2085
        %v2088 = vunpack.c.l.s4 1966171168
        %v2089 = vunpack.c.0.s8 %v2088
        %v2090 = vlaneseq
        %v2091 = vshrl.u32 %v2090, 7
        %v2092 = vsub.s32 %v2089, %v2091
        %v2093 = vrot.slane %v2065, %v2092
        %v2094 = vcombine.high %v2072, %v2072
        %v2095 = vcombine.high %v2079, %v2079
        %v2096 = vcombine.high %v2086, %v2086
        %v2097 = vcombine.high %v2093, %v2093
        %v2098 = vlaneseq
        %v2099 = vshrl.u32 %v2098, 7
        %v2100 = vsub.s32 0, %v2099
        %v2101 = vrot.slane %v2023, %v2100
        %v2102 = vlaneseq
        %v2103 = vshrl.u32 %v2102, 7
        %v2104 = vsub.s32 0, %v2103
        %v2105 = vrot.slane %v2037, %v2104
        %v2106 = vlaneseq
        %v2107 = vshrl.u32 %v2106, 7
        %v2108 = vsub.s32 0, %v2107
        %v2109 = vrot.slane %v2045, %v2108
        %v2110 = vlaneseq
        %v2111 = vshrl.u32 %v2110, 7
        %v2112 = vsub.s32 0, %v2111
        %v2113 = vrot.slane %v2047, %v2112
        %v2114 = vlaneseq
        %v2115 = vshrl.u32 %v2114, 7
        %v2116 = vsub.s32 0, %v2115
        %v2117 = vrot.slane %v2030, %v2116
        %v2118 = vlaneseq
        %v2119 = vshrl.u32 %v2118, 7
        %v2120 = vsub.s32 0, %v2119
        %v2121 = vrot.slane %v2044, %v2120
        %v2122 = vlaneseq
        %v2123 = vshrl.u32 %v2122, 7
        %v2124 = vsub.s32 0, %v2123
        %v2125 = vrot.slane %v2046, %v2124
        %v2126 = vlaneseq
        %v2127 = vshrl.u32 %v2126, 7
        %v2128 = vsub.s32 0, %v2127
        %v2129 = vrot.slane %v2048, %v2128
        %v2130 = vlaneseq
        %v2131 = vshrl.u32 %v2130, 7
        %v2132 = vsub.s32 0, %v2131
        %v2133 = vrot.slane %v2072, %v2132
        %v2134 = vlaneseq
        %v2135 = vshrl.u32 %v2134, 7
        %v2136 = vsub.s32 0, %v2135
        %v2137 = vrot.slane %v2086, %v2136
        %v2138 = vlaneseq
        %v2139 = vshrl.u32 %v2138, 7
        %v2140 = vsub.s32 0, %v2139
        %v2141 = vrot.slane %v2094, %v2140
        %v2142 = vlaneseq
        %v2143 = vshrl.u32 %v2142, 7
        %v2144 = vsub.s32 0, %v2143
        %v2145 = vrot.slane %v2096, %v2144
        %v2146 = vlaneseq
        %v2147 = vshrl.u32 %v2146, 7
        %v2148 = vsub.s32 0, %v2147
        %v2149 = vrot.slane %v2079, %v2148
        %v2150 = vlaneseq
        %v2151 = vshrl.u32 %v2150, 7
        %v2152 = vsub.s32 0, %v2151
        %v2153 = vrot.slane %v2093, %v2152
        %v2154 = vlaneseq
        %v2155 = vshrl.u32 %v2154, 7
        %v2156 = vsub.s32 0, %v2155
        %v2157 = vrot.slane %v2095, %v2156
        %v2158 = vlaneseq
        %v2159 = vshrl.u32 %v2158, 7
        %v2160 = vsub.s32 0, %v2159
        %v2161 = vrot.slane %v2097, %v2160
        %v2178 = vmul.f32 %v410, %v2101
        %v2179 = vmul.f32 %v411, %v2101
        %v2180 = vmul.f32 %v412, %v2105
        %v2181 = vmul.f32 %v413, %v2105
        %v2182 = vmul.f32 %v414, %v2109
        %v2183 = vmul.f32 %v415, %v2109
        %v2184 = vmul.f32 %v416, %v2113
        %v2185 = vmul.f32 %v417, %v2113
        %v2186 = vmul.f32 %v418, %v2117
        %v2187 = vmul.f32 %v419, %v2117
        %v2188 = vmul.f32 %v420, %v2121
        %v2189 = vmul.f32 %v421, %v2121
        %v2190 = vmul.f32 %v422, %v2125
        %v2191 = vmul.f32 %v423, %v2125
        %v2192 = vmul.f32 %v424, %v2129
        %v2193 = vmul.f32 %v425, %v2129
        %v2194 = vmul.f32 %v426, %v2133
        %v2195 = vmul.f32 %v427, %v2133
        %v2196 = vmul.f32 %v428, %v2137
        %v2197 = vmul.f32 %v429, %v2137
        %v2198 = vmul.f32 %v430, %v2141
        %v2199 = vmul.f32 %v431, %v2141
        %v2200 = vmul.f32 %v432, %v2145
        %v2201 = vmul.f32 %v433, %v2145
        %v2202 = vmul.f32 %v434, %v2149
        %v2203 = vmul.f32 %v435, %v2149
        %v2204 = vmul.f32 %v436, %v2153
        %v2205 = vmul.f32 %v437, %v2153
        %v2206 = vmul.f32 %v438, %v2157
        %v2207 = vmul.f32 %v439, %v2157
        %v2208 = vmul.f32 %v440, %v2161
        %v2209 = vmul.f32 %v441, %v2161
        %v2210 = vsel %vm836, %v2178, 0.0
        %2211 = vadd.xlane.f32.xlu0 %v2210
        %v2212 = vpop.xlane.xlu0 %2211
        %v2213 = vsel %vm836, %v2179, 0.0
        %2214 = vadd.xlane.f32.xlu0 %v2213
        %v2215 = vpop.xlane.xlu0 %2214
        %v2216 = vsel %vm836, %v2180, 0.0
        %2217 = vadd.xlane.f32.xlu0 %v2216
        %v2218 = vpop.xlane.xlu0 %2217
        %v2219 = vsel %vm836, %v2181, 0.0
        %2220 = vadd.xlane.f32.xlu0 %v2219
        %v2221 = vpop.xlane.xlu0 %2220
        %v2222 = vsel %vm836, %v2182, 0.0
        %2223 = vadd.xlane.f32.xlu0 %v2222
        %v2224 = vpop.xlane.xlu0 %2223
        %v2225 = vsel %vm836, %v2183, 0.0
        %2226 = vadd.xlane.f32.xlu0 %v2225
        %v2227 = vpop.xlane.xlu0 %2226
        %v2228 = vsel %vm836, %v2184, 0.0
        %2229 = vadd.xlane.f32.xlu0 %v2228
        %v2230 = vpop.xlane.xlu0 %2229
        %v2231 = vsel %vm836, %v2185, 0.0
        %2232 = vadd.xlane.f32.xlu0 %v2231
        %v2233 = vpop.xlane.xlu0 %2232
        %v2234 = vsel %vm836, %v2186, 0.0
        %2235 = vadd.xlane.f32.xlu0 %v2234
        %v2236 = vpop.xlane.xlu0 %2235
        %v2237 = vsel %vm836, %v2187, 0.0
        %2238 = vadd.xlane.f32.xlu0 %v2237
        %v2239 = vpop.xlane.xlu0 %2238
        %v2240 = vsel %vm836, %v2188, 0.0
        %2241 = vadd.xlane.f32.xlu0 %v2240
        %v2242 = vpop.xlane.xlu0 %2241
        %v2243 = vsel %vm836, %v2189, 0.0
        %2244 = vadd.xlane.f32.xlu0 %v2243
        %v2245 = vpop.xlane.xlu0 %2244
        %v2246 = vsel %vm836, %v2190, 0.0
        %2247 = vadd.xlane.f32.xlu0 %v2246
        %v2248 = vpop.xlane.xlu0 %2247
        %v2249 = vsel %vm836, %v2191, 0.0
        %2250 = vadd.xlane.f32.xlu0 %v2249
        %v2251 = vpop.xlane.xlu0 %2250
        %v2252 = vsel %vm836, %v2192, 0.0
        %2253 = vadd.xlane.f32.xlu0 %v2252
        %v2254 = vpop.xlane.xlu0 %2253
        %v2255 = vsel %vm836, %v2193, 0.0
        %2256 = vadd.xlane.f32.xlu0 %v2255
        %v2257 = vpop.xlane.xlu0 %2256
        %v2258 = vsel %vm836, %v2194, 0.0
        %2259 = vadd.xlane.f32.xlu0 %v2258
        %v2260 = vpop.xlane.xlu0 %2259
        %v2261 = vsel %vm836, %v2195, 0.0
        %2262 = vadd.xlane.f32.xlu0 %v2261
        %v2263 = vpop.xlane.xlu0 %2262
        %v2264 = vsel %vm836, %v2196, 0.0
        %2265 = vadd.xlane.f32.xlu0 %v2264
        %v2266 = vpop.xlane.xlu0 %2265
        %v2267 = vsel %vm836, %v2197, 0.0
        %2268 = vadd.xlane.f32.xlu0 %v2267
        %v2269 = vpop.xlane.xlu0 %2268
        %v2270 = vsel %vm836, %v2198, 0.0
        %2271 = vadd.xlane.f32.xlu0 %v2270
        %v2272 = vpop.xlane.xlu0 %2271
        %v2273 = vsel %vm836, %v2199, 0.0
        %2274 = vadd.xlane.f32.xlu0 %v2273
        %v2275 = vpop.xlane.xlu0 %2274
        %v2276 = vsel %vm836, %v2200, 0.0
        %2277 = vadd.xlane.f32.xlu0 %v2276
        %v2278 = vpop.xlane.xlu0 %2277
        %v2279 = vsel %vm836, %v2201, 0.0
        %2280 = vadd.xlane.f32.xlu0 %v2279
        %v2281 = vpop.xlane.xlu0 %2280
        %v2282 = vsel %vm836, %v2202, 0.0
        %2283 = vadd.xlane.f32.xlu0 %v2282
        %v2284 = vpop.xlane.xlu0 %2283
        %v2285 = vsel %vm836, %v2203, 0.0
        %2286 = vadd.xlane.f32.xlu0 %v2285
        %v2287 = vpop.xlane.xlu0 %2286
        %v2288 = vsel %vm836, %v2204, 0.0
        %2289 = vadd.xlane.f32.xlu0 %v2288
        %v2290 = vpop.xlane.xlu0 %2289
        %v2291 = vsel %vm836, %v2205, 0.0
        %2292 = vadd.xlane.f32.xlu0 %v2291
        %v2293 = vpop.xlane.xlu0 %2292
        %v2294 = vsel %vm836, %v2206, 0.0
        %2295 = vadd.xlane.f32.xlu0 %v2294
        %v2296 = vpop.xlane.xlu0 %2295
        %v2297 = vsel %vm836, %v2207, 0.0
        %2298 = vadd.xlane.f32.xlu0 %v2297
        %v2299 = vpop.xlane.xlu0 %2298
        %v2300 = vsel %vm836, %v2208, 0.0
        %2301 = vadd.xlane.f32.xlu0 %v2300
        %v2302 = vpop.xlane.xlu0 %2301
        %v2303 = vsel %vm836, %v2209, 0.0
        %2304 = vadd.xlane.f32.xlu0 %v2303
        %v2305 = vpop.xlane.xlu0 %2304
        %2306 = vrot.lane.b32.xlu0 %v1909, 96
        %v2307 = vpop.permute.xlu0 %2306
        %2308 = vrot.lane.b32.xlu0 %v1914, 96
        %v2309 = vpop.permute.xlu0 %2308
        %v2342 = vlaneseq
        %v2343 = vshrl.u32 %v2342, 7
        %v2344 = vsub.s32 %v970, %v2343
        %v2345 = vrot.slane %v2212, %v2344
        %v2346 = vlaneseq
        %v2347 = vshrl.u32 %v2346, 7
        %v2348 = vsub.s32 %v975, %v2347
        %v2349 = vrot.slane %v2215, %v2348
        %v2350 = vsel %vm980, %v2349, %v2345
        %v2351 = vlaneseq
        %v2352 = vshrl.u32 %v2351, 7
        %v2353 = vsub.s32 %v970, %v2352
        %v2354 = vrot.slane %v2218, %v2353
        %v2355 = vlaneseq
        %v2356 = vshrl.u32 %v2355, 7
        %v2357 = vsub.s32 %v975, %v2356
        %v2358 = vrot.slane %v2221, %v2357
        %v2359 = vsel %vm980, %v2358, %v2354
        %v2360 = vlaneseq
        %v2361 = vshrl.u32 %v2360, 7
        %v2362 = vsub.s32 %v970, %v2361
        %v2363 = vrot.slane %v2224, %v2362
        %v2364 = vlaneseq
        %v2365 = vshrl.u32 %v2364, 7
        %v2366 = vsub.s32 %v975, %v2365
        %v2367 = vrot.slane %v2227, %v2366
        %v2368 = vsel %vm980, %v2367, %v2363
        %v2369 = vlaneseq
        %v2370 = vshrl.u32 %v2369, 7
        %v2371 = vsub.s32 %v970, %v2370
        %v2372 = vrot.slane %v2230, %v2371
        %v2373 = vlaneseq
        %v2374 = vshrl.u32 %v2373, 7
        %v2375 = vsub.s32 %v975, %v2374
        %v2376 = vrot.slane %v2233, %v2375
        %v2377 = vsel %vm980, %v2376, %v2372
        %v2378 = vlaneseq
        %v2379 = vshrl.u32 %v2378, 7
        %v2380 = vsub.s32 %v970, %v2379
        %v2381 = vrot.slane %v2236, %v2380
        %v2382 = vlaneseq
        %v2383 = vshrl.u32 %v2382, 7
        %v2384 = vsub.s32 %v975, %v2383
        %v2385 = vrot.slane %v2239, %v2384
        %v2386 = vsel %vm980, %v2385, %v2381
        %v2387 = vlaneseq
        %v2388 = vshrl.u32 %v2387, 7
        %v2389 = vsub.s32 %v970, %v2388
        %v2390 = vrot.slane %v2242, %v2389
        %v2391 = vlaneseq
        %v2392 = vshrl.u32 %v2391, 7
        %v2393 = vsub.s32 %v975, %v2392
        %v2394 = vrot.slane %v2245, %v2393
        %v2395 = vsel %vm980, %v2394, %v2390
        %v2396 = vlaneseq
        %v2397 = vshrl.u32 %v2396, 7
        %v2398 = vsub.s32 %v970, %v2397
        %v2399 = vrot.slane %v2248, %v2398
        %v2400 = vlaneseq
        %v2401 = vshrl.u32 %v2400, 7
        %v2402 = vsub.s32 %v975, %v2401
        %v2403 = vrot.slane %v2251, %v2402
        %v2404 = vsel %vm980, %v2403, %v2399
        %v2405 = vlaneseq
        %v2406 = vshrl.u32 %v2405, 7
        %v2407 = vsub.s32 %v970, %v2406
        %v2408 = vrot.slane %v2254, %v2407
        %v2409 = vlaneseq
        %v2410 = vshrl.u32 %v2409, 7
        %v2411 = vsub.s32 %v975, %v2410
        %v2412 = vrot.slane %v2257, %v2411
        %v2413 = vsel %vm980, %v2412, %v2408
        %v2414 = vlaneseq
        %v2415 = vshrl.u32 %v2414, 7
        %v2416 = vsub.s32 %v970, %v2415
        %v2417 = vrot.slane %v2260, %v2416
        %v2418 = vlaneseq
        %v2419 = vshrl.u32 %v2418, 7
        %v2420 = vsub.s32 %v975, %v2419
        %v2421 = vrot.slane %v2263, %v2420
        %v2422 = vsel %vm980, %v2421, %v2417
        %v2423 = vlaneseq
        %v2424 = vshrl.u32 %v2423, 7
        %v2425 = vsub.s32 %v970, %v2424
        %v2426 = vrot.slane %v2266, %v2425
        %v2427 = vlaneseq
        %v2428 = vshrl.u32 %v2427, 7
        %v2429 = vsub.s32 %v975, %v2428
        %v2430 = vrot.slane %v2269, %v2429
        %v2431 = vsel %vm980, %v2430, %v2426
        %v2432 = vlaneseq
        %v2433 = vshrl.u32 %v2432, 7
        %v2434 = vsub.s32 %v970, %v2433
        %v2435 = vrot.slane %v2272, %v2434
        %v2436 = vlaneseq
        %v2437 = vshrl.u32 %v2436, 7
        %v2438 = vsub.s32 %v975, %v2437
        %v2439 = vrot.slane %v2275, %v2438
        %v2440 = vsel %vm980, %v2439, %v2435
        %v2441 = vlaneseq
        %v2442 = vshrl.u32 %v2441, 7
        %v2443 = vsub.s32 %v970, %v2442
        %v2444 = vrot.slane %v2278, %v2443
        %v2445 = vlaneseq
        %v2446 = vshrl.u32 %v2445, 7
        %v2447 = vsub.s32 %v975, %v2446
        %v2448 = vrot.slane %v2281, %v2447
        %v2449 = vsel %vm980, %v2448, %v2444
        %v2450 = vlaneseq
        %v2451 = vshrl.u32 %v2450, 7
        %v2452 = vsub.s32 %v970, %v2451
        %v2453 = vrot.slane %v2284, %v2452
        %v2454 = vlaneseq
        %v2455 = vshrl.u32 %v2454, 7
        %v2456 = vsub.s32 %v975, %v2455
        %v2457 = vrot.slane %v2287, %v2456
        %v2458 = vsel %vm980, %v2457, %v2453
        %v2459 = vlaneseq
        %v2460 = vshrl.u32 %v2459, 7
        %v2461 = vsub.s32 %v970, %v2460
        %v2462 = vrot.slane %v2290, %v2461
        %v2463 = vlaneseq
        %v2464 = vshrl.u32 %v2463, 7
        %v2465 = vsub.s32 %v975, %v2464
        %v2466 = vrot.slane %v2293, %v2465
        %v2467 = vsel %vm980, %v2466, %v2462
        %v2468 = vlaneseq
        %v2469 = vshrl.u32 %v2468, 7
        %v2470 = vsub.s32 %v970, %v2469
        %v2471 = vrot.slane %v2296, %v2470
        %v2472 = vlaneseq
        %v2473 = vshrl.u32 %v2472, 7
        %v2474 = vsub.s32 %v975, %v2473
        %v2475 = vrot.slane %v2299, %v2474
        %v2476 = vsel %vm980, %v2475, %v2471
        %v2477 = vlaneseq
        %v2478 = vshrl.u32 %v2477, 7
        %v2479 = vsub.s32 %v970, %v2478
        %v2480 = vrot.slane %v2302, %v2479
        %v2481 = vlaneseq
        %v2482 = vshrl.u32 %v2481, 7
        %v2483 = vsub.s32 %v975, %v2482
        %v2484 = vrot.slane %v2305, %v2483
        %v2485 = vsel %vm980, %v2484, %v2480
        %v2486 = vsel %vm1117, %v2359, %v2350
        %v2487 = vsel %vm1119, %v2368, %v2486
        %v2488 = vsel %vm1121, %v2377, %v2487
        %v2489 = vsel %vm1123, %v2386, %v2488
        %v2490 = vsel %vm1125, %v2395, %v2489
        %v2491 = vsel %vm1127, %v2404, %v2490
        %v2492 = vsel %vm1129, %v2413, %v2491
        %v2493 = vsel %vm1117, %v2431, %v2422
        %v2494 = vsel %vm1119, %v2440, %v2493
        %v2495 = vsel %vm1121, %v2449, %v2494
        %v2496 = vsel %vm1123, %v2458, %v2495
        %v2497 = vsel %vm1125, %v2467, %v2496
        %v2498 = vsel %vm1127, %v2476, %v2497
        %v2499 = vsel %vm1129, %v2485, %v2498
        %v2502 = vsel %vm461, %v2307, 0
        %v2504 = vsel %vm461, %v2309, 0
        %2506 = vmatprep.subr.mxu0 0.0
        %2507 = vmatpush1.xpose.msra.mxu0 %v2502
        %2508 = vmatprep.subr.mxu0 0.0
        %2509 = vmatpush1.xpose.msra.mxu0 %v2504
        %2510 = vmatprep.subr.mxu0 0.0
        %2511 = vmatpush1.xpose.msra.mxu0 0.0
        %2512 = vmatprep.subr.mxu0 0.0
        %2513 = vmatpush1.xpose.msra.mxu0 0.0
        %2514 = vmatprep.subr.mxu0 0.0
        %2515 = vmatpush1.xpose.msra.mxu0 0.0
        %2516 = vmatprep.subr.mxu0 0.0
        %2517 = vmatpush1.xpose.msra.mxu0 0.0
        %2518 = vmatprep.subr.mxu0 0.0
        %2519 = vmatpush1.xpose.msra.mxu0 0.0
        %2520 = vmatprep.subr.mxu0 0.0
        %2521 = vmatpush1.xpose.msra.mxu0 0.0
        %2522 = vmatprep.subr.mxu0 0.0
        %2523 = vmatpush1.xpose.msra.mxu0 0.0
        %2524 = vmatprep.subr.mxu0 0.0
        %2525 = vmatpush1.xpose.msra.mxu0 0.0
        %2526 = vmatprep.subr.mxu0 0.0
        %2527 = vmatpush1.xpose.msra.mxu0 0.0
        %2528 = vmatprep.subr.mxu0 0.0
        %2529 = vmatpush1.xpose.msra.mxu0 0.0
        %2530 = vmatprep.subr.mxu0 0.0
        %2531 = vmatpush1.xpose.msra.mxu0 0.0
        %2532 = vmatprep.subr.mxu0 0.0
        %2533 = vmatpush1.xpose.msra.mxu0 0.0
        %2534 = vmatprep.subr.mxu0 0.0
        %2535 = vmatpush1.xpose.msra.mxu0 0.0
        %2536 = vmatprep.subr.mxu0 0.0
        %2537 = vmatpush1.xpose.msra.mxu0 0.0
        %2538 = vmatprep.subr.mxu0 0.0
        %2539 = vmatpush1.xpose.msra.mxu0 0.0
        %2540 = vmatprep.subr.mxu0 0.0
        %2541 = vmatpush1.xpose.msra.mxu0 0.0
        %2542 = vmatprep.subr.mxu0 0.0
        %2543 = vmatpush1.xpose.msra.mxu0 0.0
        %2544 = vmatprep.subr.mxu0 0.0
        %2545 = vmatpush1.xpose.msra.mxu0 0.0
        %2546 = vmatprep.subr.mxu0 0.0
        %2547 = vmatpush1.xpose.msra.mxu0 0.0
        %2548 = vmatprep.subr.mxu0 0.0
        %2549 = vmatpush1.xpose.msra.mxu0 0.0
        %2550 = vmatprep.subr.mxu0 0.0
        %2551 = vmatpush1.xpose.msra.mxu0 0.0
        %2552 = vmatprep.subr.mxu0 0.0
        %2553 = vmatpush1.xpose.msra.mxu0 0.0
        %2554 = vmatprep.subr.mxu0 0.0
        %2555 = vmatpush1.xpose.msra.mxu0 0.0
        %2556 = vmatprep.subr.mxu0 0.0
        %2557 = vmatpush1.xpose.msra.mxu0 0.0
        %2558 = vmatprep.subr.mxu0 0.0
        %2559 = vmatpush1.xpose.msra.mxu0 0.0
        %2560 = vmatprep.subr.mxu0 0.0
        %2561 = vmatpush1.xpose.msra.mxu0 0.0
        %2562 = vmatprep.subr.mxu0 0.0
        %2563 = vmatpush1.xpose.msra.mxu0 0.0
        %2564 = vmatprep.subr.mxu0 0.0
        %2565 = vmatpush1.xpose.msra.mxu0 0.0
        %2566 = vmatprep.subr.mxu0 0.0
        %2567 = vmatpush1.xpose.msra.mxu0 0.0
        %2568 = vmatprep.subr.mxu0 0.0
        %2569 = vmatpush1.xpose.msra.mxu0 0.0
        %2570 = vmatprep.mubr.f32.mxu0 0.0
        %2571 = vmatmul.mubr.f32.gmra.mrb[0].mxu0 %v1918
        %v2572 = vpop.f32.mrb[0].mxu0
        %v2573 = vadd.f32 %v2492, %v2572
        %v2574 = vpop.f32.mrb[0].mxu0
        %2575 = vmatprep.mubr.f32.mxu0 0.0
        %2576 = vmatmul.mubr.f32.gmra.mrb[0].mxu0 %v1921
        %v2577 = vpop.f32.mrb[0].mxu0
        %v2578 = vadd.f32 %v2499, %v2577
        %v2579 = vpop.f32.mrb[0].mxu0
        %2580 = vdwg.mxu0
        %v2581 = vmul.f32 %v2573, 0.17677669
        %v2582 = vmul.f32 %v2578, 0.17677669
        %v2583 = vadd.f32 %v2581, %v444
        %v2584 = vadd.f32 %v2582, %v445
        %v2585 = vsel %vm836, %v2583, -inf
        %2586 = vmax.xlane.f32.xlu0 %v2585
        %v2587 = vpop.xlane.xlu0 %2586
        %v2588 = vsel %vm836, %v2584, -inf
        %2589 = vmax.xlane.f32.xlu0 %v2588
        %v2590 = vpop.xlane.xlu0 %2589
        %v2591 = vsub.f32 %v2583, %v2587
        %v2592 = vsub.f32 %v2584, %v2590
        %v2593 = vmul.f32 %v2591, 1.442695
        %v2594 = vpow.pop %v2593
        %v2595 = vmul.f32 %v2592, 1.442695
        %v2596 = vpow.pop %v2595
        %v2597 = vmul.f32 %v2594, %v408
        %v2598 = vmul.f32 %v2596, %v409
        %v2599 = vsel %vm836, %v2597, 0.0
        %2600 = vadd.xlane.f32.xlu0 %v2599
        %v2601 = vpop.xlane.xlu0 %2600
        %v2602 = vsel %vm836, %v2598, 0.0
        %2603 = vadd.xlane.f32.xlu0 %v2602
        %v2604 = vpop.xlane.xlu0 %2603
        %vm2605 = vcmp.gt.f32.partialorder %v2601, 0.0
        %vm2606 = vcmp.gt.f32.partialorder %v2604, 0.0
        %v2607 = vrcp.pop %v2601
        %v2608 = vrcp.pop %v2604
        %v2609 = vsel %vm2605, %v2607, 0.0
        %v2610 = vsel %vm2606, %v2608, 0.0
        %v2611 = vmul.f32 %v2597, %v2609
        %v2612 = vmul.f32 %v2598, %v2610
        %v2613 = vlaneseq
        %v2614 = vshrl.u32 %v2613, 7
        %v2615 = vsub.s32 0, %v2614
        %v2616 = vrot.slane %v2611, %v2615
        %2618 = vbcast.lane.b32.xlu0 %v2616, 256
        %v2619 = vpop.permute.xlu0 %2618
        %s2621 = sor.u32 256, 8
        %2622 = vbcast.lane.b32.xlu0 %v2616, %s2621
        %v2623 = vpop.permute.xlu0 %2622
        %v2624 = vlaneseq
        %v2625 = vshrl.u32 %v2624, 7
        %v2626 = vsub.s32 1, %v2625
        %v2627 = vrot.slane %v2611, %v2626
        %2629 = vbcast.lane.b32.xlu0 %v2627, 256
        %v2630 = vpop.permute.xlu0 %2629
        %s2632 = sor.u32 256, 8
        %2633 = vbcast.lane.b32.xlu0 %v2627, %s2632
        %v2634 = vpop.permute.xlu0 %2633
        %v2635 = vlaneseq
        %v2636 = vshrl.u32 %v2635, 7
        %v2637 = vsub.s32 2, %v2636
        %v2638 = vrot.slane %v2611, %v2637
        %2640 = vbcast.lane.b32.xlu0 %v2638, 256
        %v2641 = vpop.permute.xlu0 %2640
        %s2643 = sor.u32 256, 8
        %2644 = vbcast.lane.b32.xlu0 %v2638, %s2643
        %v2645 = vpop.permute.xlu0 %2644
        %v2646 = vlaneseq
        %v2647 = vshrl.u32 %v2646, 7
        %v2648 = vsub.s32 3, %v2647
        %v2649 = vrot.slane %v2611, %v2648
        %2651 = vbcast.lane.b32.xlu0 %v2649, 256
        %v2652 = vpop.permute.xlu0 %2651
        %s2654 = sor.u32 256, 8
        %2655 = vbcast.lane.b32.xlu0 %v2649, %s2654
        %v2656 = vpop.permute.xlu0 %2655
        %v2657 = vlaneseq
        %v2658 = vshrl.u32 %v2657, 7
        %v2659 = vsub.s32 4, %v2658
        %v2660 = vrot.slane %v2611, %v2659
        %2662 = vbcast.lane.b32.xlu0 %v2660, 256
        %v2663 = vpop.permute.xlu0 %2662
        %s2665 = sor.u32 256, 8
        %2666 = vbcast.lane.b32.xlu0 %v2660, %s2665
        %v2667 = vpop.permute.xlu0 %2666
        %v2668 = vlaneseq
        %v2669 = vshrl.u32 %v2668, 7
        %v2670 = vsub.s32 5, %v2669
        %v2671 = vrot.slane %v2611, %v2670
        %2673 = vbcast.lane.b32.xlu0 %v2671, 256
        %v2674 = vpop.permute.xlu0 %2673
        %s2676 = sor.u32 256, 8
        %2677 = vbcast.lane.b32.xlu0 %v2671, %s2676
        %v2678 = vpop.permute.xlu0 %2677
        %v2679 = vlaneseq
        %v2680 = vshrl.u32 %v2679, 7
        %v2681 = vsub.s32 6, %v2680
        %v2682 = vrot.slane %v2611, %v2681
        %2684 = vbcast.lane.b32.xlu0 %v2682, 256
        %v2685 = vpop.permute.xlu0 %2684
        %s2687 = sor.u32 256, 8
        %2688 = vbcast.lane.b32.xlu0 %v2682, %s2687
        %v2689 = vpop.permute.xlu0 %2688
        %v2690 = vlaneseq
        %v2691 = vshrl.u32 %v2690, 7
        %v2692 = vsub.s32 7, %v2691
        %v2693 = vrot.slane %v2611, %v2692
        %2695 = vbcast.lane.b32.xlu0 %v2693, 256
        %v2696 = vpop.permute.xlu0 %2695
        %s2698 = sor.u32 256, 8
        %2699 = vbcast.lane.b32.xlu0 %v2693, %s2698
        %v2700 = vpop.permute.xlu0 %2699
        %v2701 = vlaneseq
        %v2702 = vshrl.u32 %v2701, 7
        %v2703 = vsub.s32 0, %v2702
        %v2704 = vrot.slane %v2612, %v2703
        %2706 = vbcast.lane.b32.xlu0 %v2704, 256
        %v2707 = vpop.permute.xlu0 %2706
        %s2709 = sor.u32 256, 8
        %2710 = vbcast.lane.b32.xlu0 %v2704, %s2709
        %v2711 = vpop.permute.xlu0 %2710
        %v2712 = vlaneseq
        %v2713 = vshrl.u32 %v2712, 7
        %v2714 = vsub.s32 1, %v2713
        %v2715 = vrot.slane %v2612, %v2714
        %2717 = vbcast.lane.b32.xlu0 %v2715, 256
        %v2718 = vpop.permute.xlu0 %2717
        %s2720 = sor.u32 256, 8
        %2721 = vbcast.lane.b32.xlu0 %v2715, %s2720
        %v2722 = vpop.permute.xlu0 %2721
        %v2723 = vlaneseq
        %v2724 = vshrl.u32 %v2723, 7
        %v2725 = vsub.s32 2, %v2724
        %v2726 = vrot.slane %v2612, %v2725
        %2728 = vbcast.lane.b32.xlu0 %v2726, 256
        %v2729 = vpop.permute.xlu0 %2728
        %s2731 = sor.u32 256, 8
        %2732 = vbcast.lane.b32.xlu0 %v2726, %s2731
        %v2733 = vpop.permute.xlu0 %2732
        %v2734 = vlaneseq
        %v2735 = vshrl.u32 %v2734, 7
        %v2736 = vsub.s32 3, %v2735
        %v2737 = vrot.slane %v2612, %v2736
        %2739 = vbcast.lane.b32.xlu0 %v2737, 256
        %v2740 = vpop.permute.xlu0 %2739
        %s2742 = sor.u32 256, 8
        %2743 = vbcast.lane.b32.xlu0 %v2737, %s2742
        %v2744 = vpop.permute.xlu0 %2743
        %v2745 = vlaneseq
        %v2746 = vshrl.u32 %v2745, 7
        %v2747 = vsub.s32 4, %v2746
        %v2748 = vrot.slane %v2612, %v2747
        %2750 = vbcast.lane.b32.xlu0 %v2748, 256
        %v2751 = vpop.permute.xlu0 %2750
        %s2753 = sor.u32 256, 8
        %2754 = vbcast.lane.b32.xlu0 %v2748, %s2753
        %v2755 = vpop.permute.xlu0 %2754
        %v2756 = vlaneseq
        %v2757 = vshrl.u32 %v2756, 7
        %v2758 = vsub.s32 5, %v2757
        %v2759 = vrot.slane %v2612, %v2758
        %2761 = vbcast.lane.b32.xlu0 %v2759, 256
        %v2762 = vpop.permute.xlu0 %2761
        %s2764 = sor.u32 256, 8
        %2765 = vbcast.lane.b32.xlu0 %v2759, %s2764
        %v2766 = vpop.permute.xlu0 %2765
        %v2767 = vlaneseq
        %v2768 = vshrl.u32 %v2767, 7
        %v2769 = vsub.s32 6, %v2768
        %v2770 = vrot.slane %v2612, %v2769
        %2772 = vbcast.lane.b32.xlu0 %v2770, 256
        %v2773 = vpop.permute.xlu0 %2772
        %s2775 = sor.u32 256, 8
        %2776 = vbcast.lane.b32.xlu0 %v2770, %s2775
        %v2777 = vpop.permute.xlu0 %2776
        %v2778 = vlaneseq
        %v2779 = vshrl.u32 %v2778, 7
        %v2780 = vsub.s32 7, %v2779
        %v2781 = vrot.slane %v2612, %v2780
        %2783 = vbcast.lane.b32.xlu0 %v2781, 256
        %v2784 = vpop.permute.xlu0 %2783
        %s2786 = sor.u32 256, 8
        %2787 = vbcast.lane.b32.xlu0 %v2781, %s2786
        %v2788 = vpop.permute.xlu0 %2787
        %v2789 = vmul.f32 %v2619, %v410
        %v2790 = vmul.f32 %v2623, %v411
        %v2791 = vmul.f32 %v2630, %v412
        %v2792 = vmul.f32 %v2634, %v413
        %v2793 = vmul.f32 %v2641, %v414
        %v2794 = vmul.f32 %v2645, %v415
        %v2795 = vmul.f32 %v2652, %v416
        %v2796 = vmul.f32 %v2656, %v417
        %v2797 = vmul.f32 %v2663, %v418
        %v2798 = vmul.f32 %v2667, %v419
        %v2799 = vmul.f32 %v2674, %v420
        %v2800 = vmul.f32 %v2678, %v421
        %v2801 = vmul.f32 %v2685, %v422
        %v2802 = vmul.f32 %v2689, %v423
        %v2803 = vmul.f32 %v2696, %v424
        %v2804 = vmul.f32 %v2700, %v425
        %v2805 = vmul.f32 %v2707, %v426
        %v2806 = vmul.f32 %v2711, %v427
        %v2807 = vmul.f32 %v2718, %v428
        %v2808 = vmul.f32 %v2722, %v429
        %v2809 = vmul.f32 %v2729, %v430
        %v2810 = vmul.f32 %v2733, %v431
        %v2811 = vmul.f32 %v2740, %v432
        %v2812 = vmul.f32 %v2744, %v433
        %v2813 = vmul.f32 %v2751, %v434
        %v2814 = vmul.f32 %v2755, %v435
        %v2815 = vmul.f32 %v2762, %v436
        %v2816 = vmul.f32 %v2766, %v437
        %v2817 = vmul.f32 %v2773, %v438
        %v2818 = vmul.f32 %v2777, %v439
        %v2819 = vmul.f32 %v2784, %v440
        %v2820 = vmul.f32 %v2788, %v441
        %v2821 = vsel %vm836, %v2789, 0.0
        %v2822 = vsel %vm836, %v2790, 0.0
        %v2823 = vadd.f32 %v2821, %v2822
        %v2824 = vrot.slane %v2823, 4
        %v2825 = vadd.f32 %v2823, %v2824
        %v2826 = vrot.slane %v2825, 2
        %v2827 = vadd.f32 %v2825, %v2826
        %v2828 = vrot.slane %v2827, 1
        %v2829 = vadd.f32 %v2827, %v2828
        %v2830 = vsel %vm836, %v2791, 0.0
        %v2831 = vsel %vm836, %v2792, 0.0
        %v2832 = vadd.f32 %v2830, %v2831
        %v2833 = vrot.slane %v2832, 4
        %v2834 = vadd.f32 %v2832, %v2833
        %v2835 = vrot.slane %v2834, 2
        %v2836 = vadd.f32 %v2834, %v2835
        %v2837 = vrot.slane %v2836, 1
        %v2838 = vadd.f32 %v2836, %v2837
        %v2839 = vsel %vm836, %v2793, 0.0
        %v2840 = vsel %vm836, %v2794, 0.0
        %v2841 = vadd.f32 %v2839, %v2840
        %v2842 = vrot.slane %v2841, 4
        %v2843 = vadd.f32 %v2841, %v2842
        %v2844 = vrot.slane %v2843, 2
        %v2845 = vadd.f32 %v2843, %v2844
        %v2846 = vrot.slane %v2845, 1
        %v2847 = vadd.f32 %v2845, %v2846
        %v2848 = vsel %vm836, %v2795, 0.0
        %v2849 = vsel %vm836, %v2796, 0.0
        %v2850 = vadd.f32 %v2848, %v2849
        %v2851 = vrot.slane %v2850, 4
        %v2852 = vadd.f32 %v2850, %v2851
        %v2853 = vrot.slane %v2852, 2
        %v2854 = vadd.f32 %v2852, %v2853
        %v2855 = vrot.slane %v2854, 1
        %v2856 = vadd.f32 %v2854, %v2855
        %v2857 = vsel %vm836, %v2797, 0.0
        %v2858 = vsel %vm836, %v2798, 0.0
        %v2859 = vadd.f32 %v2857, %v2858
        %v2860 = vrot.slane %v2859, 4
        %v2861 = vadd.f32 %v2859, %v2860
        %v2862 = vrot.slane %v2861, 2
        %v2863 = vadd.f32 %v2861, %v2862
        %v2864 = vrot.slane %v2863, 1
        %v2865 = vadd.f32 %v2863, %v2864
        %v2866 = vsel %vm836, %v2799, 0.0
        %v2867 = vsel %vm836, %v2800, 0.0
        %v2868 = vadd.f32 %v2866, %v2867
        %v2869 = vrot.slane %v2868, 4
        %v2870 = vadd.f32 %v2868, %v2869
        %v2871 = vrot.slane %v2870, 2
        %v2872 = vadd.f32 %v2870, %v2871
        %v2873 = vrot.slane %v2872, 1
        %v2874 = vadd.f32 %v2872, %v2873
        %v2875 = vsel %vm836, %v2801, 0.0
        %v2876 = vsel %vm836, %v2802, 0.0
        %v2877 = vadd.f32 %v2875, %v2876
        %v2878 = vrot.slane %v2877, 4
        %v2879 = vadd.f32 %v2877, %v2878
        %v2880 = vrot.slane %v2879, 2
        %v2881 = vadd.f32 %v2879, %v2880
        %v2882 = vrot.slane %v2881, 1
        %v2883 = vadd.f32 %v2881, %v2882
        %v2884 = vsel %vm836, %v2803, 0.0
        %v2885 = vsel %vm836, %v2804, 0.0
        %v2886 = vadd.f32 %v2884, %v2885
        %v2887 = vrot.slane %v2886, 4
        %v2888 = vadd.f32 %v2886, %v2887
        %v2889 = vrot.slane %v2888, 2
        %v2890 = vadd.f32 %v2888, %v2889
        %v2891 = vrot.slane %v2890, 1
        %v2892 = vadd.f32 %v2890, %v2891
        %v2893 = vsel %vm836, %v2805, 0.0
        %v2894 = vsel %vm836, %v2806, 0.0
        %v2895 = vadd.f32 %v2893, %v2894
        %v2896 = vrot.slane %v2895, 4
        %v2897 = vadd.f32 %v2895, %v2896
        %v2898 = vrot.slane %v2897, 2
        %v2899 = vadd.f32 %v2897, %v2898
        %v2900 = vrot.slane %v2899, 1
        %v2901 = vadd.f32 %v2899, %v2900
        %v2902 = vsel %vm836, %v2807, 0.0
        %v2903 = vsel %vm836, %v2808, 0.0
        %v2904 = vadd.f32 %v2902, %v2903
        %v2905 = vrot.slane %v2904, 4
        %v2906 = vadd.f32 %v2904, %v2905
        %v2907 = vrot.slane %v2906, 2
        %v2908 = vadd.f32 %v2906, %v2907
        %v2909 = vrot.slane %v2908, 1
        %v2910 = vadd.f32 %v2908, %v2909
        %v2911 = vsel %vm836, %v2809, 0.0
        %v2912 = vsel %vm836, %v2810, 0.0
        %v2913 = vadd.f32 %v2911, %v2912
        %v2914 = vrot.slane %v2913, 4
        %v2915 = vadd.f32 %v2913, %v2914
        %v2916 = vrot.slane %v2915, 2
        %v2917 = vadd.f32 %v2915, %v2916
        %v2918 = vrot.slane %v2917, 1
        %v2919 = vadd.f32 %v2917, %v2918
        %v2920 = vsel %vm836, %v2811, 0.0
        %v2921 = vsel %vm836, %v2812, 0.0
        %v2922 = vadd.f32 %v2920, %v2921
        %v2923 = vrot.slane %v2922, 4
        %v2924 = vadd.f32 %v2922, %v2923
        %v2925 = vrot.slane %v2924, 2
        %v2926 = vadd.f32 %v2924, %v2925
        %v2927 = vrot.slane %v2926, 1
        %v2928 = vadd.f32 %v2926, %v2927
        %v2929 = vsel %vm836, %v2813, 0.0
        %v2930 = vsel %vm836, %v2814, 0.0
        %v2931 = vadd.f32 %v2929, %v2930
        %v2932 = vrot.slane %v2931, 4
        %v2933 = vadd.f32 %v2931, %v2932
        %v2934 = vrot.slane %v2933, 2
        %v2935 = vadd.f32 %v2933, %v2934
        %v2936 = vrot.slane %v2935, 1
        %v2937 = vadd.f32 %v2935, %v2936
        %v2938 = vsel %vm836, %v2815, 0.0
        %v2939 = vsel %vm836, %v2816, 0.0
        %v2940 = vadd.f32 %v2938, %v2939
        %v2941 = vrot.slane %v2940, 4
        %v2942 = vadd.f32 %v2940, %v2941
        %v2943 = vrot.slane %v2942, 2
        %v2944 = vadd.f32 %v2942, %v2943
        %v2945 = vrot.slane %v2944, 1
        %v2946 = vadd.f32 %v2944, %v2945
        %v2947 = vsel %vm836, %v2817, 0.0
        %v2948 = vsel %vm836, %v2818, 0.0
        %v2949 = vadd.f32 %v2947, %v2948
        %v2950 = vrot.slane %v2949, 4
        %v2951 = vadd.f32 %v2949, %v2950
        %v2952 = vrot.slane %v2951, 2
        %v2953 = vadd.f32 %v2951, %v2952
        %v2954 = vrot.slane %v2953, 1
        %v2955 = vadd.f32 %v2953, %v2954
        %v2956 = vsel %vm836, %v2819, 0.0
        %v2957 = vsel %vm836, %v2820, 0.0
        %v2958 = vadd.f32 %v2956, %v2957
        %v2959 = vrot.slane %v2958, 4
        %v2960 = vadd.f32 %v2958, %v2959
        %v2961 = vrot.slane %v2960, 2
        %v2962 = vadd.f32 %v2960, %v2961
        %v2963 = vrot.slane %v2962, 1
        %v2964 = vadd.f32 %v2962, %v2963
        %v2981 = vsel %vm1117, %v2838, %v2829
        %v2982 = vsel %vm1119, %v2847, %v2981
        %v2983 = vsel %vm1121, %v2856, %v2982
        %v2984 = vsel %vm1123, %v2865, %v2983
        %v2985 = vsel %vm1125, %v2874, %v2984
        %v2986 = vsel %vm1127, %v2883, %v2985
        %v2987 = vsel %vm1129, %v2892, %v2986
        %v2988 = vsel %vm1117, %v2910, %v2901
        %v2989 = vsel %vm1119, %v2919, %v2988
        %v2990 = vsel %vm1121, %v2928, %v2989
        %v2991 = vsel %vm1123, %v2937, %v2990
        %v2992 = vsel %vm1125, %v2946, %v2991
        %v2993 = vsel %vm1127, %v2955, %v2992
        %v2994 = vsel %vm1129, %v2964, %v2993
        %v2995 = vsel %vm836, %v2987, 0
        %v2997 = vsel %vm836, %v2994, 0
        %v3000 = vsel %vm836, %v1826, 0
        %v3003 = vsel %vm836, %v1827, 0
        %v3006 = vsel %vm836, %v1828, 0
        %v3009 = vsel %vm836, %v1829, 0
        %3011 = vmatprep.subr.mxu0 0.0
        %3012 = vmatpush1.xpose.msra.mxu0 %v3000
        %3013 = vmatprep.subr.mxu0 0.0
        %3014 = vmatpush1.xpose.msra.mxu0 %v3003
        %3015 = vmatprep.subr.mxu0 0.0
        %3016 = vmatpush1.xpose.msra.mxu0 %v3006
        %3017 = vmatprep.subr.mxu0 0.0
        %3018 = vmatpush1.xpose.msra.mxu0 %v3009
        %3019 = vmatprep.subr.mxu0 0.0
        %3020 = vmatpush1.xpose.msra.mxu0 0.0
        %3021 = vmatprep.subr.mxu0 0.0
        %3022 = vmatpush1.xpose.msra.mxu0 0.0
        %3023 = vmatprep.subr.mxu0 0.0
        %3024 = vmatpush1.xpose.msra.mxu0 0.0
        %3025 = vmatprep.subr.mxu0 0.0
        %3026 = vmatpush1.xpose.msra.mxu0 0.0
        %3027 = vmatprep.subr.mxu0 0.0
        %3028 = vmatpush1.xpose.msra.mxu0 0.0
        %3029 = vmatprep.subr.mxu0 0.0
        %3030 = vmatpush1.xpose.msra.mxu0 0.0
        %3031 = vmatprep.subr.mxu0 0.0
        %3032 = vmatpush1.xpose.msra.mxu0 0.0
        %3033 = vmatprep.subr.mxu0 0.0
        %3034 = vmatpush1.xpose.msra.mxu0 0.0
        %3035 = vmatprep.subr.mxu0 0.0
        %3036 = vmatpush1.xpose.msra.mxu0 0.0
        %3037 = vmatprep.subr.mxu0 0.0
        %3038 = vmatpush1.xpose.msra.mxu0 0.0
        %3039 = vmatprep.subr.mxu0 0.0
        %3040 = vmatpush1.xpose.msra.mxu0 0.0
        %3041 = vmatprep.subr.mxu0 0.0
        %3042 = vmatpush1.xpose.msra.mxu0 0.0
        %3043 = vmatprep.subr.mxu0 0.0
        %3044 = vmatpush1.xpose.msra.mxu0 0.0
        %3045 = vmatprep.subr.mxu0 0.0
        %3046 = vmatpush1.xpose.msra.mxu0 0.0
        %3047 = vmatprep.subr.mxu0 0.0
        %3048 = vmatpush1.xpose.msra.mxu0 0.0
        %3049 = vmatprep.subr.mxu0 0.0
        %3050 = vmatpush1.xpose.msra.mxu0 0.0
        %3051 = vmatprep.subr.mxu0 0.0
        %3052 = vmatpush1.xpose.msra.mxu0 0.0
        %3053 = vmatprep.subr.mxu0 0.0
        %3054 = vmatpush1.xpose.msra.mxu0 0.0
        %3055 = vmatprep.subr.mxu0 0.0
        %3056 = vmatpush1.xpose.msra.mxu0 0.0
        %3057 = vmatprep.subr.mxu0 0.0
        %3058 = vmatpush1.xpose.msra.mxu0 0.0
        %3059 = vmatprep.subr.mxu0 0.0
        %3060 = vmatpush1.xpose.msra.mxu0 0.0
        %3061 = vmatprep.subr.mxu0 0.0
        %3062 = vmatpush1.xpose.msra.mxu0 0.0
        %3063 = vmatprep.subr.mxu0 0.0
        %3064 = vmatpush1.xpose.msra.mxu0 0.0
        %3065 = vmatprep.subr.mxu0 0.0
        %3066 = vmatpush1.xpose.msra.mxu0 0.0
        %3067 = vmatprep.subr.mxu0 0.0
        %3068 = vmatpush1.xpose.msra.mxu0 0.0
        %3069 = vmatprep.subr.mxu0 0.0
        %3070 = vmatpush1.xpose.msra.mxu0 0.0
        %3071 = vmatprep.subr.mxu0 0.0
        %3072 = vmatpush1.xpose.msra.mxu0 0.0
        %3073 = vmatprep.subr.mxu0 0.0
        %3074 = vmatpush1.xpose.msra.mxu0 0.0
        %3075 = vmatprep.mubr.f32.mxu0 0.0
        %3076 = vmatmul.mubr.f32.gmra.mrb[0].mxu0 %v2995
        %v3077 = vpop.f32.mrb[0].mxu0
        %v3078 = vadd.f32 0.0, %v3077
        %v3079 = vpop.f32.mrb[0].mxu0
        %3080 = vmatprep.mubr.f32.mxu0 0.0
        %3081 = vmatmul.mubr.f32.gmra.mrb[0].mxu0 %v2997
        %v3082 = vpop.f32.mrb[0].mxu0
        %v3083 = vadd.f32 0.0, %v3082
        %v3084 = vpop.f32.mrb[0].mxu0
        %3085 = vdwg.mxu0
        %3086 = vrot.lane.b32.xlu0 %v1909, 64
        %v3087 = vpop.permute.xlu0 %3086
        %3088 = vrot.lane.b32.xlu0 %v1914, 64
        %v3089 = vpop.permute.xlu0 %3088
        %v3093 = vsel %vm836, %v2611, 0
        %v3096 = vsel %vm836, %v2612, 0
        %3098 = vmatprep.subr.mxu0 0.0
        %3099 = vmatpush1.msra.mxu0 %v3087
        %3100 = vmatprep.subr.mxu0 0.0
        %3101 = vmatpush1.msra.mxu0 %v3089
        %3102 = vmatprep.subr.mxu0 0.0
        %3103 = vmatpush1.msra.mxu0 0.0
        %3104 = vmatprep.subr.mxu0 0.0
        %3105 = vmatpush1.msra.mxu0 0.0
        %3106 = vmatprep.subr.mxu0 0.0
        %3107 = vmatpush1.msra.mxu0 0.0
        %3108 = vmatprep.subr.mxu0 0.0
        %3109 = vmatpush1.msra.mxu0 0.0
        %3110 = vmatprep.subr.mxu0 0.0
        %3111 = vmatpush1.msra.mxu0 0.0
        %3112 = vmatprep.subr.mxu0 0.0
        %3113 = vmatpush1.msra.mxu0 0.0
        %3114 = vmatprep.subr.mxu0 0.0
        %3115 = vmatpush1.msra.mxu0 0.0
        %3116 = vmatprep.subr.mxu0 0.0
        %3117 = vmatpush1.msra.mxu0 0.0
        %3118 = vmatprep.subr.mxu0 0.0
        %3119 = vmatpush1.msra.mxu0 0.0
        %3120 = vmatprep.subr.mxu0 0.0
        %3121 = vmatpush1.msra.mxu0 0.0
        %3122 = vmatprep.subr.mxu0 0.0
        %3123 = vmatpush1.msra.mxu0 0.0
        %3124 = vmatprep.subr.mxu0 0.0
        %3125 = vmatpush1.msra.mxu0 0.0
        %3126 = vmatprep.subr.mxu0 0.0
        %3127 = vmatpush1.msra.mxu0 0.0
        %3128 = vmatprep.subr.mxu0 0.0
        %3129 = vmatpush1.msra.mxu0 0.0
        %3130 = vmatprep.subr.mxu0 0.0
        %3131 = vmatpush1.msra.mxu0 0.0
        %3132 = vmatprep.subr.mxu0 0.0
        %3133 = vmatpush1.msra.mxu0 0.0
        %3134 = vmatprep.subr.mxu0 0.0
        %3135 = vmatpush1.msra.mxu0 0.0
        %3136 = vmatprep.subr.mxu0 0.0
        %3137 = vmatpush1.msra.mxu0 0.0
        %3138 = vmatprep.subr.mxu0 0.0
        %3139 = vmatpush1.msra.mxu0 0.0
        %3140 = vmatprep.subr.mxu0 0.0
        %3141 = vmatpush1.msra.mxu0 0.0
        %3142 = vmatprep.subr.mxu0 0.0
        %3143 = vmatpush1.msra.mxu0 0.0
        %3144 = vmatprep.subr.mxu0 0.0
        %3145 = vmatpush1.msra.mxu0 0.0
        %3146 = vmatprep.subr.mxu0 0.0
        %3147 = vmatpush1.msra.mxu0 0.0
        %3148 = vmatprep.subr.mxu0 0.0
        %3149 = vmatpush1.msra.mxu0 0.0
        %3150 = vmatprep.subr.mxu0 0.0
        %3151 = vmatpush1.msra.mxu0 0.0
        %3152 = vmatprep.subr.mxu0 0.0
        %3153 = vmatpush1.msra.mxu0 0.0
        %3154 = vmatprep.subr.mxu0 0.0
        %3155 = vmatpush1.msra.mxu0 0.0
        %3156 = vmatprep.subr.mxu0 0.0
        %3157 = vmatpush1.msra.mxu0 0.0
        %3158 = vmatprep.subr.mxu0 0.0
        %3159 = vmatpush1.msra.mxu0 0.0
        %3160 = vmatprep.subr.mxu0 0.0
        %3161 = vmatpush1.msra.mxu0 0.0
        %3162 = vmatprep.mubr.f32.mxu0 0.0
        %3163 = vmatmul.mubr.f32.gmra.mrb[0].mxu0 %v3093
        %v3164 = vpop.f32.mrb[0].mxu0
        %v3165 = vadd.f32 %v3078, %v3164
        %v3166 = vpop.f32.mrb[0].mxu0
        %3167 = vmatprep.mubr.f32.mxu0 0.0
        %3168 = vmatmul.mubr.f32.gmra.mrb[0].mxu0 %v3096
        %v3169 = vpop.f32.mrb[0].mxu0
        %v3170 = vadd.f32 %v3083, %v3169
        %v3171 = vpop.f32.mrb[0].mxu0
        %3172 = vdwg.mxu0
        %3173 = vrot.lane.b32.xlu0 %v1909, 32
        %v3174 = vpop.permute.xlu0 %3173
        %3175 = vrot.lane.b32.xlu0 %v1914, 32
        %v3176 = vpop.permute.xlu0 %3175
        %v3179 = vadd.f32 %v3165, %v3174
        %v3180 = vadd.f32 %v3170, %v3176
        %v3181 = vmax.f32 %v3179, 0.0
        %v3182 = vmax.f32 %v3180, 0.0
        %3183 = vst.msk [vmem:[%s395] sm:$0xff] %vm461, %v3181
        %3184 = vst.msk [vmem:[%s395 + $0x8] sm:$0xff] %vm461, %v3182
        %s3185 = sand.u32 %s239, 1
        %s3186 = scalar_lea.sflag [#allocation4], %s3185
        %s3187 = sand.u32 %s239, 1
        %s3188 = smul.addr %s3187, 16
        %s3189 = scalar_lea.vmem [#allocation7], %s3188
        // Predicated region
        $region65: #{tpu_custom_call.1} parent=55 // pred_check
          %p3190 = pneg %p249
        $region66: #{tpu_custom_call.1} parent=55 // pred_check_branch
          %3192 = sbr.rel (%p3190) target = $region68
        $region67: #{tpu_custom_call.1} parent=55 // pred_region
          %s3194 = ssub.s32 256, 256
          %3195 = vsyncadd %s3186, %s3194
          %s3196 = smul.addr %s27, 2
          %s3197 = smul.addr %s3196, 128
          %s3198 = scalar_lea.hbm %s9, %s3197
          %s3199 = sshll.u32 %s3189, 4
          %s3200 = int_to_ptr.vmem [resolvable:$true] %s3199
          %3205 = dma.vmem_to_hbm [thread:$0]  %s3200, 256, %s3198, %s3186, 128, 128, 8
        $region68: #{tpu_custom_call.1} parent=55 // pred_fallthru
          _
      $region56: #{tpu_custom_call.1} parent=5 // pred_fallthru
        _
      %p3206 = scmp.le.s32.totalorder 2, %s22
      // Predicated region
      $region69: #{tpu_custom_call.1} parent=5 // pred_check
        %p3207 = pneg %p3206
      $region70: #{tpu_custom_call.1} parent=5 // pred_check_branch
        %3209 = sbr.rel (%p3207) target = $region72
      $region71: #{tpu_custom_call.1} parent=5 // pred_region
        %s3210 = ssub.s32 %s22, 2
        // Predicated region
        $region73: #{tpu_custom_call.1} parent=71 // pred_check
          %p3211 = pneg %p255
        $region74: #{tpu_custom_call.1} parent=71 // pred_check_branch
          %3213 = sbr.rel (%p3211) target = $region76
        $region75: #{tpu_custom_call.1} parent=71 // pred_region
          %s3214 = sand.u32 %s240, 1
          %s3215 = scalar_lea.sflag [#allocation4], %s3214
          %s3216 = sand.u32 %s240, 1
          %s3217 = smul.addr %s3216, 16
          %s3218 = scalar_lea.vmem [#allocation7], %s3217
          %3219 = dma.done %s3215, 256
        $region76: #{tpu_custom_call.1} parent=71 // pred_fallthru
          _
      $region72: #{tpu_custom_call.1} parent=5 // pred_fallthru
        _
    $region6: #{tpu_custom_call.1} parent=1 // loop_footer
      %s26 = sadd.s32 1, %s22
    $region7: #{tpu_custom_call.1} parent=1 // loop_footer_branch
      %21 = sbr.rel target = $region3
    $region8: #{tpu_custom_call.1} parent=1 // loop_exit
      _
    %3220 = vsyncpa [#allocation3], 1
    %s3221 = scalar_lea.sflag [#allocation3], 1
    %3222 = vsyncpa %s3221, 1
    %3223 = vsyncpa [#allocation6], 1
    %3224 = vsyncpa [#allocation4], 1
    %s3225 = scalar_lea.sflag [#allocation4], 1
    %3226 = vsyncpa %s3225, 1

</llo_original>
